<compile_context>
chip_gen: v7x
topology: tpu7x:2x2x1
jax: 0.10.0
libtpu: 0.0.40
codegen_flags: <defaults>
</compile_context>

<pallas_src>
import jax
import jax.numpy as jnp
from jax.experimental import pallas as pl
from jax.experimental.pallas import tpu as pltpu

INPUT_SIZE = 1
HIDDEN = 64
NUM_LAYERS = 2   # hard-wired as two explicit layers (matches the module default)
LANE = 128       # TPU vreg lane width; each gate block is padded to this


def _lstm_kernel(x_ref,                       # (T, B, 1)   time-major input
                 wih0_ref, b0_ref,            # (1, 4*HP), (1, 4*HP)
                 whh0_ref,                    # (HP, 4*HP)
                 wih1_ref, whh1_ref, b1_ref,  # (HP, 4*HP), (HP, 4*HP), (1, 4*HP)
                 wfc_ref, bfc_ref,            # (1, HP), (1, 1)
                 out_ref):                    # (T, B)
    T, B, _ = x_ref.shape
    HP = whh0_ref.shape[0]

    # ---- hoisted layer-0 input projection over the whole sequence ----------
    # input_size == 1 -> x @ W_ih0 is a broadcast multiply; b0 is pre-added.
    x3 = x_ref[...]                                                   # (T, B, 1)
    pre0 = x3 * wih0_ref[...][None, :, :] + b0_ref[...][None, :, :]   # (T, B, 4*HP)

    def cell(gates, c):
        # One sigmoid pass over all 4*HP lanes.  The g-gate pre-activation was
        # scaled by 2 in the weights, so tanh(z) = 2*sigmoid(2z) - 1.
        s = jax.nn.sigmoid(gates)
        i_g = s[:, 0 * HP:1 * HP]
        f_g = s[:, 1 * HP:2 * HP]
        g_g = 2.0 * s[:, 2 * HP:3 * HP] - 1.0
        o_g = s[:, 3 * HP:4 * HP]
        c_new = f_g * c + i_g * g_g
        h_new = o_g * jnp.tanh(c_new)
        return h_new, c_new

    zeros = jnp.zeros((B, HP), jnp.float32)
    h0, c0, h1, c1 = zeros, zeros, zeros, zeros
    h1_steps = []
    for t in range(T):  # static unroll: T is a compile-time constant
        # Layer-1 recurrent matmul depends only on the previous h1 -> issue early
        # so the MXU op can overlap layer-0's EUP chain.
        rec1 = jnp.dot(h1, whh1_ref[...], preferred_element_type=jnp.float32)
        g0 = pre0[t] + jnp.dot(h0, whh0_ref[...],
                               preferred_element_type=jnp.float32)
        h0, c0 = cell(g0, c0)                     # layer 0
        g1 = (rec1
              + jnp.dot(h0, wih1_ref[...], preferred_element_type=jnp.float32)
              + b1_ref[...])
        h1, c1 = cell(g1, c1)                     # layer 1
        h1_steps.append(h1)

    # ---- FC + ReLU over all timesteps at once; single lane-dense writeback --
    hs = jnp.stack(h1_steps, axis=0)                                  # (T, B, HP)
    y = jnp.sum(hs * wfc_ref[...][None, :, :], axis=-1) + bfc_ref[...]  # (T, B)
    out_ref[...] = jnp.maximum(y, 0.0)


def _prep_kernel_params(p, hidden, hp):
    """Scale the g-gate columns by 2 (tanh-via-sigmoid trick) and zero-pad each
    gate block from `hidden` to `hp` lanes (and recurrent/FC input rows to hp)
    so all in-kernel slices are 128-lane aligned.  Zero padding is exact."""
    gate_scale = jnp.array([1.0, 1.0, 2.0, 1.0], jnp.float32)[None, :, None]

    def pad_gates(w):                 # (in_dim, 4*hidden) -> (in_dim, 4*hp)
        in_dim = w.shape[0]
        w4 = w.reshape(in_dim, 4, hidden) * gate_scale
        return jnp.pad(w4, ((0, 0), (0, 0), (0, hp - hidden))).reshape(in_dim, 4 * hp)

    def pad_rows(w):                  # (hidden, n) -> (hp, n)
        return jnp.pad(w, ((0, hp - hidden), (0, 0)))

    return {
        "wih0": pad_gates(p["wih0"]),               # (1, 4*hp)
        "b0":   pad_gates(p["b0"]),                 # (1, 4*hp)
        "whh0": pad_rows(pad_gates(p["whh0"])),     # (hp, 4*hp)
        "wih1": pad_rows(pad_gates(p["wih1"])),     # (hp, 4*hp)
        "whh1": pad_rows(pad_gates(p["whh1"])),     # (hp, 4*hp)
        "b1":   pad_gates(p["b1"]),                 # (1, 4*hp)
        "wfc":  jnp.pad(p["wfc"][:, 0], (0, hp - hidden))[None, :],   # (1, hp)
        "bfc":  p["bfc"].reshape(1, 1),             # (1, 1)
    }


def lstm_model_forward(x, params):
    """x: (B, T, I) float32, batch-first (same contract as the PyTorch module).
    Returns (B, T, 1) float32."""
    B, T, I = x.shape
    # TODO(synk): generalize the hoisted input projection to input_size > 1
    # (needs a (T*B, I) x (I, 4*HP) matmul instead of the broadcast multiply).
    assert I == 1, "kernel is specialized to input_size == 1 (module default)"
    H = params["whh0"].shape[0]
    HP = ((H + LANE - 1) // LANE) * LANE

    kp = _prep_kernel_params(params, H, HP)
    x_tbi = jnp.transpose(x, (1, 0, 2)).astype(jnp.float32)   # (T, B, 1) time-major

    out_tb = pl.pallas_call(
        _lstm_kernel,
        out_shape=jax.ShapeDtypeStruct((T, B), jnp.float32),
        grid=(1,),
        in_specs=[
            pl.BlockSpec((T, B, 1), lambda i: (0, 0, 0)),     # x
            pl.BlockSpec((1, 4 * HP), lambda i: (0, 0)),      # wih0
            pl.BlockSpec((1, 4 * HP), lambda i: (0, 0)),      # b0
            pl.BlockSpec((HP, 4 * HP), lambda i: (0, 0)),     # whh0
            pl.BlockSpec((HP, 4 * HP), lambda i: (0, 0)),     # wih1
            pl.BlockSpec((HP, 4 * HP), lambda i: (0, 0)),     # whh1
            pl.BlockSpec((1, 4 * HP), lambda i: (0, 0)),      # b1
            pl.BlockSpec((1, HP), lambda i: (0, 0)),          # wfc (row vector)
            pl.BlockSpec((1, 1), lambda i: (0, 0)),           # bfc
        ],
        out_specs=pl.BlockSpec((T, B), lambda i: (0, 0)),
        compiler_params=pltpu.CompilerParams(
            dimension_semantics=("arbitrary",)),
    )(x_tbi, kp["wih0"], kp["b0"], kp["whh0"], kp["wih1"], kp["whh1"],
      kp["b1"], kp["wfc"], kp["bfc"])

    return jnp.transpose(out_tb, (1, 0))[:, :, None]          # (B, T, 1)


def init_params(key, input_size=INPUT_SIZE, hidden=HIDDEN):
    """Deterministic init mirroring PyTorch's U(-1/sqrt(H), 1/sqrt(H)).

    Weights are stored transposed (in_dim, 4H) so the forward computes x @ W.
    Per-layer bias is the PyTorch b_ih + b_hh, stored combined as (1, 4H)."""
    k = 1.0 / jnp.sqrt(jnp.float32(hidden))
    keys = jax.random.split(key, 10)
    u = lambda kk, shape: jax.random.uniform(kk, shape, jnp.float32, -k, k)
    return {
        "wih0": u(keys[0], (input_size, 4 * hidden)),
        "whh0": u(keys[1], (hidden, 4 * hidden)),
        "b0":   u(keys[2], (1, 4 * hidden)) + u(keys[3], (1, 4 * hidden)),
        "wih1": u(keys[4], (hidden, 4 * hidden)),
        "whh1": u(keys[5], (hidden, 4 * hidden)),
        "b1":   u(keys[6], (1, 4 * hidden)) + u(keys[7], (1, 4 * hidden)),
        "wfc":  u(keys[8], (hidden, 1)),
        "bfc":  u(keys[9], (1, 1)),
    }


def _reference_forward(x, p):
    """Pure-JAX reference of the PyTorch forward (for correctness check)."""
    B, T, _ = x.shape
    H = p["whh0"].shape[0]
    h0 = c0 = h1 = c1 = jnp.zeros((B, H), jnp.float32)

    def cell(x_t, h, c, w_ih, w_hh, b):
        g = x_t @ w_ih + h @ w_hh + b
        i = jax.nn.sigmoid(g[:, 0 * H:1 * H])
        f = jax.nn.sigmoid(g[:, 1 * H:2 * H])
        gg = jnp.tanh(g[:, 2 * H:3 * H])
        o = jax.nn.sigmoid(g[:, 3 * H:4 * H])
        c = f * c + i * gg
        return o * jnp.tanh(c), c

    outs = []
    for t in range(T):
        x_t = x[:, t, :]
        h0, c0 = cell(x_t, h0, c0, p["wih0"], p["whh0"], p["b0"])
        h1, c1 = cell(h0, h1, c1, p["wih1"], p["whh1"], p["b1"])
        outs.append(jnp.maximum(h1 @ p["wfc"] + p["bfc"], 0.0))
    return jnp.stack(outs, axis=1)  # (B, T, 1)


if __name__ == "__main__":
    key = jax.random.PRNGKey(0)
    k_param, k_x = jax.random.split(key)

    B, T, I = 2, 8, INPUT_SIZE
    params = init_params(k_param)
    x = jax.random.normal(k_x, (B, T, I), jnp.float32)

    out = jax.block_until_ready(lstm_model_forward(x, params))
    ref = jax.block_until_ready(_reference_forward(x, params))

    assert out.shape == (B, T, 1), out.shape
    assert jnp.allclose(out, ref, atol=1e-4, rtol=1e-4), (
        "mismatch vs reference: max abs diff = %e" % float(jnp.max(jnp.abs(out - ref))))

    print("KERNEL_OK")
</pallas_src>

<mosaic_0001>
module attributes {stable_mosaic.version = 11 : i64} {
  func.func @_lstm_kernel(%arg0: i32, %arg1: memref<8x2x1xf32, #tpu.memory_space<vmem>>, %arg2: memref<1x512xf32, #tpu.memory_space<vmem>>, %arg3: memref<1x512xf32, #tpu.memory_space<vmem>>, %arg4: memref<128x512xf32, #tpu.memory_space<vmem>>, %arg5: memref<128x512xf32, #tpu.memory_space<vmem>>, %arg6: memref<128x512xf32, #tpu.memory_space<vmem>>, %arg7: memref<1x512xf32, #tpu.memory_space<vmem>>, %arg8: memref<1x128xf32, #tpu.memory_space<vmem>>, %arg9: memref<1x1xf32, #tpu.memory_space<vmem>>, %arg10: memref<8x2xf32, #tpu.memory_space<vmem>>) attributes {dimension_semantics = [#tpu.dimension_semantics<arbitrary>], iteration_bounds = array<i64: 1>, scalar_prefetch = 0 : i64, scratch_operands = 0 : i64, tpu.core_type = #tpu.core_type<tc>, window_params = [{pipeline_mode = #tpu.pipeline_mode<synchronous>, transform_indices = @transform_0, window_bounds = array<i64: 8, 2, 1>}, {pipeline_mode = #tpu.pipeline_mode<synchronous>, transform_indices = @transform_1, window_bounds = array<i64: 1, 512>}, {pipeline_mode = #tpu.pipeline_mode<synchronous>, transform_indices = @transform_2, window_bounds = array<i64: 1, 512>}, {pipeline_mode = #tpu.pipeline_mode<synchronous>, transform_indices = @transform_3, window_bounds = array<i64: 128, 512>}, {pipeline_mode = #tpu.pipeline_mode<synchronous>, transform_indices = @transform_4, window_bounds = array<i64: 128, 512>}, {pipeline_mode = #tpu.pipeline_mode<synchronous>, transform_indices = @transform_5, window_bounds = array<i64: 128, 512>}, {pipeline_mode = #tpu.pipeline_mode<synchronous>, transform_indices = @transform_6, window_bounds = array<i64: 1, 512>}, {pipeline_mode = #tpu.pipeline_mode<synchronous>, transform_indices = @transform_7, window_bounds = array<i64: 1, 128>}, {pipeline_mode = #tpu.pipeline_mode<synchronous>, transform_indices = @transform_8, window_bounds = array<i64: 1, 1>}, {pipeline_mode = #tpu.pipeline_mode<synchronous>, transform_indices = @transform_9, window_bounds = array<i64: 8, 2>}]} {
    %c0 = arith.constant 0 : index
    %c0_0 = arith.constant 0 : index
    %c0_1 = arith.constant 0 : index
    %0 = vector.load %arg1[%c0, %c0_0, %c0_1] : memref<8x2x1xf32, #tpu.memory_space<vmem>>, vector<8x2x1xf32>
    %c0_2 = arith.constant 0 : index
    %c0_3 = arith.constant 0 : index
    %1 = vector.load %arg2[%c0_2, %c0_3] : memref<1x512xf32, #tpu.memory_space<vmem>>, vector<1x512xf32>
    %2 = vector.shape_cast %1 : vector<1x512xf32> to vector<1x1x512xf32>
    %3 = vector.broadcast %0 : vector<8x2x1xf32> to vector<8x2x512xf32>
    %4 = vector.broadcast %2 : vector<1x1x512xf32> to vector<8x2x512xf32>
    %5 = arith.mulf %3, %4 : vector<8x2x512xf32>
    %c0_4 = arith.constant 0 : index
    %c0_5 = arith.constant 0 : index
    %6 = vector.load %arg3[%c0_4, %c0_5] : memref<1x512xf32, #tpu.memory_space<vmem>>, vector<1x512xf32>
    %7 = vector.shape_cast %6 : vector<1x512xf32> to vector<1x1x512xf32>
    %8 = vector.broadcast %7 : vector<1x1x512xf32> to vector<8x2x512xf32>
    %9 = arith.addf %5, %8 : vector<8x2x512xf32>
    %cst = arith.constant 0.000000e+00 : f32
    %10 = vector.broadcast %cst : f32 to vector<2x128xf32>
    %c0_6 = arith.constant 0 : index
    %c0_7 = arith.constant 0 : index
    %11 = vector.load %arg6[%c0_6, %c0_7] : memref<128x512xf32, #tpu.memory_space<vmem>>, vector<128x512xf32>
    %cst_8 = arith.constant dense<0.000000e+00> : vector<2x512xf32>
    %12 = tpu.matmul %10, %11, %cst_8 {dimension_numbers = #tpu.dot_dimension_numbers<[1], [0], [0], [1], [0, 0, 1, 1], [], []>} : vector<2x128xf32>, vector<128x512xf32>, vector<2x512xf32> -> vector<2x512xf32>
    %13 = vector.extract_strided_slice %9 {offsets = [0, 0, 0], sizes = [1, 2, 512], strides = [1, 1, 1]} : vector<8x2x512xf32> to vector<1x2x512xf32>
    %14 = vector.shape_cast %13 : vector<1x2x512xf32> to vector<2x512xf32>
    %c0_9 = arith.constant 0 : index
    %c0_10 = arith.constant 0 : index
    %15 = vector.load %arg4[%c0_9, %c0_10] : memref<128x512xf32, #tpu.memory_space<vmem>>, vector<128x512xf32>
    %cst_11 = arith.constant dense<0.000000e+00> : vector<2x512xf32>
    %16 = tpu.matmul %10, %15, %cst_11 {dimension_numbers = #tpu.dot_dimension_numbers<[1], [0], [0], [1], [0, 0, 1, 1], [], []>} : vector<2x128xf32>, vector<128x512xf32>, vector<2x512xf32> -> vector<2x512xf32>
    %17 = arith.addf %14, %16 : vector<2x512xf32>
    %18 = arith.negf %17 : vector<2x512xf32>
    %19 = math.exp %18 : vector<2x512xf32>
    %cst_12 = arith.constant 1.000000e+00 : f32
    %20 = vector.broadcast %cst_12 : f32 to vector<2x512xf32>
    %21 = arith.addf %20, %19 : vector<2x512xf32>
    %22 = arith.divf %20, %21 : vector<2x512xf32>
    %23 = vector.extract_strided_slice %22 {offsets = [0, 0], sizes = [2, 128], strides = [1, 1]} : vector<2x512xf32> to vector<2x128xf32>
    %24 = vector.extract_strided_slice %22 {offsets = [0, 128], sizes = [2, 128], strides = [1, 1]} : vector<2x512xf32> to vector<2x128xf32>
    %25 = vector.extract_strided_slice %22 {offsets = [0, 256], sizes = [2, 128], strides = [1, 1]} : vector<2x512xf32> to vector<2x128xf32>
    %cst_13 = arith.constant 2.000000e+00 : f32
    %26 = vector.broadcast %cst_13 : f32 to vector<2x128xf32>
    %27 = arith.mulf %26, %25 : vector<2x128xf32>
    %cst_14 = arith.constant 1.000000e+00 : f32
    %28 = vector.broadcast %cst_14 : f32 to vector<2x128xf32>
    %29 = arith.subf %27, %28 : vector<2x128xf32>
    %30 = vector.extract_strided_slice %22 {offsets = [0, 384], sizes = [2, 128], strides = [1, 1]} : vector<2x512xf32> to vector<2x128xf32>
    %31 = arith.mulf %24, %10 : vector<2x128xf32>
    %32 = arith.mulf %23, %29 : vector<2x128xf32>
    %33 = arith.addf %31, %32 : vector<2x128xf32>
    %34 = math.tanh %33 : vector<2x128xf32>
    %35 = arith.mulf %30, %34 : vector<2x128xf32>
    %c0_15 = arith.constant 0 : index
    %c0_16 = arith.constant 0 : index
    %36 = vector.load %arg5[%c0_15, %c0_16] : memref<128x512xf32, #tpu.memory_space<vmem>>, vector<128x512xf32>
    %cst_17 = arith.constant dense<0.000000e+00> : vector<2x512xf32>
    %37 = tpu.matmul %35, %36, %cst_17 {dimension_numbers = #tpu.dot_dimension_numbers<[1], [0], [0], [1], [0, 0, 1, 1], [], []>} : vector<2x128xf32>, vector<128x512xf32>, vector<2x512xf32> -> vector<2x512xf32>
    %38 = arith.addf %12, %37 : vector<2x512xf32>
    %c0_18 = arith.constant 0 : index
    %c0_19 = arith.constant 0 : index
    %39 = vector.load %arg7[%c0_18, %c0_19] : memref<1x512xf32, #tpu.memory_space<vmem>>, vector<1x512xf32>
    %40 = vector.broadcast %39 : vector<1x512xf32> to vector<2x512xf32>
    %41 = arith.addf %38, %40 : vector<2x512xf32>
    %42 = arith.negf %41 : vector<2x512xf32>
    %43 = math.exp %42 : vector<2x512xf32>
    %cst_20 = arith.constant 1.000000e+00 : f32
    %44 = vector.broadcast %cst_20 : f32 to vector<2x512xf32>
    %45 = arith.addf %44, %43 : vector<2x512xf32>
    %46 = arith.divf %44, %45 : vector<2x512xf32>
    %47 = vector.extract_strided_slice %46 {offsets = [0, 0], sizes = [2, 128], strides = [1, 1]} : vector<2x512xf32> to vector<2x128xf32>
    %48 = vector.extract_strided_slice %46 {offsets = [0, 128], sizes = [2, 128], strides = [1, 1]} : vector<2x512xf32> to vector<2x128xf32>
    %49 = vector.extract_strided_slice %46 {offsets = [0, 256], sizes = [2, 128], strides = [1, 1]} : vector<2x512xf32> to vector<2x128xf32>
    %cst_21 = arith.constant 2.000000e+00 : f32
    %50 = vector.broadcast %cst_21 : f32 to vector<2x128xf32>
    %51 = arith.mulf %50, %49 : vector<2x128xf32>
    %cst_22 = arith.constant 1.000000e+00 : f32
    %52 = vector.broadcast %cst_22 : f32 to vector<2x128xf32>
    %53 = arith.subf %51, %52 : vector<2x128xf32>
    %54 = vector.extract_strided_slice %46 {offsets = [0, 384], sizes = [2, 128], strides = [1, 1]} : vector<2x512xf32> to vector<2x128xf32>
    %55 = arith.mulf %48, %10 : vector<2x128xf32>
    %56 = arith.mulf %47, %53 : vector<2x128xf32>
    %57 = arith.addf %55, %56 : vector<2x128xf32>
    %58 = math.tanh %57 : vector<2x128xf32>
    %59 = arith.mulf %54, %58 : vector<2x128xf32>
    %c0_23 = arith.constant 0 : index
    %c0_24 = arith.constant 0 : index
    %60 = vector.load %arg6[%c0_23, %c0_24] : memref<128x512xf32, #tpu.memory_space<vmem>>, vector<128x512xf32>
    %cst_25 = arith.constant dense<0.000000e+00> : vector<2x512xf32>
    %61 = tpu.matmul %59, %60, %cst_25 {dimension_numbers = #tpu.dot_dimension_numbers<[1], [0], [0], [1], [0, 0, 1, 1], [], []>} : vector<2x128xf32>, vector<128x512xf32>, vector<2x512xf32> -> vector<2x512xf32>
    %62 = vector.extract_strided_slice %9 {offsets = [1, 0, 0], sizes = [1, 2, 512], strides = [1, 1, 1]} : vector<8x2x512xf32> to vector<1x2x512xf32>
    %63 = vector.shape_cast %62 : vector<1x2x512xf32> to vector<2x512xf32>
    %c0_26 = arith.constant 0 : index
    %c0_27 = arith.constant 0 : index
    %64 = vector.load %arg4[%c0_26, %c0_27] : memref<128x512xf32, #tpu.memory_space<vmem>>, vector<128x512xf32>
    %cst_28 = arith.constant dense<0.000000e+00> : vector<2x512xf32>
    %65 = tpu.matmul %35, %64, %cst_28 {dimension_numbers = #tpu.dot_dimension_numbers<[1], [0], [0], [1], [0, 0, 1, 1], [], []>} : vector<2x128xf32>, vector<128x512xf32>, vector<2x512xf32> -> vector<2x512xf32>
    %66 = arith.addf %63, %65 : vector<2x512xf32>
    %67 = arith.negf %66 : vector<2x512xf32>
    %68 = math.exp %67 : vector<2x512xf32>
    %cst_29 = arith.constant 1.000000e+00 : f32
    %69 = vector.broadcast %cst_29 : f32 to vector<2x512xf32>
    %70 = arith.addf %69, %68 : vector<2x512xf32>
    %71 = arith.divf %69, %70 : vector<2x512xf32>
    %72 = vector.extract_strided_slice %71 {offsets = [0, 0], sizes = [2, 128], strides = [1, 1]} : vector<2x512xf32> to vector<2x128xf32>
    %73 = vector.extract_strided_slice %71 {offsets = [0, 128], sizes = [2, 128], strides = [1, 1]} : vector<2x512xf32> to vector<2x128xf32>
    %74 = vector.extract_strided_slice %71 {offsets = [0, 256], sizes = [2, 128], strides = [1, 1]} : vector<2x512xf32> to vector<2x128xf32>
    %cst_30 = arith.constant 2.000000e+00 : f32
    %75 = vector.broadcast %cst_30 : f32 to vector<2x128xf32>
    %76 = arith.mulf %75, %74 : vector<2x128xf32>
    %cst_31 = arith.constant 1.000000e+00 : f32
    %77 = vector.broadcast %cst_31 : f32 to vector<2x128xf32>
    %78 = arith.subf %76, %77 : vector<2x128xf32>
    %79 = vector.extract_strided_slice %71 {offsets = [0, 384], sizes = [2, 128], strides = [1, 1]} : vector<2x512xf32> to vector<2x128xf32>
    %80 = arith.mulf %73, %33 : vector<2x128xf32>
    %81 = arith.mulf %72, %78 : vector<2x128xf32>
    %82 = arith.addf %80, %81 : vector<2x128xf32>
    %83 = math.tanh %82 : vector<2x128xf32>
    %84 = arith.mulf %79, %83 : vector<2x128xf32>
    %c0_32 = arith.constant 0 : index
    %c0_33 = arith.constant 0 : index
    %85 = vector.load %arg5[%c0_32, %c0_33] : memref<128x512xf32, #tpu.memory_space<vmem>>, vector<128x512xf32>
    %cst_34 = arith.constant dense<0.000000e+00> : vector<2x512xf32>
    %86 = tpu.matmul %84, %85, %cst_34 {dimension_numbers = #tpu.dot_dimension_numbers<[1], [0], [0], [1], [0, 0, 1, 1], [], []>} : vector<2x128xf32>, vector<128x512xf32>, vector<2x512xf32> -> vector<2x512xf32>
    %87 = arith.addf %61, %86 : vector<2x512xf32>
    %c0_35 = arith.constant 0 : index
    %c0_36 = arith.constant 0 : index
    %88 = vector.load %arg7[%c0_35, %c0_36] : memref<1x512xf32, #tpu.memory_space<vmem>>, vector<1x512xf32>
    %89 = vector.broadcast %88 : vector<1x512xf32> to vector<2x512xf32>
    %90 = arith.addf %87, %89 : vector<2x512xf32>
    %91 = arith.negf %90 : vector<2x512xf32>
    %92 = math.exp %91 : vector<2x512xf32>
    %cst_37 = arith.constant 1.000000e+00 : f32
    %93 = vector.broadcast %cst_37 : f32 to vector<2x512xf32>
    %94 = arith.addf %93, %92 : vector<2x512xf32>
    %95 = arith.divf %93, %94 : vector<2x512xf32>
    %96 = vector.extract_strided_slice %95 {offsets = [0, 0], sizes = [2, 128], strides = [1, 1]} : vector<2x512xf32> to vector<2x128xf32>
    %97 = vector.extract_strided_slice %95 {offsets = [0, 128], sizes = [2, 128], strides = [1, 1]} : vector<2x512xf32> to vector<2x128xf32>
    %98 = vector.extract_strided_slice %95 {offsets = [0, 256], sizes = [2, 128], strides = [1, 1]} : vector<2x512xf32> to vector<2x128xf32>
    %cst_38 = arith.constant 2.000000e+00 : f32
    %99 = vector.broadcast %cst_38 : f32 to vector<2x128xf32>
    %100 = arith.mulf %99, %98 : vector<2x128xf32>
    %cst_39 = arith.constant 1.000000e+00 : f32
    %101 = vector.broadcast %cst_39 : f32 to vector<2x128xf32>
    %102 = arith.subf %100, %101 : vector<2x128xf32>
    %103 = vector.extract_strided_slice %95 {offsets = [0, 384], sizes = [2, 128], strides = [1, 1]} : vector<2x512xf32> to vector<2x128xf32>
    %104 = arith.mulf %97, %57 : vector<2x128xf32>
    %105 = arith.mulf %96, %102 : vector<2x128xf32>
    %106 = arith.addf %104, %105 : vector<2x128xf32>
    %107 = math.tanh %106 : vector<2x128xf32>
    %108 = arith.mulf %103, %107 : vector<2x128xf32>
    %c0_40 = arith.constant 0 : index
    %c0_41 = arith.constant 0 : index
    %109 = vector.load %arg6[%c0_40, %c0_41] : memref<128x512xf32, #tpu.memory_space<vmem>>, vector<128x512xf32>
    %cst_42 = arith.constant dense<0.000000e+00> : vector<2x512xf32>
    %110 = tpu.matmul %108, %109, %cst_42 {dimension_numbers = #tpu.dot_dimension_numbers<[1], [0], [0], [1], [0, 0, 1, 1], [], []>} : vector<2x128xf32>, vector<128x512xf32>, vector<2x512xf32> -> vector<2x512xf32>
    %111 = vector.extract_strided_slice %9 {offsets = [2, 0, 0], sizes = [1, 2, 512], strides = [1, 1, 1]} : vector<8x2x512xf32> to vector<1x2x512xf32>
    %112 = vector.shape_cast %111 : vector<1x2x512xf32> to vector<2x512xf32>
    %c0_43 = arith.constant 0 : index
    %c0_44 = arith.constant 0 : index
    %113 = vector.load %arg4[%c0_43, %c0_44] : memref<128x512xf32, #tpu.memory_space<vmem>>, vector<128x512xf32>
    %cst_45 = arith.constant dense<0.000000e+00> : vector<2x512xf32>
    %114 = tpu.matmul %84, %113, %cst_45 {dimension_numbers = #tpu.dot_dimension_numbers<[1], [0], [0], [1], [0, 0, 1, 1], [], []>} : vector<2x128xf32>, vector<128x512xf32>, vector<2x512xf32> -> vector<2x512xf32>
    %115 = arith.addf %112, %114 : vector<2x512xf32>
    %116 = arith.negf %115 : vector<2x512xf32>
    %117 = math.exp %116 : vector<2x512xf32>
    %cst_46 = arith.constant 1.000000e+00 : f32
    %118 = vector.broadcast %cst_46 : f32 to vector<2x512xf32>
    %119 = arith.addf %118, %117 : vector<2x512xf32>
    %120 = arith.divf %118, %119 : vector<2x512xf32>
    %121 = vector.extract_strided_slice %120 {offsets = [0, 0], sizes = [2, 128], strides = [1, 1]} : vector<2x512xf32> to vector<2x128xf32>
    %122 = vector.extract_strided_slice %120 {offsets = [0, 128], sizes = [2, 128], strides = [1, 1]} : vector<2x512xf32> to vector<2x128xf32>
    %123 = vector.extract_strided_slice %120 {offsets = [0, 256], sizes = [2, 128], strides = [1, 1]} : vector<2x512xf32> to vector<2x128xf32>
    %cst_47 = arith.constant 2.000000e+00 : f32
    %124 = vector.broadcast %cst_47 : f32 to vector<2x128xf32>
    %125 = arith.mulf %124, %123 : vector<2x128xf32>
    %cst_48 = arith.constant 1.000000e+00 : f32
    %126 = vector.broadcast %cst_48 : f32 to vector<2x128xf32>
    %127 = arith.subf %125, %126 : vector<2x128xf32>
    %128 = vector.extract_strided_slice %120 {offsets = [0, 384], sizes = [2, 128], strides = [1, 1]} : vector<2x512xf32> to vector<2x128xf32>
    %129 = arith.mulf %122, %82 : vector<2x128xf32>
    %130 = arith.mulf %121, %127 : vector<2x128xf32>
    %131 = arith.addf %129, %130 : vector<2x128xf32>
    %132 = math.tanh %131 : vector<2x128xf32>
    %133 = arith.mulf %128, %132 : vector<2x128xf32>
    %c0_49 = arith.constant 0 : index
    %c0_50 = arith.constant 0 : index
    %134 = vector.load %arg5[%c0_49, %c0_50] : memref<128x512xf32, #tpu.memory_space<vmem>>, vector<128x512xf32>
    %cst_51 = arith.constant dense<0.000000e+00> : vector<2x512xf32>
    %135 = tpu.matmul %133, %134, %cst_51 {dimension_numbers = #tpu.dot_dimension_numbers<[1], [0], [0], [1], [0, 0, 1, 1], [], []>} : vector<2x128xf32>, vector<128x512xf32>, vector<2x512xf32> -> vector<2x512xf32>
    %136 = arith.addf %110, %135 : vector<2x512xf32>
    %c0_52 = arith.constant 0 : index
    %c0_53 = arith.constant 0 : index
    %137 = vector.load %arg7[%c0_52, %c0_53] : memref<1x512xf32, #tpu.memory_space<vmem>>, vector<1x512xf32>
    %138 = vector.broadcast %137 : vector<1x512xf32> to vector<2x512xf32>
    %139 = arith.addf %136, %138 : vector<2x512xf32>
    %140 = arith.negf %139 : vector<2x512xf32>
    %141 = math.exp %140 : vector<2x512xf32>
    %cst_54 = arith.constant 1.000000e+00 : f32
    %142 = vector.broadcast %cst_54 : f32 to vector<2x512xf32>
    %143 = arith.addf %142, %141 : vector<2x512xf32>
    %144 = arith.divf %142, %143 : vector<2x512xf32>
    %145 = vector.extract_strided_slice %144 {offsets = [0, 0], sizes = [2, 128], strides = [1, 1]} : vector<2x512xf32> to vector<2x128xf32>
    %146 = vector.extract_strided_slice %144 {offsets = [0, 128], sizes = [2, 128], strides = [1, 1]} : vector<2x512xf32> to vector<2x128xf32>
    %147 = vector.extract_strided_slice %144 {offsets = [0, 256], sizes = [2, 128], strides = [1, 1]} : vector<2x512xf32> to vector<2x128xf32>
    %cst_55 = arith.constant 2.000000e+00 : f32
    %148 = vector.broadcast %cst_55 : f32 to vector<2x128xf32>
    %149 = arith.mulf %148, %147 : vector<2x128xf32>
    %cst_56 = arith.constant 1.000000e+00 : f32
    %150 = vector.broadcast %cst_56 : f32 to vector<2x128xf32>
    %151 = arith.subf %149, %150 : vector<2x128xf32>
    %152 = vector.extract_strided_slice %144 {offsets = [0, 384], sizes = [2, 128], strides = [1, 1]} : vector<2x512xf32> to vector<2x128xf32>
    %153 = arith.mulf %146, %106 : vector<2x128xf32>
    %154 = arith.mulf %145, %151 : vector<2x128xf32>
    %155 = arith.addf %153, %154 : vector<2x128xf32>
    %156 = math.tanh %155 : vector<2x128xf32>
    %157 = arith.mulf %152, %156 : vector<2x128xf32>
    %c0_57 = arith.constant 0 : index
    %c0_58 = arith.constant 0 : index
    %158 = vector.load %arg6[%c0_57, %c0_58] : memref<128x512xf32, #tpu.memory_space<vmem>>, vector<128x512xf32>
    %cst_59 = arith.constant dense<0.000000e+00> : vector<2x512xf32>
    %159 = tpu.matmul %157, %158, %cst_59 {dimension_numbers = #tpu.dot_dimension_numbers<[1], [0], [0], [1], [0, 0, 1, 1], [], []>} : vector<2x128xf32>, vector<128x512xf32>, vector<2x512xf32> -> vector<2x512xf32>
    %160 = vector.extract_strided_slice %9 {offsets = [3, 0, 0], sizes = [1, 2, 512], strides = [1, 1, 1]} : vector<8x2x512xf32> to vector<1x2x512xf32>
    %161 = vector.shape_cast %160 : vector<1x2x512xf32> to vector<2x512xf32>
    %c0_60 = arith.constant 0 : index
    %c0_61 = arith.constant 0 : index
    %162 = vector.load %arg4[%c0_60, %c0_61] : memref<128x512xf32, #tpu.memory_space<vmem>>, vector<128x512xf32>
    %cst_62 = arith.constant dense<0.000000e+00> : vector<2x512xf32>
    %163 = tpu.matmul %133, %162, %cst_62 {dimension_numbers = #tpu.dot_dimension_numbers<[1], [0], [0], [1], [0, 0, 1, 1], [], []>} : vector<2x128xf32>, vector<128x512xf32>, vector<2x512xf32> -> vector<2x512xf32>
    %164 = arith.addf %161, %163 : vector<2x512xf32>
    %165 = arith.negf %164 : vector<2x512xf32>
    %166 = math.exp %165 : vector<2x512xf32>
    %cst_63 = arith.constant 1.000000e+00 : f32
    %167 = vector.broadcast %cst_63 : f32 to vector<2x512xf32>
    %168 = arith.addf %167, %166 : vector<2x512xf32>
    %169 = arith.divf %167, %168 : vector<2x512xf32>
    %170 = vector.extract_strided_slice %169 {offsets = [0, 0], sizes = [2, 128], strides = [1, 1]} : vector<2x512xf32> to vector<2x128xf32>
    %171 = vector.extract_strided_slice %169 {offsets = [0, 128], sizes = [2, 128], strides = [1, 1]} : vector<2x512xf32> to vector<2x128xf32>
    %172 = vector.extract_strided_slice %169 {offsets = [0, 256], sizes = [2, 128], strides = [1, 1]} : vector<2x512xf32> to vector<2x128xf32>
    %cst_64 = arith.constant 2.000000e+00 : f32
    %173 = vector.broadcast %cst_64 : f32 to vector<2x128xf32>
    %174 = arith.mulf %173, %172 : vector<2x128xf32>
    %cst_65 = arith.constant 1.000000e+00 : f32
    %175 = vector.broadcast %cst_65 : f32 to vector<2x128xf32>
    %176 = arith.subf %174, %175 : vector<2x128xf32>
    %177 = vector.extract_strided_slice %169 {offsets = [0, 384], sizes = [2, 128], strides = [1, 1]} : vector<2x512xf32> to vector<2x128xf32>
    %178 = arith.mulf %171, %131 : vector<2x128xf32>
    %179 = arith.mulf %170, %176 : vector<2x128xf32>
    %180 = arith.addf %178, %179 : vector<2x128xf32>
    %181 = math.tanh %180 : vector<2x128xf32>
    %182 = arith.mulf %177, %181 : vector<2x128xf32>
    %c0_66 = arith.constant 0 : index
    %c0_67 = arith.constant 0 : index
    %183 = vector.load %arg5[%c0_66, %c0_67] : memref<128x512xf32, #tpu.memory_space<vmem>>, vector<128x512xf32>
    %cst_68 = arith.constant dense<0.000000e+00> : vector<2x512xf32>
    %184 = tpu.matmul %182, %183, %cst_68 {dimension_numbers = #tpu.dot_dimension_numbers<[1], [0], [0], [1], [0, 0, 1, 1], [], []>} : vector<2x128xf32>, vector<128x512xf32>, vector<2x512xf32> -> vector<2x512xf32>
    %185 = arith.addf %159, %184 : vector<2x512xf32>
    %c0_69 = arith.constant 0 : index
    %c0_70 = arith.constant 0 : index
    %186 = vector.load %arg7[%c0_69, %c0_70] : memref<1x512xf32, #tpu.memory_space<vmem>>, vector<1x512xf32>
    %187 = vector.broadcast %186 : vector<1x512xf32> to vector<2x512xf32>
    %188 = arith.addf %185, %187 : vector<2x512xf32>
    %189 = arith.negf %188 : vector<2x512xf32>
    %190 = math.exp %189 : vector<2x512xf32>
    %cst_71 = arith.constant 1.000000e+00 : f32
    %191 = vector.broadcast %cst_71 : f32 to vector<2x512xf32>
    %192 = arith.addf %191, %190 : vector<2x512xf32>
    %193 = arith.divf %191, %192 : vector<2x512xf32>
    %194 = vector.extract_strided_slice %193 {offsets = [0, 0], sizes = [2, 128], strides = [1, 1]} : vector<2x512xf32> to vector<2x128xf32>
    %195 = vector.extract_strided_slice %193 {offsets = [0, 128], sizes = [2, 128], strides = [1, 1]} : vector<2x512xf32> to vector<2x128xf32>
    %196 = vector.extract_strided_slice %193 {offsets = [0, 256], sizes = [2, 128], strides = [1, 1]} : vector<2x512xf32> to vector<2x128xf32>
    %cst_72 = arith.constant 2.000000e+00 : f32
    %197 = vector.broadcast %cst_72 : f32 to vector<2x128xf32>
    %198 = arith.mulf %197, %196 : vector<2x128xf32>
    %cst_73 = arith.constant 1.000000e+00 : f32
    %199 = vector.broadcast %cst_73 : f32 to vector<2x128xf32>
    %200 = arith.subf %198, %199 : vector<2x128xf32>
    %201 = vector.extract_strided_slice %193 {offsets = [0, 384], sizes = [2, 128], strides = [1, 1]} : vector<2x512xf32> to vector<2x128xf32>
    %202 = arith.mulf %195, %155 : vector<2x128xf32>
    %203 = arith.mulf %194, %200 : vector<2x128xf32>
    %204 = arith.addf %202, %203 : vector<2x128xf32>
    %205 = math.tanh %204 : vector<2x128xf32>
    %206 = arith.mulf %201, %205 : vector<2x128xf32>
    %c0_74 = arith.constant 0 : index
    %c0_75 = arith.constant 0 : index
    %207 = vector.load %arg6[%c0_74, %c0_75] : memref<128x512xf32, #tpu.memory_space<vmem>>, vector<128x512xf32>
    %cst_76 = arith.constant dense<0.000000e+00> : vector<2x512xf32>
    %208 = tpu.matmul %206, %207, %cst_76 {dimension_numbers = #tpu.dot_dimension_numbers<[1], [0], [0], [1], [0, 0, 1, 1], [], []>} : vector<2x128xf32>, vector<128x512xf32>, vector<2x512xf32> -> vector<2x512xf32>
    %209 = vector.extract_strided_slice %9 {offsets = [4, 0, 0], sizes = [1, 2, 512], strides = [1, 1, 1]} : vector<8x2x512xf32> to vector<1x2x512xf32>
    %210 = vector.shape_cast %209 : vector<1x2x512xf32> to vector<2x512xf32>
    %c0_77 = arith.constant 0 : index
    %c0_78 = arith.constant 0 : index
    %211 = vector.load %arg4[%c0_77, %c0_78] : memref<128x512xf32, #tpu.memory_space<vmem>>, vector<128x512xf32>
    %cst_79 = arith.constant dense<0.000000e+00> : vector<2x512xf32>
    %212 = tpu.matmul %182, %211, %cst_79 {dimension_numbers = #tpu.dot_dimension_numbers<[1], [0], [0], [1], [0, 0, 1, 1], [], []>} : vector<2x128xf32>, vector<128x512xf32>, vector<2x512xf32> -> vector<2x512xf32>
    %213 = arith.addf %210, %212 : vector<2x512xf32>
    %214 = arith.negf %213 : vector<2x512xf32>
    %215 = math.exp %214 : vector<2x512xf32>
    %cst_80 = arith.constant 1.000000e+00 : f32
    %216 = vector.broadcast %cst_80 : f32 to vector<2x512xf32>
    %217 = arith.addf %216, %215 : vector<2x512xf32>
    %218 = arith.divf %216, %217 : vector<2x512xf32>
    %219 = vector.extract_strided_slice %218 {offsets = [0, 0], sizes = [2, 128], strides = [1, 1]} : vector<2x512xf32> to vector<2x128xf32>
    %220 = vector.extract_strided_slice %218 {offsets = [0, 128], sizes = [2, 128], strides = [1, 1]} : vector<2x512xf32> to vector<2x128xf32>
    %221 = vector.extract_strided_slice %218 {offsets = [0, 256], sizes = [2, 128], strides = [1, 1]} : vector<2x512xf32> to vector<2x128xf32>
    %cst_81 = arith.constant 2.000000e+00 : f32
    %222 = vector.broadcast %cst_81 : f32 to vector<2x128xf32>
    %223 = arith.mulf %222, %221 : vector<2x128xf32>
    %cst_82 = arith.constant 1.000000e+00 : f32
    %224 = vector.broadcast %cst_82 : f32 to vector<2x128xf32>
    %225 = arith.subf %223, %224 : vector<2x128xf32>
    %226 = vector.extract_strided_slice %218 {offsets = [0, 384], sizes = [2, 128], strides = [1, 1]} : vector<2x512xf32> to vector<2x128xf32>
    %227 = arith.mulf %220, %180 : vector<2x128xf32>
    %228 = arith.mulf %219, %225 : vector<2x128xf32>
    %229 = arith.addf %227, %228 : vector<2x128xf32>
    %230 = math.tanh %229 : vector<2x128xf32>
    %231 = arith.mulf %226, %230 : vector<2x128xf32>
    %c0_83 = arith.constant 0 : index
    %c0_84 = arith.constant 0 : index
    %232 = vector.load %arg5[%c0_83, %c0_84] : memref<128x512xf32, #tpu.memory_space<vmem>>, vector<128x512xf32>
    %cst_85 = arith.constant dense<0.000000e+00> : vector<2x512xf32>
    %233 = tpu.matmul %231, %232, %cst_85 {dimension_numbers = #tpu.dot_dimension_numbers<[1], [0], [0], [1], [0, 0, 1, 1], [], []>} : vector<2x128xf32>, vector<128x512xf32>, vector<2x512xf32> -> vector<2x512xf32>
    %234 = arith.addf %208, %233 : vector<2x512xf32>
    %c0_86 = arith.constant 0 : index
    %c0_87 = arith.constant 0 : index
    %235 = vector.load %arg7[%c0_86, %c0_87] : memref<1x512xf32, #tpu.memory_space<vmem>>, vector<1x512xf32>
    %236 = vector.broadcast %235 : vector<1x512xf32> to vector<2x512xf32>
    %237 = arith.addf %234, %236 : vector<2x512xf32>
    %238 = arith.negf %237 : vector<2x512xf32>
    %239 = math.exp %238 : vector<2x512xf32>
    %cst_88 = arith.constant 1.000000e+00 : f32
    %240 = vector.broadcast %cst_88 : f32 to vector<2x512xf32>
    %241 = arith.addf %240, %239 : vector<2x512xf32>
    %242 = arith.divf %240, %241 : vector<2x512xf32>
    %243 = vector.extract_strided_slice %242 {offsets = [0, 0], sizes = [2, 128], strides = [1, 1]} : vector<2x512xf32> to vector<2x128xf32>
    %244 = vector.extract_strided_slice %242 {offsets = [0, 128], sizes = [2, 128], strides = [1, 1]} : vector<2x512xf32> to vector<2x128xf32>
    %245 = vector.extract_strided_slice %242 {offsets = [0, 256], sizes = [2, 128], strides = [1, 1]} : vector<2x512xf32> to vector<2x128xf32>
    %cst_89 = arith.constant 2.000000e+00 : f32
    %246 = vector.broadcast %cst_89 : f32 to vector<2x128xf32>
    %247 = arith.mulf %246, %245 : vector<2x128xf32>
    %cst_90 = arith.constant 1.000000e+00 : f32
    %248 = vector.broadcast %cst_90 : f32 to vector<2x128xf32>
    %249 = arith.subf %247, %248 : vector<2x128xf32>
    %250 = vector.extract_strided_slice %242 {offsets = [0, 384], sizes = [2, 128], strides = [1, 1]} : vector<2x512xf32> to vector<2x128xf32>
    %251 = arith.mulf %244, %204 : vector<2x128xf32>
    %252 = arith.mulf %243, %249 : vector<2x128xf32>
    %253 = arith.addf %251, %252 : vector<2x128xf32>
    %254 = math.tanh %253 : vector<2x128xf32>
    %255 = arith.mulf %250, %254 : vector<2x128xf32>
    %c0_91 = arith.constant 0 : index
    %c0_92 = arith.constant 0 : index
    %256 = vector.load %arg6[%c0_91, %c0_92] : memref<128x512xf32, #tpu.memory_space<vmem>>, vector<128x512xf32>
    %cst_93 = arith.constant dense<0.000000e+00> : vector<2x512xf32>
    %257 = tpu.matmul %255, %256, %cst_93 {dimension_numbers = #tpu.dot_dimension_numbers<[1], [0], [0], [1], [0, 0, 1, 1], [], []>} : vector<2x128xf32>, vector<128x512xf32>, vector<2x512xf32> -> vector<2x512xf32>
    %258 = vector.extract_strided_slice %9 {offsets = [5, 0, 0], sizes = [1, 2, 512], strides = [1, 1, 1]} : vector<8x2x512xf32> to vector<1x2x512xf32>
    %259 = vector.shape_cast %258 : vector<1x2x512xf32> to vector<2x512xf32>
    %c0_94 = arith.constant 0 : index
    %c0_95 = arith.constant 0 : index
    %260 = vector.load %arg4[%c0_94, %c0_95] : memref<128x512xf32, #tpu.memory_space<vmem>>, vector<128x512xf32>
    %cst_96 = arith.constant dense<0.000000e+00> : vector<2x512xf32>
    %261 = tpu.matmul %231, %260, %cst_96 {dimension_numbers = #tpu.dot_dimension_numbers<[1], [0], [0], [1], [0, 0, 1, 1], [], []>} : vector<2x128xf32>, vector<128x512xf32>, vector<2x512xf32> -> vector<2x512xf32>
    %262 = arith.addf %259, %261 : vector<2x512xf32>
    %263 = arith.negf %262 : vector<2x512xf32>
    %264 = math.exp %263 : vector<2x512xf32>
    %cst_97 = arith.constant 1.000000e+00 : f32
    %265 = vector.broadcast %cst_97 : f32 to vector<2x512xf32>
    %266 = arith.addf %265, %264 : vector<2x512xf32>
    %267 = arith.divf %265, %266 : vector<2x512xf32>
    %268 = vector.extract_strided_slice %267 {offsets = [0, 0], sizes = [2, 128], strides = [1, 1]} : vector<2x512xf32> to vector<2x128xf32>
    %269 = vector.extract_strided_slice %267 {offsets = [0, 128], sizes = [2, 128], strides = [1, 1]} : vector<2x512xf32> to vector<2x128xf32>
    %270 = vector.extract_strided_slice %267 {offsets = [0, 256], sizes = [2, 128], strides = [1, 1]} : vector<2x512xf32> to vector<2x128xf32>
    %cst_98 = arith.constant 2.000000e+00 : f32
    %271 = vector.broadcast %cst_98 : f32 to vector<2x128xf32>
    %272 = arith.mulf %271, %270 : vector<2x128xf32>
    %cst_99 = arith.constant 1.000000e+00 : f32
    %273 = vector.broadcast %cst_99 : f32 to vector<2x128xf32>
    %274 = arith.subf %272, %273 : vector<2x128xf32>
    %275 = vector.extract_strided_slice %267 {offsets = [0, 384], sizes = [2, 128], strides = [1, 1]} : vector<2x512xf32> to vector<2x128xf32>
    %276 = arith.mulf %269, %229 : vector<2x128xf32>
    %277 = arith.mulf %268, %274 : vector<2x128xf32>
    %278 = arith.addf %276, %277 : vector<2x128xf32>
    %279 = math.tanh %278 : vector<2x128xf32>
    %280 = arith.mulf %275, %279 : vector<2x128xf32>
    %c0_100 = arith.constant 0 : index
    %c0_101 = arith.constant 0 : index
    %281 = vector.load %arg5[%c0_100, %c0_101] : memref<128x512xf32, #tpu.memory_space<vmem>>, vector<128x512xf32>
    %cst_102 = arith.constant dense<0.000000e+00> : vector<2x512xf32>
    %282 = tpu.matmul %280, %281, %cst_102 {dimension_numbers = #tpu.dot_dimension_numbers<[1], [0], [0], [1], [0, 0, 1, 1], [], []>} : vector<2x128xf32>, vector<128x512xf32>, vector<2x512xf32> -> vector<2x512xf32>
    %283 = arith.addf %257, %282 : vector<2x512xf32>
    %c0_103 = arith.constant 0 : index
    %c0_104 = arith.constant 0 : index
    %284 = vector.load %arg7[%c0_103, %c0_104] : memref<1x512xf32, #tpu.memory_space<vmem>>, vector<1x512xf32>
    %285 = vector.broadcast %284 : vector<1x512xf32> to vector<2x512xf32>
    %286 = arith.addf %283, %285 : vector<2x512xf32>
    %287 = arith.negf %286 : vector<2x512xf32>
    %288 = math.exp %287 : vector<2x512xf32>
    %cst_105 = arith.constant 1.000000e+00 : f32
    %289 = vector.broadcast %cst_105 : f32 to vector<2x512xf32>
    %290 = arith.addf %289, %288 : vector<2x512xf32>
    %291 = arith.divf %289, %290 : vector<2x512xf32>
    %292 = vector.extract_strided_slice %291 {offsets = [0, 0], sizes = [2, 128], strides = [1, 1]} : vector<2x512xf32> to vector<2x128xf32>
    %293 = vector.extract_strided_slice %291 {offsets = [0, 128], sizes = [2, 128], strides = [1, 1]} : vector<2x512xf32> to vector<2x128xf32>
    %294 = vector.extract_strided_slice %291 {offsets = [0, 256], sizes = [2, 128], strides = [1, 1]} : vector<2x512xf32> to vector<2x128xf32>
    %cst_106 = arith.constant 2.000000e+00 : f32
    %295 = vector.broadcast %cst_106 : f32 to vector<2x128xf32>
    %296 = arith.mulf %295, %294 : vector<2x128xf32>
    %cst_107 = arith.constant 1.000000e+00 : f32
    %297 = vector.broadcast %cst_107 : f32 to vector<2x128xf32>
    %298 = arith.subf %296, %297 : vector<2x128xf32>
    %299 = vector.extract_strided_slice %291 {offsets = [0, 384], sizes = [2, 128], strides = [1, 1]} : vector<2x512xf32> to vector<2x128xf32>
    %300 = arith.mulf %293, %253 : vector<2x128xf32>
    %301 = arith.mulf %292, %298 : vector<2x128xf32>
    %302 = arith.addf %300, %301 : vector<2x128xf32>
    %303 = math.tanh %302 : vector<2x128xf32>
    %304 = arith.mulf %299, %303 : vector<2x128xf32>
    %c0_108 = arith.constant 0 : index
    %c0_109 = arith.constant 0 : index
    %305 = vector.load %arg6[%c0_108, %c0_109] : memref<128x512xf32, #tpu.memory_space<vmem>>, vector<128x512xf32>
    %cst_110 = arith.constant dense<0.000000e+00> : vector<2x512xf32>
    %306 = tpu.matmul %304, %305, %cst_110 {dimension_numbers = #tpu.dot_dimension_numbers<[1], [0], [0], [1], [0, 0, 1, 1], [], []>} : vector<2x128xf32>, vector<128x512xf32>, vector<2x512xf32> -> vector<2x512xf32>
    %307 = vector.extract_strided_slice %9 {offsets = [6, 0, 0], sizes = [1, 2, 512], strides = [1, 1, 1]} : vector<8x2x512xf32> to vector<1x2x512xf32>
    %308 = vector.shape_cast %307 : vector<1x2x512xf32> to vector<2x512xf32>
    %c0_111 = arith.constant 0 : index
    %c0_112 = arith.constant 0 : index
    %309 = vector.load %arg4[%c0_111, %c0_112] : memref<128x512xf32, #tpu.memory_space<vmem>>, vector<128x512xf32>
    %cst_113 = arith.constant dense<0.000000e+00> : vector<2x512xf32>
    %310 = tpu.matmul %280, %309, %cst_113 {dimension_numbers = #tpu.dot_dimension_numbers<[1], [0], [0], [1], [0, 0, 1, 1], [], []>} : vector<2x128xf32>, vector<128x512xf32>, vector<2x512xf32> -> vector<2x512xf32>
    %311 = arith.addf %308, %310 : vector<2x512xf32>
    %312 = arith.negf %311 : vector<2x512xf32>
    %313 = math.exp %312 : vector<2x512xf32>
    %cst_114 = arith.constant 1.000000e+00 : f32
    %314 = vector.broadcast %cst_114 : f32 to vector<2x512xf32>
    %315 = arith.addf %314, %313 : vector<2x512xf32>
    %316 = arith.divf %314, %315 : vector<2x512xf32>
    %317 = vector.extract_strided_slice %316 {offsets = [0, 0], sizes = [2, 128], strides = [1, 1]} : vector<2x512xf32> to vector<2x128xf32>
    %318 = vector.extract_strided_slice %316 {offsets = [0, 128], sizes = [2, 128], strides = [1, 1]} : vector<2x512xf32> to vector<2x128xf32>
    %319 = vector.extract_strided_slice %316 {offsets = [0, 256], sizes = [2, 128], strides = [1, 1]} : vector<2x512xf32> to vector<2x128xf32>
    %cst_115 = arith.constant 2.000000e+00 : f32
    %320 = vector.broadcast %cst_115 : f32 to vector<2x128xf32>
    %321 = arith.mulf %320, %319 : vector<2x128xf32>
    %cst_116 = arith.constant 1.000000e+00 : f32
    %322 = vector.broadcast %cst_116 : f32 to vector<2x128xf32>
    %323 = arith.subf %321, %322 : vector<2x128xf32>
    %324 = vector.extract_strided_slice %316 {offsets = [0, 384], sizes = [2, 128], strides = [1, 1]} : vector<2x512xf32> to vector<2x128xf32>
    %325 = arith.mulf %318, %278 : vector<2x128xf32>
    %326 = arith.mulf %317, %323 : vector<2x128xf32>
    %327 = arith.addf %325, %326 : vector<2x128xf32>
    %328 = math.tanh %327 : vector<2x128xf32>
    %329 = arith.mulf %324, %328 : vector<2x128xf32>
    %c0_117 = arith.constant 0 : index
    %c0_118 = arith.constant 0 : index
    %330 = vector.load %arg5[%c0_117, %c0_118] : memref<128x512xf32, #tpu.memory_space<vmem>>, vector<128x512xf32>
    %cst_119 = arith.constant dense<0.000000e+00> : vector<2x512xf32>
    %331 = tpu.matmul %329, %330, %cst_119 {dimension_numbers = #tpu.dot_dimension_numbers<[1], [0], [0], [1], [0, 0, 1, 1], [], []>} : vector<2x128xf32>, vector<128x512xf32>, vector<2x512xf32> -> vector<2x512xf32>
    %332 = arith.addf %306, %331 : vector<2x512xf32>
    %c0_120 = arith.constant 0 : index
    %c0_121 = arith.constant 0 : index
    %333 = vector.load %arg7[%c0_120, %c0_121] : memref<1x512xf32, #tpu.memory_space<vmem>>, vector<1x512xf32>
    %334 = vector.broadcast %333 : vector<1x512xf32> to vector<2x512xf32>
    %335 = arith.addf %332, %334 : vector<2x512xf32>
    %336 = arith.negf %335 : vector<2x512xf32>
    %337 = math.exp %336 : vector<2x512xf32>
    %cst_122 = arith.constant 1.000000e+00 : f32
    %338 = vector.broadcast %cst_122 : f32 to vector<2x512xf32>
    %339 = arith.addf %338, %337 : vector<2x512xf32>
    %340 = arith.divf %338, %339 : vector<2x512xf32>
    %341 = vector.extract_strided_slice %340 {offsets = [0, 0], sizes = [2, 128], strides = [1, 1]} : vector<2x512xf32> to vector<2x128xf32>
    %342 = vector.extract_strided_slice %340 {offsets = [0, 128], sizes = [2, 128], strides = [1, 1]} : vector<2x512xf32> to vector<2x128xf32>
    %343 = vector.extract_strided_slice %340 {offsets = [0, 256], sizes = [2, 128], strides = [1, 1]} : vector<2x512xf32> to vector<2x128xf32>
    %cst_123 = arith.constant 2.000000e+00 : f32
    %344 = vector.broadcast %cst_123 : f32 to vector<2x128xf32>
    %345 = arith.mulf %344, %343 : vector<2x128xf32>
    %cst_124 = arith.constant 1.000000e+00 : f32
    %346 = vector.broadcast %cst_124 : f32 to vector<2x128xf32>
    %347 = arith.subf %345, %346 : vector<2x128xf32>
    %348 = vector.extract_strided_slice %340 {offsets = [0, 384], sizes = [2, 128], strides = [1, 1]} : vector<2x512xf32> to vector<2x128xf32>
    %349 = arith.mulf %342, %302 : vector<2x128xf32>
    %350 = arith.mulf %341, %347 : vector<2x128xf32>
    %351 = arith.addf %349, %350 : vector<2x128xf32>
    %352 = math.tanh %351 : vector<2x128xf32>
    %353 = arith.mulf %348, %352 : vector<2x128xf32>
    %c0_125 = arith.constant 0 : index
    %c0_126 = arith.constant 0 : index
    %354 = vector.load %arg6[%c0_125, %c0_126] : memref<128x512xf32, #tpu.memory_space<vmem>>, vector<128x512xf32>
    %cst_127 = arith.constant dense<0.000000e+00> : vector<2x512xf32>
    %355 = tpu.matmul %353, %354, %cst_127 {dimension_numbers = #tpu.dot_dimension_numbers<[1], [0], [0], [1], [0, 0, 1, 1], [], []>} : vector<2x128xf32>, vector<128x512xf32>, vector<2x512xf32> -> vector<2x512xf32>
    %356 = vector.extract_strided_slice %9 {offsets = [7, 0, 0], sizes = [1, 2, 512], strides = [1, 1, 1]} : vector<8x2x512xf32> to vector<1x2x512xf32>
    %357 = vector.shape_cast %356 : vector<1x2x512xf32> to vector<2x512xf32>
    %c0_128 = arith.constant 0 : index
    %c0_129 = arith.constant 0 : index
    %358 = vector.load %arg4[%c0_128, %c0_129] : memref<128x512xf32, #tpu.memory_space<vmem>>, vector<128x512xf32>
    %cst_130 = arith.constant dense<0.000000e+00> : vector<2x512xf32>
    %359 = tpu.matmul %329, %358, %cst_130 {dimension_numbers = #tpu.dot_dimension_numbers<[1], [0], [0], [1], [0, 0, 1, 1], [], []>} : vector<2x128xf32>, vector<128x512xf32>, vector<2x512xf32> -> vector<2x512xf32>
    %360 = arith.addf %357, %359 : vector<2x512xf32>
    %361 = arith.negf %360 : vector<2x512xf32>
    %362 = math.exp %361 : vector<2x512xf32>
    %cst_131 = arith.constant 1.000000e+00 : f32
    %363 = vector.broadcast %cst_131 : f32 to vector<2x512xf32>
    %364 = arith.addf %363, %362 : vector<2x512xf32>
    %365 = arith.divf %363, %364 : vector<2x512xf32>
    %366 = vector.extract_strided_slice %365 {offsets = [0, 0], sizes = [2, 128], strides = [1, 1]} : vector<2x512xf32> to vector<2x128xf32>
    %367 = vector.extract_strided_slice %365 {offsets = [0, 128], sizes = [2, 128], strides = [1, 1]} : vector<2x512xf32> to vector<2x128xf32>
    %368 = vector.extract_strided_slice %365 {offsets = [0, 256], sizes = [2, 128], strides = [1, 1]} : vector<2x512xf32> to vector<2x128xf32>
    %cst_132 = arith.constant 2.000000e+00 : f32
    %369 = vector.broadcast %cst_132 : f32 to vector<2x128xf32>
    %370 = arith.mulf %369, %368 : vector<2x128xf32>
    %cst_133 = arith.constant 1.000000e+00 : f32
    %371 = vector.broadcast %cst_133 : f32 to vector<2x128xf32>
    %372 = arith.subf %370, %371 : vector<2x128xf32>
    %373 = vector.extract_strided_slice %365 {offsets = [0, 384], sizes = [2, 128], strides = [1, 1]} : vector<2x512xf32> to vector<2x128xf32>
    %374 = arith.mulf %367, %327 : vector<2x128xf32>
    %375 = arith.mulf %366, %372 : vector<2x128xf32>
    %376 = arith.addf %374, %375 : vector<2x128xf32>
    %377 = math.tanh %376 : vector<2x128xf32>
    %378 = arith.mulf %373, %377 : vector<2x128xf32>
    %c0_134 = arith.constant 0 : index
    %c0_135 = arith.constant 0 : index
    %379 = vector.load %arg5[%c0_134, %c0_135] : memref<128x512xf32, #tpu.memory_space<vmem>>, vector<128x512xf32>
    %cst_136 = arith.constant dense<0.000000e+00> : vector<2x512xf32>
    %380 = tpu.matmul %378, %379, %cst_136 {dimension_numbers = #tpu.dot_dimension_numbers<[1], [0], [0], [1], [0, 0, 1, 1], [], []>} : vector<2x128xf32>, vector<128x512xf32>, vector<2x512xf32> -> vector<2x512xf32>
    %381 = arith.addf %355, %380 : vector<2x512xf32>
    %c0_137 = arith.constant 0 : index
    %c0_138 = arith.constant 0 : index
    %382 = vector.load %arg7[%c0_137, %c0_138] : memref<1x512xf32, #tpu.memory_space<vmem>>, vector<1x512xf32>
    %383 = vector.broadcast %382 : vector<1x512xf32> to vector<2x512xf32>
    %384 = arith.addf %381, %383 : vector<2x512xf32>
    %385 = arith.negf %384 : vector<2x512xf32>
    %386 = math.exp %385 : vector<2x512xf32>
    %cst_139 = arith.constant 1.000000e+00 : f32
    %387 = vector.broadcast %cst_139 : f32 to vector<2x512xf32>
    %388 = arith.addf %387, %386 : vector<2x512xf32>
    %389 = arith.divf %387, %388 : vector<2x512xf32>
    %390 = vector.extract_strided_slice %389 {offsets = [0, 0], sizes = [2, 128], strides = [1, 1]} : vector<2x512xf32> to vector<2x128xf32>
    %391 = vector.extract_strided_slice %389 {offsets = [0, 128], sizes = [2, 128], strides = [1, 1]} : vector<2x512xf32> to vector<2x128xf32>
    %392 = vector.extract_strided_slice %389 {offsets = [0, 256], sizes = [2, 128], strides = [1, 1]} : vector<2x512xf32> to vector<2x128xf32>
    %cst_140 = arith.constant 2.000000e+00 : f32
    %393 = vector.broadcast %cst_140 : f32 to vector<2x128xf32>
    %394 = arith.mulf %393, %392 : vector<2x128xf32>
    %cst_141 = arith.constant 1.000000e+00 : f32
    %395 = vector.broadcast %cst_141 : f32 to vector<2x128xf32>
    %396 = arith.subf %394, %395 : vector<2x128xf32>
    %397 = vector.extract_strided_slice %389 {offsets = [0, 384], sizes = [2, 128], strides = [1, 1]} : vector<2x512xf32> to vector<2x128xf32>
    %398 = arith.mulf %391, %351 : vector<2x128xf32>
    %399 = arith.mulf %390, %396 : vector<2x128xf32>
    %400 = arith.addf %398, %399 : vector<2x128xf32>
    %401 = math.tanh %400 : vector<2x128xf32>
    %402 = arith.mulf %397, %401 : vector<2x128xf32>
    %403 = vector.shape_cast %59 : vector<2x128xf32> to vector<1x2x128xf32>
    %404 = vector.shape_cast %108 : vector<2x128xf32> to vector<1x2x128xf32>
    %405 = vector.shape_cast %157 : vector<2x128xf32> to vector<1x2x128xf32>
    %406 = vector.shape_cast %206 : vector<2x128xf32> to vector<1x2x128xf32>
    %407 = vector.shape_cast %255 : vector<2x128xf32> to vector<1x2x128xf32>
    %408 = vector.shape_cast %304 : vector<2x128xf32> to vector<1x2x128xf32>
    %409 = vector.shape_cast %353 : vector<2x128xf32> to vector<1x2x128xf32>
    %410 = vector.shape_cast %402 : vector<2x128xf32> to vector<1x2x128xf32>
    %411 = tpu.concatenate %403, %404, %405, %406, %407, %408, %409, %410 in 0 : vector<1x2x128xf32>, vector<1x2x128xf32>, vector<1x2x128xf32>, vector<1x2x128xf32>, vector<1x2x128xf32>, vector<1x2x128xf32>, vector<1x2x128xf32>, vector<1x2x128xf32> -> vector<8x2x128xf32>
    %c0_142 = arith.constant 0 : index
    %c0_143 = arith.constant 0 : index
    %412 = vector.load %arg8[%c0_142, %c0_143] : memref<1x128xf32, #tpu.memory_space<vmem>>, vector<1x128xf32>
    %413 = vector.shape_cast %412 : vector<1x128xf32> to vector<1x1x128xf32>
    %414 = vector.broadcast %413 : vector<1x1x128xf32> to vector<8x2x128xf32>
    %415 = arith.mulf %411, %414 : vector<8x2x128xf32>
    %cst_144 = arith.constant dense<0.000000e+00> : vector<8x2xf32>
    %416 = vector.multi_reduction <add>, %415, %cst_144 [2] : vector<8x2x128xf32> to vector<8x2xf32>
    %c0_145 = arith.constant 0 : index
    %c0_146 = arith.constant 0 : index
    %417 = vector.load %arg9[%c0_145, %c0_146] : memref<1x1xf32, #tpu.memory_space<vmem>>, vector<1x1xf32>
    %418 = vector.broadcast %417 : vector<1x1xf32> to vector<8x2xf32>
    %419 = arith.addf %416, %418 : vector<8x2xf32>
    %cst_147 = arith.constant 0.000000e+00 : f32
    %420 = vector.broadcast %cst_147 : f32 to vector<8x2xf32>
    %421 = arith.maximumf %419, %420 : vector<8x2xf32>
    %c0_148 = arith.constant 0 : index
    %c0_149 = arith.constant 0 : index
    %422 = vector.load %arg10[%c0_148, %c0_149] : memref<8x2xf32, #tpu.memory_space<vmem>>, vector<8x2xf32>
    tpu.vector_store %arg10[%c0_148, %c0_149], %421 {strides = array<i32>} : memref<8x2xf32, #tpu.memory_space<vmem>>, vector<8x2xf32>,
    return
  }
  func.func @transform_0(%arg0: i32) -> (i32, i32, i32) {
    %c0_i32 = arith.constant 0 : i32
    %c0_i32_0 = arith.constant 0 : i32
    %c0_i32_1 = arith.constant 0 : i32
    %c0_i32_2 = arith.constant 0 : i32
    return %c0_i32, %c0_i32_0, %c0_i32_1 : i32, i32, i32
  }
  func.func @transform_1(%arg0: i32) -> (i32, i32) {
    %c0_i32 = arith.constant 0 : i32
    %c0_i32_0 = arith.constant 0 : i32
    %c0_i32_1 = arith.constant 0 : i32
    return %c0_i32, %c0_i32_0 : i32, i32
  }
  func.func @transform_2(%arg0: i32) -> (i32, i32) {
    %c0_i32 = arith.constant 0 : i32
    %c0_i32_0 = arith.constant 0 : i32
    %c0_i32_1 = arith.constant 0 : i32
    return %c0_i32, %c0_i32_0 : i32, i32
  }
  func.func @transform_3(%arg0: i32) -> (i32, i32) {
    %c0_i32 = arith.constant 0 : i32
    %c0_i32_0 = arith.constant 0 : i32
    %c0_i32_1 = arith.constant 0 : i32
    return %c0_i32, %c0_i32_0 : i32, i32
  }
  func.func @transform_4(%arg0: i32) -> (i32, i32) {
    %c0_i32 = arith.constant 0 : i32
    %c0_i32_0 = arith.constant 0 : i32
    %c0_i32_1 = arith.constant 0 : i32
    return %c0_i32, %c0_i32_0 : i32, i32
  }
  func.func @transform_5(%arg0: i32) -> (i32, i32) {
    %c0_i32 = arith.constant 0 : i32
    %c0_i32_0 = arith.constant 0 : i32
    %c0_i32_1 = arith.constant 0 : i32
    return %c0_i32, %c0_i32_0 : i32, i32
  }
  func.func @transform_6(%arg0: i32) -> (i32, i32) {
    %c0_i32 = arith.constant 0 : i32
    %c0_i32_0 = arith.constant 0 : i32
    %c0_i32_1 = arith.constant 0 : i32
    return %c0_i32, %c0_i32_0 : i32, i32
  }
  func.func @transform_7(%arg0: i32) -> (i32, i32) {
    %c0_i32 = arith.constant 0 : i32
    %c0_i32_0 = arith.constant 0 : i32
    %c0_i32_1 = arith.constant 0 : i32
    return %c0_i32, %c0_i32_0 : i32, i32
  }
  func.func @transform_8(%arg0: i32) -> (i32, i32) {
    %c0_i32 = arith.constant 0 : i32
    %c0_i32_0 = arith.constant 0 : i32
    %c0_i32_1 = arith.constant 0 : i32
    return %c0_i32, %c0_i32_0 : i32, i32
  }
  func.func @transform_9(%arg0: i32) -> (i32, i32) {
    %c0_i32 = arith.constant 0 : i32
    %c0_i32_0 = arith.constant 0 : i32
    %c0_i32_1 = arith.constant 0 : i32
    return %c0_i32, %c0_i32_0 : i32, i32
  }
}

</mosaic_0001>

<llo_original>
// kernel: tpu_custom_call.1
$region0: #{tpu_custom_call.1}
  #allocation0 [shape = 'u32[]', space=smem, size = 0x4, offset = 0x4, fixed_abs, tag = 'smem constant byte address 0x4 - core index']
  #allocation1 [shape = 'u32[144,128]{1,0:T(1,128)}', space=vmem, size = 0x12000, scoped, tag = 'internal scratch']
  #allocation2 [shape = 'f32[1,1]{1,0:T(1,128)S(1)}', space=vmem, size = 0x200, scoped, tag = 'scoped memory for tpu_custom_call.1']
  %s0 = inlined_call_operand.vmem [shape: f32[8,2,1], index: 0, kind: input, shape index: {}]
  %s1 = inlined_call_operand.vmem [shape: f32[1,512], index: 1, kind: input, shape index: {}]
  %s2 = inlined_call_operand.vmem [shape: f32[1,512], index: 2, kind: input, shape index: {}]
  %s3 = inlined_call_operand.hbm [shape: f32[128,512], index: 3, kind: input, shape index: {}]
  %s4 = inlined_call_operand.hbm [shape: f32[128,512], index: 4, kind: input, shape index: {}]
  %s5 = inlined_call_operand.hbm [shape: f32[128,512], index: 5, kind: input, shape index: {}]
  %s6 = inlined_call_operand.vmem [shape: f32[1,512], index: 6, kind: input, shape index: {}]
  %s7 = inlined_call_operand.vmem [shape: f32[1,128], index: 7, kind: input, shape index: {}]
  %s8 = inlined_call_operand.<no memory space> [shape: f32[1,1], index: 8, kind: input, shape index: {}]
  %s9 = inlined_call_operand.vmem [shape: f32[8,2], index: 9, kind: output, shape index: {}]
  %s10 = sld [smem:[#allocation0]]
  $region58: #{tpu_custom_call.1} parent=0
    _
  %s12 = ssub.s32 1, %s10
  %s13 = scalar_select 0, %s12, %s10
  %v14 = vstv %s8
  %15 = vst [vmem:[#allocation2] sm:$0x1] %v14
  $region1: #{tpu_custom_call.1} parent=0
    #allocation3 [shape = 'u8[262144]{0}', space=vmem, size = 0x40000, scoped, tag = 'input window, operand 3, single buffered']
    #allocation4 [shape = 's32[1]{0}', space=sflag, size = 0x4, scoped, tag = 'scoped memory for tpu_custom_call.1']
    #allocation5 [shape = 'u8[262144]{0}', space=vmem, size = 0x40000, scoped, tag = 'input window, operand 4, single buffered']
    #allocation6 [shape = 's32[1]{0}', space=sflag, size = 0x4, scoped, tag = 'scoped memory for tpu_custom_call.1']
    #allocation7 [shape = 'u8[262144]{0}', space=vmem, size = 0x40000, scoped, tag = 'input window, operand 5, single buffered']
    %16 = vsyncpa [#allocation4], 0
    %17 = vsyncpa [#allocation6], 0
    // Predicated region
    $region2: #{tpu_custom_call.1} parent=1 // pred_check
      _
    $region3: #{tpu_custom_call.1} parent=1 // pred_check_branch
      %19 = sbr.rel (0) target = $region5
    $region4: #{tpu_custom_call.1} parent=1 // pred_region
      _
    $region5: #{tpu_custom_call.1} parent=1 // pred_fallthru
      _
    // Predicated region
    $region6: #{tpu_custom_call.1} parent=1 // pred_check
      _
    $region7: #{tpu_custom_call.1} parent=1 // pred_check_branch
      %21 = sbr.rel (0) target = $region9
    $region8: #{tpu_custom_call.1} parent=1 // pred_region
      _
    $region9: #{tpu_custom_call.1} parent=1 // pred_fallthru
      _
    // Predicated region
    $region10: #{tpu_custom_call.1} parent=1 // pred_check
      _
    $region11: #{tpu_custom_call.1} parent=1 // pred_check_branch
      %23 = sbr.rel (0) target = $region13
    $region12: #{tpu_custom_call.1} parent=1 // pred_region
      _
    $region13: #{tpu_custom_call.1} parent=1 // pred_fallthru
      _
    // Predicated region
    $region14: #{tpu_custom_call.1} parent=1 // pred_check
      _
    $region15: #{tpu_custom_call.1} parent=1 // pred_check_branch
      %25 = sbr.rel (0) target = $region17
    $region16: #{tpu_custom_call.1} parent=1 // pred_region
      %s27 = ssub.s32 8192, 8192
      %28 = vsyncadd [#allocation4], %s27
      %s29 = sshll.u32 [#allocation3], 4
      %s30 = int_to_ptr.vmem [resolvable:$true] %s29
      %35 = dma.hbm_to_vmem [thread:$0]  %s3, 8192, %s30, [#allocation4], 512, 512, 32
    $region17: #{tpu_custom_call.1} parent=1 // pred_fallthru
      _
    // Predicated region
    $region18: #{tpu_custom_call.1} parent=1 // pred_check
      _
    $region19: #{tpu_custom_call.1} parent=1 // pred_check_branch
      %37 = sbr.rel (0) target = $region21
    $region20: #{tpu_custom_call.1} parent=1 // pred_region
      %s39 = ssub.s32 8192, 8192
      %40 = vsyncadd [#allocation6], %s39
      %s41 = sshll.u32 [#allocation5], 4
      %s42 = int_to_ptr.vmem [resolvable:$true] %s41
      %47 = dma.hbm_to_vmem [thread:$0]  %s4, 8192, %s42, [#allocation6], 512, 512, 32
    $region21: #{tpu_custom_call.1} parent=1 // pred_fallthru
      _
    // Predicated region
    $region22: #{tpu_custom_call.1} parent=1 // pred_check
      _
    $region23: #{tpu_custom_call.1} parent=1 // pred_check_branch
      %49 = sbr.rel (0) target = $region25
    $region24: #{tpu_custom_call.1} parent=1 // pred_region
      %s51 = ssub.s32 8192, 8192
      %52 = vsyncadd [#allocation6], %s51
      %s53 = sshll.u32 [#allocation7], 4
      %s54 = int_to_ptr.vmem [resolvable:$true] %s53
      %59 = dma.hbm_to_vmem [thread:$0]  %s5, 8192, %s54, [#allocation6], 512, 512, 32
    $region25: #{tpu_custom_call.1} parent=1 // pred_fallthru
      _
    // Predicated region
    $region26: #{tpu_custom_call.1} parent=1 // pred_check
      _
    $region27: #{tpu_custom_call.1} parent=1 // pred_check_branch
      %61 = sbr.rel (0) target = $region29
    $region28: #{tpu_custom_call.1} parent=1 // pred_region
      _
    $region29: #{tpu_custom_call.1} parent=1 // pred_fallthru
      _
    // Predicated region
    $region30: #{tpu_custom_call.1} parent=1 // pred_check
      _
    $region31: #{tpu_custom_call.1} parent=1 // pred_check_branch
      %63 = sbr.rel (0) target = $region33
    $region32: #{tpu_custom_call.1} parent=1 // pred_region
      _
    $region33: #{tpu_custom_call.1} parent=1 // pred_fallthru
      _
    // Predicated region
    $region34: #{tpu_custom_call.1} parent=1 // pred_check
      _
    $region35: #{tpu_custom_call.1} parent=1 // pred_check_branch
      %65 = sbr.rel (0) target = $region37
    $region36: #{tpu_custom_call.1} parent=1 // pred_region
      _
    $region37: #{tpu_custom_call.1} parent=1 // pred_fallthru
      _
    // Predicated region
    $region38: #{tpu_custom_call.1} parent=1 // pred_check
      _
    $region39: #{tpu_custom_call.1} parent=1 // pred_check_branch
      %67 = sbr.rel (0) target = $region41
    $region40: #{tpu_custom_call.1} parent=1 // pred_region
      %68 = dma.done [#allocation4], 8192
    $region41: #{tpu_custom_call.1} parent=1 // pred_fallthru
      _
    // Predicated region
    $region42: #{tpu_custom_call.1} parent=1 // pred_check
      _
    $region43: #{tpu_custom_call.1} parent=1 // pred_check_branch
      %70 = sbr.rel (0) target = $region45
    $region44: #{tpu_custom_call.1} parent=1 // pred_region
      %71 = dma.done [#allocation6], 8192
    $region45: #{tpu_custom_call.1} parent=1 // pred_fallthru
      _
    // Predicated region
    $region46: #{tpu_custom_call.1} parent=1 // pred_check
      _
    $region47: #{tpu_custom_call.1} parent=1 // pred_check_branch
      %73 = sbr.rel (0) target = $region49
    $region48: #{tpu_custom_call.1} parent=1 // pred_region
      %74 = dma.done [#allocation6], 8192
    $region49: #{tpu_custom_call.1} parent=1 // pred_fallthru
      _
    %v75 = vld [vmem:[%s0] sm:$0x3]
    %v76 = vld [vmem:[%s0 + $0x2] sm:$0x3]
    %v77 = vld [vmem:[%s0 + $0x4] sm:$0x3]
    %v78 = vld [vmem:[%s0 + $0x6] sm:$0x3]
    %v79 = vld [vmem:[%s0 + $0x8] sm:$0x3]
    %v80 = vld [vmem:[%s0 + $0xa] sm:$0x3]
    %v81 = vld [vmem:[%s0 + $0xc] sm:$0x3]
    %v82 = vld [vmem:[%s0 + $0xe] sm:$0x3]
    %v83 = vld [vmem:[%s1] sm:$0xf]
    %85 = vset.pattern.permute.xlu0 0
    %86 = vperm.xlu0 %85, %v75
    %v87 = vpop.permute.xlu0 %86
    %90 = vset.pattern.permute.xlu0 0
    %91 = vperm.xlu0 %90, %v76
    %v92 = vpop.permute.xlu0 %91
    %95 = vset.pattern.permute.xlu0 0
    %96 = vperm.xlu0 %95, %v77
    %v97 = vpop.permute.xlu0 %96
    %100 = vset.pattern.permute.xlu0 0
    %101 = vperm.xlu0 %100, %v78
    %v102 = vpop.permute.xlu0 %101
    %105 = vset.pattern.permute.xlu0 0
    %106 = vperm.xlu0 %105, %v79
    %v107 = vpop.permute.xlu0 %106
    %110 = vset.pattern.permute.xlu0 0
    %111 = vperm.xlu0 %110, %v80
    %v112 = vpop.permute.xlu0 %111
    %115 = vset.pattern.permute.xlu0 0
    %116 = vperm.xlu0 %115, %v81
    %v117 = vpop.permute.xlu0 %116
    %120 = vset.pattern.permute.xlu0 0
    %121 = vperm.xlu0 %120, %v82
    %v122 = vpop.permute.xlu0 %121
    %v125 = vlaneseq
    %v126 = vshrl.u32 %v125, 7
    %v127 = vsub.s32 0, %v126
    %v128 = vrot.slane %v83, %v127
    %v129 = vlaneseq
    %v130 = vshrl.u32 %v129, 7
    %v131 = vsub.s32 1, %v130
    %v132 = vrot.slane %v83, %v131
    %v133 = vlaneseq
    %v134 = vshrl.u32 %v133, 7
    %v135 = vsub.s32 2, %v134
    %v136 = vrot.slane %v83, %v135
    %v137 = vlaneseq
    %v138 = vshrl.u32 %v137, 7
    %v139 = vsub.s32 3, %v138
    %v140 = vrot.slane %v83, %v139
    %v145 = vmul.f32 %v87, %v128
    %v146 = vmul.f32 %v87, %v132
    %v147 = vmul.f32 %v87, %v136
    %v148 = vmul.f32 %v87, %v140
    %v149 = vmul.f32 %v92, %v128
    %v150 = vmul.f32 %v92, %v132
    %v151 = vmul.f32 %v92, %v136
    %v152 = vmul.f32 %v92, %v140
    %v153 = vmul.f32 %v97, %v128
    %v154 = vmul.f32 %v97, %v132
    %v155 = vmul.f32 %v97, %v136
    %v156 = vmul.f32 %v97, %v140
    %v157 = vmul.f32 %v102, %v128
    %v158 = vmul.f32 %v102, %v132
    %v159 = vmul.f32 %v102, %v136
    %v160 = vmul.f32 %v102, %v140
    %v161 = vmul.f32 %v107, %v128
    %v162 = vmul.f32 %v107, %v132
    %v163 = vmul.f32 %v107, %v136
    %v164 = vmul.f32 %v107, %v140
    %v165 = vmul.f32 %v112, %v128
    %v166 = vmul.f32 %v112, %v132
    %v167 = vmul.f32 %v112, %v136
    %v168 = vmul.f32 %v112, %v140
    %v169 = vmul.f32 %v117, %v128
    %v170 = vmul.f32 %v117, %v132
    %v171 = vmul.f32 %v117, %v136
    %v172 = vmul.f32 %v117, %v140
    %v173 = vmul.f32 %v122, %v128
    %v174 = vmul.f32 %v122, %v132
    %v175 = vmul.f32 %v122, %v136
    %v176 = vmul.f32 %v122, %v140
    %v177 = vld [vmem:[%s2] sm:$0xf]
    %v179 = vlaneseq
    %v180 = vshrl.u32 %v179, 7
    %v181 = vsub.s32 0, %v180
    %v182 = vrot.slane %v177, %v181
    %v183 = vlaneseq
    %v184 = vshrl.u32 %v183, 7
    %v185 = vsub.s32 1, %v184
    %v186 = vrot.slane %v177, %v185
    %v187 = vlaneseq
    %v188 = vshrl.u32 %v187, 7
    %v189 = vsub.s32 2, %v188
    %v190 = vrot.slane %v177, %v189
    %v191 = vlaneseq
    %v192 = vshrl.u32 %v191, 7
    %v193 = vsub.s32 3, %v192
    %v194 = vrot.slane %v177, %v193
    %v199 = vadd.f32 %v145, %v182
    %v200 = vadd.f32 %v146, %v186
    %v201 = vadd.f32 %v147, %v190
    %v202 = vadd.f32 %v148, %v194
    %v203 = vadd.f32 %v149, %v182
    %v204 = vadd.f32 %v150, %v186
    %v205 = vadd.f32 %v151, %v190
    %v206 = vadd.f32 %v152, %v194
    %v207 = vadd.f32 %v153, %v182
    %v208 = vadd.f32 %v154, %v186
    %v209 = vadd.f32 %v155, %v190
    %v210 = vadd.f32 %v156, %v194
    %v211 = vadd.f32 %v157, %v182
    %v212 = vadd.f32 %v158, %v186
    %v213 = vadd.f32 %v159, %v190
    %v214 = vadd.f32 %v160, %v194
    %v215 = vadd.f32 %v161, %v182
    %v216 = vadd.f32 %v162, %v186
    %v217 = vadd.f32 %v163, %v190
    %v218 = vadd.f32 %v164, %v194
    %v219 = vadd.f32 %v165, %v182
    %v220 = vadd.f32 %v166, %v186
    %v221 = vadd.f32 %v167, %v190
    %v222 = vadd.f32 %v168, %v194
    %v223 = vadd.f32 %v169, %v182
    %v224 = vadd.f32 %v170, %v186
    %v225 = vadd.f32 %v171, %v190
    %v226 = vadd.f32 %v172, %v194
    %v227 = vadd.f32 %v173, %v182
    %v228 = vadd.f32 %v174, %v186
    %v229 = vadd.f32 %v175, %v190
    %v230 = vadd.f32 %v176, %v194
    %v231 = vld [vmem:[#allocation7] sm:$0xff]
    %v232 = vld [vmem:[#allocation7 + $0x8] sm:$0xff]
    %v233 = vld [vmem:[#allocation7 + $0x10] sm:$0xff]
    %v234 = vld [vmem:[#allocation7 + $0x18] sm:$0xff]
    %v235 = vld [vmem:[#allocation7 + $0x20] sm:$0xff]
    %v236 = vld [vmem:[#allocation7 + $0x28] sm:$0xff]
    %v237 = vld [vmem:[#allocation7 + $0x30] sm:$0xff]
    %v238 = vld [vmem:[#allocation7 + $0x38] sm:$0xff]
    %v239 = vld [vmem:[#allocation7 + $0x40] sm:$0xff]
    %v240 = vld [vmem:[#allocation7 + $0x48] sm:$0xff]
    %v241 = vld [vmem:[#allocation7 + $0x50] sm:$0xff]
    %v242 = vld [vmem:[#allocation7 + $0x58] sm:$0xff]
    %v243 = vld [vmem:[#allocation7 + $0x60] sm:$0xff]
    %v244 = vld [vmem:[#allocation7 + $0x68] sm:$0xff]
    %v245 = vld [vmem:[#allocation7 + $0x70] sm:$0xff]
    %v246 = vld [vmem:[#allocation7 + $0x78] sm:$0xff]
    %v247 = vld [vmem:[#allocation7 + $0x80] sm:$0xff]
    %v248 = vld [vmem:[#allocation7 + $0x88] sm:$0xff]
    %v249 = vld [vmem:[#allocation7 + $0x90] sm:$0xff]
    %v250 = vld [vmem:[#allocation7 + $0x98] sm:$0xff]
    %v251 = vld [vmem:[#allocation7 + $0xa0] sm:$0xff]
    %v252 = vld [vmem:[#allocation7 + $0xa8] sm:$0xff]
    %v253 = vld [vmem:[#allocation7 + $0xb0] sm:$0xff]
    %v254 = vld [vmem:[#allocation7 + $0xb8] sm:$0xff]
    %v255 = vld [vmem:[#allocation7 + $0xc0] sm:$0xff]
    %v256 = vld [vmem:[#allocation7 + $0xc8] sm:$0xff]
    %v257 = vld [vmem:[#allocation7 + $0xd0] sm:$0xff]
    %v258 = vld [vmem:[#allocation7 + $0xd8] sm:$0xff]
    %v259 = vld [vmem:[#allocation7 + $0xe0] sm:$0xff]
    %v260 = vld [vmem:[#allocation7 + $0xe8] sm:$0xff]
    %v261 = vld [vmem:[#allocation7 + $0xf0] sm:$0xff]
    %v262 = vld [vmem:[#allocation7 + $0xf8] sm:$0xff]
    %v263 = vld [vmem:[#allocation7 + $0x100] sm:$0xff]
    %v264 = vld [vmem:[#allocation7 + $0x108] sm:$0xff]
    %v265 = vld [vmem:[#allocation7 + $0x110] sm:$0xff]
    %v266 = vld [vmem:[#allocation7 + $0x118] sm:$0xff]
    %v267 = vld [vmem:[#allocation7 + $0x120] sm:$0xff]
    %v268 = vld [vmem:[#allocation7 + $0x128] sm:$0xff]
    %v269 = vld [vmem:[#allocation7 + $0x130] sm:$0xff]
    %v270 = vld [vmem:[#allocation7 + $0x138] sm:$0xff]
    %v271 = vld [vmem:[#allocation7 + $0x140] sm:$0xff]
    %v272 = vld [vmem:[#allocation7 + $0x148] sm:$0xff]
    %v273 = vld [vmem:[#allocation7 + $0x150] sm:$0xff]
    %v274 = vld [vmem:[#allocation7 + $0x158] sm:$0xff]
    %v275 = vld [vmem:[#allocation7 + $0x160] sm:$0xff]
    %v276 = vld [vmem:[#allocation7 + $0x168] sm:$0xff]
    %v277 = vld [vmem:[#allocation7 + $0x170] sm:$0xff]
    %v278 = vld [vmem:[#allocation7 + $0x178] sm:$0xff]
    %v279 = vld [vmem:[#allocation7 + $0x180] sm:$0xff]
    %v280 = vld [vmem:[#allocation7 + $0x188] sm:$0xff]
    %v281 = vld [vmem:[#allocation7 + $0x190] sm:$0xff]
    %v282 = vld [vmem:[#allocation7 + $0x198] sm:$0xff]
    %v283 = vld [vmem:[#allocation7 + $0x1a0] sm:$0xff]
    %v284 = vld [vmem:[#allocation7 + $0x1a8] sm:$0xff]
    %v285 = vld [vmem:[#allocation7 + $0x1b0] sm:$0xff]
    %v286 = vld [vmem:[#allocation7 + $0x1b8] sm:$0xff]
    %v287 = vld [vmem:[#allocation7 + $0x1c0] sm:$0xff]
    %v288 = vld [vmem:[#allocation7 + $0x1c8] sm:$0xff]
    %v289 = vld [vmem:[#allocation7 + $0x1d0] sm:$0xff]
    %v290 = vld [vmem:[#allocation7 + $0x1d8] sm:$0xff]
    %v291 = vld [vmem:[#allocation7 + $0x1e0] sm:$0xff]
    %v292 = vld [vmem:[#allocation7 + $0x1e8] sm:$0xff]
    %v293 = vld [vmem:[#allocation7 + $0x1f0] sm:$0xff]
    %v294 = vld [vmem:[#allocation7 + $0x1f8] sm:$0xff]
    %v295 = vld [vmem:[#allocation3] sm:$0xff]
    %v296 = vld [vmem:[#allocation3 + $0x8] sm:$0xff]
    %v297 = vld [vmem:[#allocation3 + $0x10] sm:$0xff]
    %v298 = vld [vmem:[#allocation3 + $0x18] sm:$0xff]
    %v299 = vld [vmem:[#allocation3 + $0x20] sm:$0xff]
    %v300 = vld [vmem:[#allocation3 + $0x28] sm:$0xff]
    %v301 = vld [vmem:[#allocation3 + $0x30] sm:$0xff]
    %v302 = vld [vmem:[#allocation3 + $0x38] sm:$0xff]
    %v303 = vld [vmem:[#allocation3 + $0x40] sm:$0xff]
    %v304 = vld [vmem:[#allocation3 + $0x48] sm:$0xff]
    %v305 = vld [vmem:[#allocation3 + $0x50] sm:$0xff]
    %v306 = vld [vmem:[#allocation3 + $0x58] sm:$0xff]
    %v307 = vld [vmem:[#allocation3 + $0x60] sm:$0xff]
    %v308 = vld [vmem:[#allocation3 + $0x68] sm:$0xff]
    %v309 = vld [vmem:[#allocation3 + $0x70] sm:$0xff]
    %v310 = vld [vmem:[#allocation3 + $0x78] sm:$0xff]
    %v311 = vld [vmem:[#allocation3 + $0x80] sm:$0xff]
    %v312 = vld [vmem:[#allocation3 + $0x88] sm:$0xff]
    %v313 = vld [vmem:[#allocation3 + $0x90] sm:$0xff]
    %v314 = vld [vmem:[#allocation3 + $0x98] sm:$0xff]
    %v315 = vld [vmem:[#allocation3 + $0xa0] sm:$0xff]
    %v316 = vld [vmem:[#allocation3 + $0xa8] sm:$0xff]
    %v317 = vld [vmem:[#allocation3 + $0xb0] sm:$0xff]
    %v318 = vld [vmem:[#allocation3 + $0xb8] sm:$0xff]
    %v319 = vld [vmem:[#allocation3 + $0xc0] sm:$0xff]
    %v320 = vld [vmem:[#allocation3 + $0xc8] sm:$0xff]
    %v321 = vld [vmem:[#allocation3 + $0xd0] sm:$0xff]
    %v322 = vld [vmem:[#allocation3 + $0xd8] sm:$0xff]
    %v323 = vld [vmem:[#allocation3 + $0xe0] sm:$0xff]
    %v324 = vld [vmem:[#allocation3 + $0xe8] sm:$0xff]
    %v325 = vld [vmem:[#allocation3 + $0xf0] sm:$0xff]
    %v326 = vld [vmem:[#allocation3 + $0xf8] sm:$0xff]
    %v327 = vld [vmem:[#allocation3 + $0x100] sm:$0xff]
    %v328 = vld [vmem:[#allocation3 + $0x108] sm:$0xff]
    %v329 = vld [vmem:[#allocation3 + $0x110] sm:$0xff]
    %v330 = vld [vmem:[#allocation3 + $0x118] sm:$0xff]
    %v331 = vld [vmem:[#allocation3 + $0x120] sm:$0xff]
    %v332 = vld [vmem:[#allocation3 + $0x128] sm:$0xff]
    %v333 = vld [vmem:[#allocation3 + $0x130] sm:$0xff]
    %v334 = vld [vmem:[#allocation3 + $0x138] sm:$0xff]
    %v335 = vld [vmem:[#allocation3 + $0x140] sm:$0xff]
    %v336 = vld [vmem:[#allocation3 + $0x148] sm:$0xff]
    %v337 = vld [vmem:[#allocation3 + $0x150] sm:$0xff]
    %v338 = vld [vmem:[#allocation3 + $0x158] sm:$0xff]
    %v339 = vld [vmem:[#allocation3 + $0x160] sm:$0xff]
    %v340 = vld [vmem:[#allocation3 + $0x168] sm:$0xff]
    %v341 = vld [vmem:[#allocation3 + $0x170] sm:$0xff]
    %v342 = vld [vmem:[#allocation3 + $0x178] sm:$0xff]
    %v343 = vld [vmem:[#allocation3 + $0x180] sm:$0xff]
    %v344 = vld [vmem:[#allocation3 + $0x188] sm:$0xff]
    %v345 = vld [vmem:[#allocation3 + $0x190] sm:$0xff]
    %v346 = vld [vmem:[#allocation3 + $0x198] sm:$0xff]
    %v347 = vld [vmem:[#allocation3 + $0x1a0] sm:$0xff]
    %v348 = vld [vmem:[#allocation3 + $0x1a8] sm:$0xff]
    %v349 = vld [vmem:[#allocation3 + $0x1b0] sm:$0xff]
    %v350 = vld [vmem:[#allocation3 + $0x1b8] sm:$0xff]
    %v351 = vld [vmem:[#allocation3 + $0x1c0] sm:$0xff]
    %v352 = vld [vmem:[#allocation3 + $0x1c8] sm:$0xff]
    %v353 = vld [vmem:[#allocation3 + $0x1d0] sm:$0xff]
    %v354 = vld [vmem:[#allocation3 + $0x1d8] sm:$0xff]
    %v355 = vld [vmem:[#allocation3 + $0x1e0] sm:$0xff]
    %v356 = vld [vmem:[#allocation3 + $0x1e8] sm:$0xff]
    %v357 = vld [vmem:[#allocation3 + $0x1f0] sm:$0xff]
    %v358 = vld [vmem:[#allocation3 + $0x1f8] sm:$0xff]
    %359 = vmatprep.subr.mxu0 %v296
    %360 = vmatpush1.msra.mxu0 %v295
    %361 = vmatprep.subr.mxu0 %v300
    %362 = vmatpush1.msra.mxu0 %v299
    %363 = vmatprep.subr.mxu0 %v304
    %364 = vmatpush1.msra.mxu0 %v303
    %365 = vmatprep.subr.mxu0 %v308
    %366 = vmatpush1.msra.mxu0 %v307
    %367 = vmatprep.subr.mxu0 %v312
    %368 = vmatpush1.msra.mxu0 %v311
    %369 = vmatprep.subr.mxu0 %v316
    %370 = vmatpush1.msra.mxu0 %v315
    %371 = vmatprep.subr.mxu0 %v320
    %372 = vmatpush1.msra.mxu0 %v319
    %373 = vmatprep.subr.mxu0 %v324
    %374 = vmatpush1.msra.mxu0 %v323
    %375 = vmatprep.subr.mxu0 %v328
    %376 = vmatpush1.msra.mxu0 %v327
    %377 = vmatprep.subr.mxu0 %v332
    %378 = vmatpush1.msra.mxu0 %v331
    %379 = vmatprep.subr.mxu0 %v336
    %380 = vmatpush1.msra.mxu0 %v335
    %381 = vmatprep.subr.mxu0 %v340
    %382 = vmatpush1.msra.mxu0 %v339
    %383 = vmatprep.subr.mxu0 %v344
    %384 = vmatpush1.msra.mxu0 %v343
    %385 = vmatprep.subr.mxu0 %v348
    %386 = vmatpush1.msra.mxu0 %v347
    %387 = vmatprep.subr.mxu0 %v352
    %388 = vmatpush1.msra.mxu0 %v351
    %389 = vmatprep.subr.mxu0 %v356
    %390 = vmatpush1.msra.mxu0 %v355
    %391 = vmatprep.subr.mxu0 0.0
    %392 = vmatpush1.msra.mxu0 0.0
    %393 = vmatprep.subr.mxu0 0.0
    %394 = vmatpush1.msra.mxu0 0.0
    %395 = vmatprep.subr.mxu0 0.0
    %396 = vmatpush1.msra.mxu0 0.0
    %397 = vmatprep.subr.mxu0 0.0
    %398 = vmatpush1.msra.mxu0 0.0
    %399 = vmatprep.subr.mxu0 0.0
    %400 = vmatpush1.msra.mxu0 0.0
    %401 = vmatprep.subr.mxu0 0.0
    %402 = vmatpush1.msra.mxu0 0.0
    %403 = vmatprep.subr.mxu0 0.0
    %404 = vmatpush1.msra.mxu0 0.0
    %405 = vmatprep.subr.mxu0 0.0
    %406 = vmatpush1.msra.mxu0 0.0
    %407 = vmatprep.subr.mxu0 0.0
    %408 = vmatpush1.msra.mxu0 0.0
    %409 = vmatprep.subr.mxu0 0.0
    %410 = vmatpush1.msra.mxu0 0.0
    %411 = vmatprep.subr.mxu0 0.0
    %412 = vmatpush1.msra.mxu0 0.0
    %413 = vmatprep.subr.mxu0 0.0
    %414 = vmatpush1.msra.mxu0 0.0
    %415 = vmatprep.subr.mxu0 0.0
    %416 = vmatpush1.msra.mxu0 0.0
    %417 = vmatprep.subr.mxu0 0.0
    %418 = vmatpush1.msra.mxu0 0.0
    %419 = vmatprep.subr.mxu0 0.0
    %420 = vmatpush1.msra.mxu0 0.0
    %421 = vmatprep.subr.mxu0 0.0
    %422 = vmatpush1.msra.mxu0 0.0
    %423 = vmatprep.mubr.f32.mxu0 0.0
    %424 = vmatmul.mubr.f32.gmra.mrb[0].mxu0 0.0
    %v425 = vpop.f32.mrb[0].mxu0
    %v426 = vadd.f32 0.0, %v425
    %v427 = vpop.f32.mrb[0].mxu0
    %v428 = vadd.f32 0.0, %v427
    %429 = vdwg.mxu0
    %430 = vmatprep.subr.mxu0 %v298
    %431 = vmatpush1.msra.mxu0 %v297
    %432 = vmatprep.subr.mxu0 %v302
    %433 = vmatpush1.msra.mxu0 %v301
    %434 = vmatprep.subr.mxu0 %v306
    %435 = vmatpush1.msra.mxu0 %v305
    %436 = vmatprep.subr.mxu0 %v310
    %437 = vmatpush1.msra.mxu0 %v309
    %438 = vmatprep.subr.mxu0 %v314
    %439 = vmatpush1.msra.mxu0 %v313
    %440 = vmatprep.subr.mxu0 %v318
    %441 = vmatpush1.msra.mxu0 %v317
    %442 = vmatprep.subr.mxu0 %v322
    %443 = vmatpush1.msra.mxu0 %v321
    %444 = vmatprep.subr.mxu0 %v326
    %445 = vmatpush1.msra.mxu0 %v325
    %446 = vmatprep.subr.mxu0 %v330
    %447 = vmatpush1.msra.mxu0 %v329
    %448 = vmatprep.subr.mxu0 %v334
    %449 = vmatpush1.msra.mxu0 %v333
    %450 = vmatprep.subr.mxu0 %v338
    %451 = vmatpush1.msra.mxu0 %v337
    %452 = vmatprep.subr.mxu0 %v342
    %453 = vmatpush1.msra.mxu0 %v341
    %454 = vmatprep.subr.mxu0 %v346
    %455 = vmatpush1.msra.mxu0 %v345
    %456 = vmatprep.subr.mxu0 %v350
    %457 = vmatpush1.msra.mxu0 %v349
    %458 = vmatprep.subr.mxu0 %v354
    %459 = vmatpush1.msra.mxu0 %v353
    %460 = vmatprep.subr.mxu0 %v358
    %461 = vmatpush1.msra.mxu0 %v357
    %462 = vmatprep.subr.mxu0 0.0
    %463 = vmatpush1.msra.mxu0 0.0
    %464 = vmatprep.subr.mxu0 0.0
    %465 = vmatpush1.msra.mxu0 0.0
    %466 = vmatprep.subr.mxu0 0.0
    %467 = vmatpush1.msra.mxu0 0.0
    %468 = vmatprep.subr.mxu0 0.0
    %469 = vmatpush1.msra.mxu0 0.0
    %470 = vmatprep.subr.mxu0 0.0
    %471 = vmatpush1.msra.mxu0 0.0
    %472 = vmatprep.subr.mxu0 0.0
    %473 = vmatpush1.msra.mxu0 0.0
    %474 = vmatprep.subr.mxu0 0.0
    %475 = vmatpush1.msra.mxu0 0.0
    %476 = vmatprep.subr.mxu0 0.0
    %477 = vmatpush1.msra.mxu0 0.0
    %478 = vmatprep.subr.mxu0 0.0
    %479 = vmatpush1.msra.mxu0 0.0
    %480 = vmatprep.subr.mxu0 0.0
    %481 = vmatpush1.msra.mxu0 0.0
    %482 = vmatprep.subr.mxu0 0.0
    %483 = vmatpush1.msra.mxu0 0.0
    %484 = vmatprep.subr.mxu0 0.0
    %485 = vmatpush1.msra.mxu0 0.0
    %486 = vmatprep.subr.mxu0 0.0
    %487 = vmatpush1.msra.mxu0 0.0
    %488 = vmatprep.subr.mxu0 0.0
    %489 = vmatpush1.msra.mxu0 0.0
    %490 = vmatprep.subr.mxu0 0.0
    %491 = vmatpush1.msra.mxu0 0.0
    %492 = vmatprep.subr.mxu0 0.0
    %493 = vmatpush1.msra.mxu0 0.0
    %494 = vmatprep.mubr.f32.mxu0 0.0
    %495 = vmatmul.mubr.f32.gmra.mrb[0].mxu0 0.0
    %v496 = vpop.f32.mrb[0].mxu0
    %v497 = vadd.f32 0.0, %v496
    %v498 = vpop.f32.mrb[0].mxu0
    %v499 = vadd.f32 0.0, %v498
    %500 = vdwg.mxu0
    %v501 = vadd.f32 %v199, %v426
    %v502 = vadd.f32 %v200, %v428
    %v503 = vadd.f32 %v201, %v497
    %v504 = vadd.f32 %v202, %v499
    %v505 = vxor.u32 %v501, 2147483648
    %v506 = vxor.u32 %v502, 2147483648
    %v507 = vxor.u32 %v503, 2147483648
    %v508 = vxor.u32 %v504, 2147483648
    %v509 = vmul.f32 %v505, 1.442695
    %v510 = vpow.pop %v509
    %v511 = vmul.f32 %v506, 1.442695
    %v512 = vpow.pop %v511
    %v513 = vmul.f32 %v507, 1.442695
    %v514 = vpow.pop %v513
    %v515 = vmul.f32 %v508, 1.442695
    %v516 = vpow.pop %v515
    %v517 = vadd.f32 %v510, 1.0
    %v518 = vadd.f32 %v512, 1.0
    %v519 = vadd.f32 %v514, 1.0
    %v520 = vadd.f32 %v516, 1.0
    %v521 = vrcp.pop %v517
    %v522 = vmul.f32 1.0, %v521
    %v523 = vrcp.pop %v518
    %v524 = vmul.f32 1.0, %v523
    %v525 = vrcp.pop %v519
    %v526 = vmul.f32 1.0, %v525
    %v527 = vrcp.pop %v520
    %v528 = vmul.f32 1.0, %v527
    %v529 = vmul.f32 %v526, 2.0
    %v530 = vsub.f32 %v529, 1.0
    %v531 = vmul.f32 %v524, 0.0
    %v532 = vmul.f32 %v522, %v530
    %v533 = vadd.f32 %v531, %v532
    %v534 = vtanh.pop %v533
    %v535 = vmul.f32 %v528, %v534
    %v536 = vld [vmem:[#allocation5] sm:$0xff]
    %v537 = vld [vmem:[#allocation5 + $0x8] sm:$0xff]
    %v538 = vld [vmem:[#allocation5 + $0x10] sm:$0xff]
    %v539 = vld [vmem:[#allocation5 + $0x18] sm:$0xff]
    %v540 = vld [vmem:[#allocation5 + $0x20] sm:$0xff]
    %v541 = vld [vmem:[#allocation5 + $0x28] sm:$0xff]
    %v542 = vld [vmem:[#allocation5 + $0x30] sm:$0xff]
    %v543 = vld [vmem:[#allocation5 + $0x38] sm:$0xff]
    %v544 = vld [vmem:[#allocation5 + $0x40] sm:$0xff]
    %v545 = vld [vmem:[#allocation5 + $0x48] sm:$0xff]
    %v546 = vld [vmem:[#allocation5 + $0x50] sm:$0xff]
    %v547 = vld [vmem:[#allocation5 + $0x58] sm:$0xff]
    %v548 = vld [vmem:[#allocation5 + $0x60] sm:$0xff]
    %v549 = vld [vmem:[#allocation5 + $0x68] sm:$0xff]
    %v550 = vld [vmem:[#allocation5 + $0x70] sm:$0xff]
    %v551 = vld [vmem:[#allocation5 + $0x78] sm:$0xff]
    %v552 = vld [vmem:[#allocation5 + $0x80] sm:$0xff]
    %v553 = vld [vmem:[#allocation5 + $0x88] sm:$0xff]
    %v554 = vld [vmem:[#allocation5 + $0x90] sm:$0xff]
    %v555 = vld [vmem:[#allocation5 + $0x98] sm:$0xff]
    %v556 = vld [vmem:[#allocation5 + $0xa0] sm:$0xff]
    %v557 = vld [vmem:[#allocation5 + $0xa8] sm:$0xff]
    %v558 = vld [vmem:[#allocation5 + $0xb0] sm:$0xff]
    %v559 = vld [vmem:[#allocation5 + $0xb8] sm:$0xff]
    %v560 = vld [vmem:[#allocation5 + $0xc0] sm:$0xff]
    %v561 = vld [vmem:[#allocation5 + $0xc8] sm:$0xff]
    %v562 = vld [vmem:[#allocation5 + $0xd0] sm:$0xff]
    %v563 = vld [vmem:[#allocation5 + $0xd8] sm:$0xff]
    %v564 = vld [vmem:[#allocation5 + $0xe0] sm:$0xff]
    %v565 = vld [vmem:[#allocation5 + $0xe8] sm:$0xff]
    %v566 = vld [vmem:[#allocation5 + $0xf0] sm:$0xff]
    %v567 = vld [vmem:[#allocation5 + $0xf8] sm:$0xff]
    %v568 = vld [vmem:[#allocation5 + $0x100] sm:$0xff]
    %v569 = vld [vmem:[#allocation5 + $0x108] sm:$0xff]
    %v570 = vld [vmem:[#allocation5 + $0x110] sm:$0xff]
    %v571 = vld [vmem:[#allocation5 + $0x118] sm:$0xff]
    %v572 = vld [vmem:[#allocation5 + $0x120] sm:$0xff]
    %v573 = vld [vmem:[#allocation5 + $0x128] sm:$0xff]
    %v574 = vld [vmem:[#allocation5 + $0x130] sm:$0xff]
    %v575 = vld [vmem:[#allocation5 + $0x138] sm:$0xff]
    %v576 = vld [vmem:[#allocation5 + $0x140] sm:$0xff]
    %v577 = vld [vmem:[#allocation5 + $0x148] sm:$0xff]
    %v578 = vld [vmem:[#allocation5 + $0x150] sm:$0xff]
    %v579 = vld [vmem:[#allocation5 + $0x158] sm:$0xff]
    %v580 = vld [vmem:[#allocation5 + $0x160] sm:$0xff]
    %v581 = vld [vmem:[#allocation5 + $0x168] sm:$0xff]
    %v582 = vld [vmem:[#allocation5 + $0x170] sm:$0xff]
    %v583 = vld [vmem:[#allocation5 + $0x178] sm:$0xff]
    %v584 = vld [vmem:[#allocation5 + $0x180] sm:$0xff]
    %v585 = vld [vmem:[#allocation5 + $0x188] sm:$0xff]
    %v586 = vld [vmem:[#allocation5 + $0x190] sm:$0xff]
    %v587 = vld [vmem:[#allocation5 + $0x198] sm:$0xff]
    %v588 = vld [vmem:[#allocation5 + $0x1a0] sm:$0xff]
    %v589 = vld [vmem:[#allocation5 + $0x1a8] sm:$0xff]
    %v590 = vld [vmem:[#allocation5 + $0x1b0] sm:$0xff]
    %v591 = vld [vmem:[#allocation5 + $0x1b8] sm:$0xff]
    %v592 = vld [vmem:[#allocation5 + $0x1c0] sm:$0xff]
    %v593 = vld [vmem:[#allocation5 + $0x1c8] sm:$0xff]
    %v594 = vld [vmem:[#allocation5 + $0x1d0] sm:$0xff]
    %v595 = vld [vmem:[#allocation5 + $0x1d8] sm:$0xff]
    %v596 = vld [vmem:[#allocation5 + $0x1e0] sm:$0xff]
    %v597 = vld [vmem:[#allocation5 + $0x1e8] sm:$0xff]
    %v598 = vld [vmem:[#allocation5 + $0x1f0] sm:$0xff]
    %v599 = vld [vmem:[#allocation5 + $0x1f8] sm:$0xff]
    %600 = vmatprep.subr.mxu0 %v537
    %601 = vmatpush1.msra.mxu0 %v536
    %602 = vmatprep.subr.mxu0 %v541
    %603 = vmatpush1.msra.mxu0 %v540
    %604 = vmatprep.subr.mxu0 %v545
    %605 = vmatpush1.msra.mxu0 %v544
    %606 = vmatprep.subr.mxu0 %v549
    %607 = vmatpush1.msra.mxu0 %v548
    %608 = vmatprep.subr.mxu0 %v553
    %609 = vmatpush1.msra.mxu0 %v552
    %610 = vmatprep.subr.mxu0 %v557
    %611 = vmatpush1.msra.mxu0 %v556
    %612 = vmatprep.subr.mxu0 %v561
    %613 = vmatpush1.msra.mxu0 %v560
    %614 = vmatprep.subr.mxu0 %v565
    %615 = vmatpush1.msra.mxu0 %v564
    %616 = vmatprep.subr.mxu0 %v569
    %617 = vmatpush1.msra.mxu0 %v568
    %618 = vmatprep.subr.mxu0 %v573
    %619 = vmatpush1.msra.mxu0 %v572
    %620 = vmatprep.subr.mxu0 %v577
    %621 = vmatpush1.msra.mxu0 %v576
    %622 = vmatprep.subr.mxu0 %v581
    %623 = vmatpush1.msra.mxu0 %v580
    %624 = vmatprep.subr.mxu0 %v585
    %625 = vmatpush1.msra.mxu0 %v584
    %626 = vmatprep.subr.mxu0 %v589
    %627 = vmatpush1.msra.mxu0 %v588
    %628 = vmatprep.subr.mxu0 %v593
    %629 = vmatpush1.msra.mxu0 %v592
    %630 = vmatprep.subr.mxu0 %v597
    %631 = vmatpush1.msra.mxu0 %v596
    %632 = vmatprep.subr.mxu0 0.0
    %633 = vmatpush1.msra.mxu0 0.0
    %634 = vmatprep.subr.mxu0 0.0
    %635 = vmatpush1.msra.mxu0 0.0
    %636 = vmatprep.subr.mxu0 0.0
    %637 = vmatpush1.msra.mxu0 0.0
    %638 = vmatprep.subr.mxu0 0.0
    %639 = vmatpush1.msra.mxu0 0.0
    %640 = vmatprep.subr.mxu0 0.0
    %641 = vmatpush1.msra.mxu0 0.0
    %642 = vmatprep.subr.mxu0 0.0
    %643 = vmatpush1.msra.mxu0 0.0
    %644 = vmatprep.subr.mxu0 0.0
    %645 = vmatpush1.msra.mxu0 0.0
    %646 = vmatprep.subr.mxu0 0.0
    %647 = vmatpush1.msra.mxu0 0.0
    %648 = vmatprep.subr.mxu0 0.0
    %649 = vmatpush1.msra.mxu0 0.0
    %650 = vmatprep.subr.mxu0 0.0
    %651 = vmatpush1.msra.mxu0 0.0
    %652 = vmatprep.subr.mxu0 0.0
    %653 = vmatpush1.msra.mxu0 0.0
    %654 = vmatprep.subr.mxu0 0.0
    %655 = vmatpush1.msra.mxu0 0.0
    %656 = vmatprep.subr.mxu0 0.0
    %657 = vmatpush1.msra.mxu0 0.0
    %658 = vmatprep.subr.mxu0 0.0
    %659 = vmatpush1.msra.mxu0 0.0
    %660 = vmatprep.subr.mxu0 0.0
    %661 = vmatpush1.msra.mxu0 0.0
    %662 = vmatprep.subr.mxu0 0.0
    %663 = vmatpush1.msra.mxu0 0.0
    %664 = vmatprep.mubr.f32.mxu0 0.0
    %665 = vmatmul.mubr.f32.gmra.mrb[0].mxu0 %v535
    %v666 = vpop.f32.mrb[0].mxu0
    %v667 = vadd.f32 0.0, %v666
    %v668 = vpop.f32.mrb[0].mxu0
    %v669 = vadd.f32 0.0, %v668
    %670 = vdwg.mxu0
    %671 = vmatprep.subr.mxu0 %v539
    %672 = vmatpush1.msra.mxu0 %v538
    %673 = vmatprep.subr.mxu0 %v543
    %674 = vmatpush1.msra.mxu0 %v542
    %675 = vmatprep.subr.mxu0 %v547
    %676 = vmatpush1.msra.mxu0 %v546
    %677 = vmatprep.subr.mxu0 %v551
    %678 = vmatpush1.msra.mxu0 %v550
    %679 = vmatprep.subr.mxu0 %v555
    %680 = vmatpush1.msra.mxu0 %v554
    %681 = vmatprep.subr.mxu0 %v559
    %682 = vmatpush1.msra.mxu0 %v558
    %683 = vmatprep.subr.mxu0 %v563
    %684 = vmatpush1.msra.mxu0 %v562
    %685 = vmatprep.subr.mxu0 %v567
    %686 = vmatpush1.msra.mxu0 %v566
    %687 = vmatprep.subr.mxu0 %v571
    %688 = vmatpush1.msra.mxu0 %v570
    %689 = vmatprep.subr.mxu0 %v575
    %690 = vmatpush1.msra.mxu0 %v574
    %691 = vmatprep.subr.mxu0 %v579
    %692 = vmatpush1.msra.mxu0 %v578
    %693 = vmatprep.subr.mxu0 %v583
    %694 = vmatpush1.msra.mxu0 %v582
    %695 = vmatprep.subr.mxu0 %v587
    %696 = vmatpush1.msra.mxu0 %v586
    %697 = vmatprep.subr.mxu0 %v591
    %698 = vmatpush1.msra.mxu0 %v590
    %699 = vmatprep.subr.mxu0 %v595
    %700 = vmatpush1.msra.mxu0 %v594
    %701 = vmatprep.subr.mxu0 %v599
    %702 = vmatpush1.msra.mxu0 %v598
    %703 = vmatprep.subr.mxu0 0.0
    %704 = vmatpush1.msra.mxu0 0.0
    %705 = vmatprep.subr.mxu0 0.0
    %706 = vmatpush1.msra.mxu0 0.0
    %707 = vmatprep.subr.mxu0 0.0
    %708 = vmatpush1.msra.mxu0 0.0
    %709 = vmatprep.subr.mxu0 0.0
    %710 = vmatpush1.msra.mxu0 0.0
    %711 = vmatprep.subr.mxu0 0.0
    %712 = vmatpush1.msra.mxu0 0.0
    %713 = vmatprep.subr.mxu0 0.0
    %714 = vmatpush1.msra.mxu0 0.0
    %715 = vmatprep.subr.mxu0 0.0
    %716 = vmatpush1.msra.mxu0 0.0
    %717 = vmatprep.subr.mxu0 0.0
    %718 = vmatpush1.msra.mxu0 0.0
    %719 = vmatprep.subr.mxu0 0.0
    %720 = vmatpush1.msra.mxu0 0.0
    %721 = vmatprep.subr.mxu0 0.0
    %722 = vmatpush1.msra.mxu0 0.0
    %723 = vmatprep.subr.mxu0 0.0
    %724 = vmatpush1.msra.mxu0 0.0
    %725 = vmatprep.subr.mxu0 0.0
    %726 = vmatpush1.msra.mxu0 0.0
    %727 = vmatprep.subr.mxu0 0.0
    %728 = vmatpush1.msra.mxu0 0.0
    %729 = vmatprep.subr.mxu0 0.0
    %730 = vmatpush1.msra.mxu0 0.0
    %731 = vmatprep.subr.mxu0 0.0
    %732 = vmatpush1.msra.mxu0 0.0
    %733 = vmatprep.subr.mxu0 0.0
    %734 = vmatpush1.msra.mxu0 0.0
    %735 = vmatprep.mubr.f32.mxu0 0.0
    %736 = vmatmul.mubr.f32.gmra.mrb[0].mxu0 %v535
    %v737 = vpop.f32.mrb[0].mxu0
    %v738 = vadd.f32 0.0, %v737
    %v739 = vpop.f32.mrb[0].mxu0
    %v740 = vadd.f32 0.0, %v739
    %741 = vdwg.mxu0
    %742 = vmatprep.subr.mxu0 %v232
    %743 = vmatpush1.msra.mxu0 %v231
    %744 = vmatprep.subr.mxu0 %v236
    %745 = vmatpush1.msra.mxu0 %v235
    %746 = vmatprep.subr.mxu0 %v240
    %747 = vmatpush1.msra.mxu0 %v239
    %748 = vmatprep.subr.mxu0 %v244
    %749 = vmatpush1.msra.mxu0 %v243
    %750 = vmatprep.subr.mxu0 %v248
    %751 = vmatpush1.msra.mxu0 %v247
    %752 = vmatprep.subr.mxu0 %v252
    %753 = vmatpush1.msra.mxu0 %v251
    %754 = vmatprep.subr.mxu0 %v256
    %755 = vmatpush1.msra.mxu0 %v255
    %756 = vmatprep.subr.mxu0 %v260
    %757 = vmatpush1.msra.mxu0 %v259
    %758 = vmatprep.subr.mxu0 %v264
    %759 = vmatpush1.msra.mxu0 %v263
    %760 = vmatprep.subr.mxu0 %v268
    %761 = vmatpush1.msra.mxu0 %v267
    %762 = vmatprep.subr.mxu0 %v272
    %763 = vmatpush1.msra.mxu0 %v271
    %764 = vmatprep.subr.mxu0 %v276
    %765 = vmatpush1.msra.mxu0 %v275
    %766 = vmatprep.subr.mxu0 %v280
    %767 = vmatpush1.msra.mxu0 %v279
    %768 = vmatprep.subr.mxu0 %v284
    %769 = vmatpush1.msra.mxu0 %v283
    %770 = vmatprep.subr.mxu0 %v288
    %771 = vmatpush1.msra.mxu0 %v287
    %772 = vmatprep.subr.mxu0 %v292
    %773 = vmatpush1.msra.mxu0 %v291
    %774 = vmatprep.subr.mxu0 0.0
    %775 = vmatpush1.msra.mxu0 0.0
    %776 = vmatprep.subr.mxu0 0.0
    %777 = vmatpush1.msra.mxu0 0.0
    %778 = vmatprep.subr.mxu0 0.0
    %779 = vmatpush1.msra.mxu0 0.0
    %780 = vmatprep.subr.mxu0 0.0
    %781 = vmatpush1.msra.mxu0 0.0
    %782 = vmatprep.subr.mxu0 0.0
    %783 = vmatpush1.msra.mxu0 0.0
    %784 = vmatprep.subr.mxu0 0.0
    %785 = vmatpush1.msra.mxu0 0.0
    %786 = vmatprep.subr.mxu0 0.0
    %787 = vmatpush1.msra.mxu0 0.0
    %788 = vmatprep.subr.mxu0 0.0
    %789 = vmatpush1.msra.mxu0 0.0
    %790 = vmatprep.subr.mxu0 0.0
    %791 = vmatpush1.msra.mxu0 0.0
    %792 = vmatprep.subr.mxu0 0.0
    %793 = vmatpush1.msra.mxu0 0.0
    %794 = vmatprep.subr.mxu0 0.0
    %795 = vmatpush1.msra.mxu0 0.0
    %796 = vmatprep.subr.mxu0 0.0
    %797 = vmatpush1.msra.mxu0 0.0
    %798 = vmatprep.subr.mxu0 0.0
    %799 = vmatpush1.msra.mxu0 0.0
    %800 = vmatprep.subr.mxu0 0.0
    %801 = vmatpush1.msra.mxu0 0.0
    %802 = vmatprep.subr.mxu0 0.0
    %803 = vmatpush1.msra.mxu0 0.0
    %804 = vmatprep.subr.mxu0 0.0
    %805 = vmatpush1.msra.mxu0 0.0
    %806 = vmatprep.mubr.f32.mxu0 0.0
    %807 = vmatmul.mubr.f32.gmra.mrb[0].mxu0 0.0
    %v808 = vpop.f32.mrb[0].mxu0
    %v809 = vadd.f32 %v667, %v808
    %v810 = vpop.f32.mrb[0].mxu0
    %v811 = vadd.f32 %v669, %v810
    %812 = vdwg.mxu0
    %813 = vmatprep.subr.mxu0 %v234
    %814 = vmatpush1.msra.mxu0 %v233
    %815 = vmatprep.subr.mxu0 %v238
    %816 = vmatpush1.msra.mxu0 %v237
    %817 = vmatprep.subr.mxu0 %v242
    %818 = vmatpush1.msra.mxu0 %v241
    %819 = vmatprep.subr.mxu0 %v246
    %820 = vmatpush1.msra.mxu0 %v245
    %821 = vmatprep.subr.mxu0 %v250
    %822 = vmatpush1.msra.mxu0 %v249
    %823 = vmatprep.subr.mxu0 %v254
    %824 = vmatpush1.msra.mxu0 %v253
    %825 = vmatprep.subr.mxu0 %v258
    %826 = vmatpush1.msra.mxu0 %v257
    %827 = vmatprep.subr.mxu0 %v262
    %828 = vmatpush1.msra.mxu0 %v261
    %829 = vmatprep.subr.mxu0 %v266
    %830 = vmatpush1.msra.mxu0 %v265
    %831 = vmatprep.subr.mxu0 %v270
    %832 = vmatpush1.msra.mxu0 %v269
    %833 = vmatprep.subr.mxu0 %v274
    %834 = vmatpush1.msra.mxu0 %v273
    %835 = vmatprep.subr.mxu0 %v278
    %836 = vmatpush1.msra.mxu0 %v277
    %837 = vmatprep.subr.mxu0 %v282
    %838 = vmatpush1.msra.mxu0 %v281
    %839 = vmatprep.subr.mxu0 %v286
    %840 = vmatpush1.msra.mxu0 %v285
    %841 = vmatprep.subr.mxu0 %v290
    %842 = vmatpush1.msra.mxu0 %v289
    %843 = vmatprep.subr.mxu0 %v294
    %844 = vmatpush1.msra.mxu0 %v293
    %845 = vmatprep.subr.mxu0 0.0
    %846 = vmatpush1.msra.mxu0 0.0
    %847 = vmatprep.subr.mxu0 0.0
    %848 = vmatpush1.msra.mxu0 0.0
    %849 = vmatprep.subr.mxu0 0.0
    %850 = vmatpush1.msra.mxu0 0.0
    %851 = vmatprep.subr.mxu0 0.0
    %852 = vmatpush1.msra.mxu0 0.0
    %853 = vmatprep.subr.mxu0 0.0
    %854 = vmatpush1.msra.mxu0 0.0
    %855 = vmatprep.subr.mxu0 0.0
    %856 = vmatpush1.msra.mxu0 0.0
    %857 = vmatprep.subr.mxu0 0.0
    %858 = vmatpush1.msra.mxu0 0.0
    %859 = vmatprep.subr.mxu0 0.0
    %860 = vmatpush1.msra.mxu0 0.0
    %861 = vmatprep.subr.mxu0 0.0
    %862 = vmatpush1.msra.mxu0 0.0
    %863 = vmatprep.subr.mxu0 0.0
    %864 = vmatpush1.msra.mxu0 0.0
    %865 = vmatprep.subr.mxu0 0.0
    %866 = vmatpush1.msra.mxu0 0.0
    %867 = vmatprep.subr.mxu0 0.0
    %868 = vmatpush1.msra.mxu0 0.0
    %869 = vmatprep.subr.mxu0 0.0
    %870 = vmatpush1.msra.mxu0 0.0
    %871 = vmatprep.subr.mxu0 0.0
    %872 = vmatpush1.msra.mxu0 0.0
    %873 = vmatprep.subr.mxu0 0.0
    %874 = vmatpush1.msra.mxu0 0.0
    %875 = vmatprep.subr.mxu0 0.0
    %876 = vmatpush1.msra.mxu0 0.0
    %877 = vmatprep.mubr.f32.mxu0 0.0
    %878 = vmatmul.mubr.f32.gmra.mrb[0].mxu0 0.0
    %v879 = vpop.f32.mrb[0].mxu0
    %v880 = vadd.f32 %v738, %v879
    %v881 = vpop.f32.mrb[0].mxu0
    %v882 = vadd.f32 %v740, %v881
    %883 = vdwg.mxu0
    %v884 = vld [vmem:[%s6] sm:$0xf]
    %v886 = vlaneseq
    %v887 = vshrl.u32 %v886, 7
    %v888 = vsub.s32 0, %v887
    %v889 = vrot.slane %v884, %v888
    %v890 = vlaneseq
    %v891 = vshrl.u32 %v890, 7
    %v892 = vsub.s32 1, %v891
    %v893 = vrot.slane %v884, %v892
    %v894 = vlaneseq
    %v895 = vshrl.u32 %v894, 7
    %v896 = vsub.s32 2, %v895
    %v897 = vrot.slane %v884, %v896
    %v898 = vlaneseq
    %v899 = vshrl.u32 %v898, 7
    %v900 = vsub.s32 3, %v899
    %v901 = vrot.slane %v884, %v900
    %v906 = vadd.f32 %v809, %v889
    %v907 = vadd.f32 %v811, %v893
    %v908 = vadd.f32 %v880, %v897
    %v909 = vadd.f32 %v882, %v901
    %v910 = vxor.u32 %v906, 2147483648
    %v911 = vxor.u32 %v907, 2147483648
    %v912 = vxor.u32 %v908, 2147483648
    %v913 = vxor.u32 %v909, 2147483648
    %v914 = vmul.f32 %v910, 1.442695
    %v915 = vpow.pop %v914
    %v916 = vmul.f32 %v911, 1.442695
    %v917 = vpow.pop %v916
    %v918 = vmul.f32 %v912, 1.442695
    %v919 = vpow.pop %v918
    %v920 = vmul.f32 %v913, 1.442695
    %v921 = vpow.pop %v920
    %v922 = vadd.f32 %v915, 1.0
    %v923 = vadd.f32 %v917, 1.0
    %v924 = vadd.f32 %v919, 1.0
    %v925 = vadd.f32 %v921, 1.0
    %v926 = vrcp.pop %v922
    %v927 = vmul.f32 1.0, %v926
    %v928 = vrcp.pop %v923
    %v929 = vmul.f32 1.0, %v928
    %v930 = vrcp.pop %v924
    %v931 = vmul.f32 1.0, %v930
    %v932 = vrcp.pop %v925
    %v933 = vmul.f32 1.0, %v932
    %v934 = vmul.f32 %v931, 2.0
    %v935 = vsub.f32 %v934, 1.0
    %v936 = vmul.f32 %v929, 0.0
    %v937 = vmul.f32 %v927, %v935
    %v938 = vadd.f32 %v936, %v937
    %v939 = vtanh.pop %v938
    %v940 = vmul.f32 %v933, %v939
    %941 = vmatprep.subr.mxu0 %v296
    %942 = vmatpush1.msra.mxu0 %v295
    %943 = vmatprep.subr.mxu0 %v300
    %944 = vmatpush1.msra.mxu0 %v299
    %945 = vmatprep.subr.mxu0 %v304
    %946 = vmatpush1.msra.mxu0 %v303
    %947 = vmatprep.subr.mxu0 %v308
    %948 = vmatpush1.msra.mxu0 %v307
    %949 = vmatprep.subr.mxu0 %v312
    %950 = vmatpush1.msra.mxu0 %v311
    %951 = vmatprep.subr.mxu0 %v316
    %952 = vmatpush1.msra.mxu0 %v315
    %953 = vmatprep.subr.mxu0 %v320
    %954 = vmatpush1.msra.mxu0 %v319
    %955 = vmatprep.subr.mxu0 %v324
    %956 = vmatpush1.msra.mxu0 %v323
    %957 = vmatprep.subr.mxu0 %v328
    %958 = vmatpush1.msra.mxu0 %v327
    %959 = vmatprep.subr.mxu0 %v332
    %960 = vmatpush1.msra.mxu0 %v331
    %961 = vmatprep.subr.mxu0 %v336
    %962 = vmatpush1.msra.mxu0 %v335
    %963 = vmatprep.subr.mxu0 %v340
    %964 = vmatpush1.msra.mxu0 %v339
    %965 = vmatprep.subr.mxu0 %v344
    %966 = vmatpush1.msra.mxu0 %v343
    %967 = vmatprep.subr.mxu0 %v348
    %968 = vmatpush1.msra.mxu0 %v347
    %969 = vmatprep.subr.mxu0 %v352
    %970 = vmatpush1.msra.mxu0 %v351
    %971 = vmatprep.subr.mxu0 %v356
    %972 = vmatpush1.msra.mxu0 %v355
    %973 = vmatprep.subr.mxu0 0.0
    %974 = vmatpush1.msra.mxu0 0.0
    %975 = vmatprep.subr.mxu0 0.0
    %976 = vmatpush1.msra.mxu0 0.0
    %977 = vmatprep.subr.mxu0 0.0
    %978 = vmatpush1.msra.mxu0 0.0
    %979 = vmatprep.subr.mxu0 0.0
    %980 = vmatpush1.msra.mxu0 0.0
    %981 = vmatprep.subr.mxu0 0.0
    %982 = vmatpush1.msra.mxu0 0.0
    %983 = vmatprep.subr.mxu0 0.0
    %984 = vmatpush1.msra.mxu0 0.0
    %985 = vmatprep.subr.mxu0 0.0
    %986 = vmatpush1.msra.mxu0 0.0
    %987 = vmatprep.subr.mxu0 0.0
    %988 = vmatpush1.msra.mxu0 0.0
    %989 = vmatprep.subr.mxu0 0.0
    %990 = vmatpush1.msra.mxu0 0.0
    %991 = vmatprep.subr.mxu0 0.0
    %992 = vmatpush1.msra.mxu0 0.0
    %993 = vmatprep.subr.mxu0 0.0
    %994 = vmatpush1.msra.mxu0 0.0
    %995 = vmatprep.subr.mxu0 0.0
    %996 = vmatpush1.msra.mxu0 0.0
    %997 = vmatprep.subr.mxu0 0.0
    %998 = vmatpush1.msra.mxu0 0.0
    %999 = vmatprep.subr.mxu0 0.0
    %1000 = vmatpush1.msra.mxu0 0.0
    %1001 = vmatprep.subr.mxu0 0.0
    %1002 = vmatpush1.msra.mxu0 0.0
    %1003 = vmatprep.subr.mxu0 0.0
    %1004 = vmatpush1.msra.mxu0 0.0
    %1005 = vmatprep.mubr.f32.mxu0 0.0
    %1006 = vmatmul.mubr.f32.gmra.mrb[0].mxu0 %v535
    %v1007 = vpop.f32.mrb[0].mxu0
    %v1008 = vadd.f32 0.0, %v1007
    %v1009 = vpop.f32.mrb[0].mxu0
    %v1010 = vadd.f32 0.0, %v1009
    %1011 = vdwg.mxu0
    %1012 = vmatprep.subr.mxu0 %v298
    %1013 = vmatpush1.msra.mxu0 %v297
    %1014 = vmatprep.subr.mxu0 %v302
    %1015 = vmatpush1.msra.mxu0 %v301
    %1016 = vmatprep.subr.mxu0 %v306
    %1017 = vmatpush1.msra.mxu0 %v305
    %1018 = vmatprep.subr.mxu0 %v310
    %1019 = vmatpush1.msra.mxu0 %v309
    %1020 = vmatprep.subr.mxu0 %v314
    %1021 = vmatpush1.msra.mxu0 %v313
    %1022 = vmatprep.subr.mxu0 %v318
    %1023 = vmatpush1.msra.mxu0 %v317
    %1024 = vmatprep.subr.mxu0 %v322
    %1025 = vmatpush1.msra.mxu0 %v321
    %1026 = vmatprep.subr.mxu0 %v326
    %1027 = vmatpush1.msra.mxu0 %v325
    %1028 = vmatprep.subr.mxu0 %v330
    %1029 = vmatpush1.msra.mxu0 %v329
    %1030 = vmatprep.subr.mxu0 %v334
    %1031 = vmatpush1.msra.mxu0 %v333
    %1032 = vmatprep.subr.mxu0 %v338
    %1033 = vmatpush1.msra.mxu0 %v337
    %1034 = vmatprep.subr.mxu0 %v342
    %1035 = vmatpush1.msra.mxu0 %v341
    %1036 = vmatprep.subr.mxu0 %v346
    %1037 = vmatpush1.msra.mxu0 %v345
    %1038 = vmatprep.subr.mxu0 %v350
    %1039 = vmatpush1.msra.mxu0 %v349
    %1040 = vmatprep.subr.mxu0 %v354
    %1041 = vmatpush1.msra.mxu0 %v353
    %1042 = vmatprep.subr.mxu0 %v358
    %1043 = vmatpush1.msra.mxu0 %v357
    %1044 = vmatprep.subr.mxu0 0.0
    %1045 = vmatpush1.msra.mxu0 0.0
    %1046 = vmatprep.subr.mxu0 0.0
    %1047 = vmatpush1.msra.mxu0 0.0
    %1048 = vmatprep.subr.mxu0 0.0
    %1049 = vmatpush1.msra.mxu0 0.0
    %1050 = vmatprep.subr.mxu0 0.0
    %1051 = vmatpush1.msra.mxu0 0.0
    %1052 = vmatprep.subr.mxu0 0.0
    %1053 = vmatpush1.msra.mxu0 0.0
    %1054 = vmatprep.subr.mxu0 0.0
    %1055 = vmatpush1.msra.mxu0 0.0
    %1056 = vmatprep.subr.mxu0 0.0
    %1057 = vmatpush1.msra.mxu0 0.0
    %1058 = vmatprep.subr.mxu0 0.0
    %1059 = vmatpush1.msra.mxu0 0.0
    %1060 = vmatprep.subr.mxu0 0.0
    %1061 = vmatpush1.msra.mxu0 0.0
    %1062 = vmatprep.subr.mxu0 0.0
    %1063 = vmatpush1.msra.mxu0 0.0
    %1064 = vmatprep.subr.mxu0 0.0
    %1065 = vmatpush1.msra.mxu0 0.0
    %1066 = vmatprep.subr.mxu0 0.0
    %1067 = vmatpush1.msra.mxu0 0.0
    %1068 = vmatprep.subr.mxu0 0.0
    %1069 = vmatpush1.msra.mxu0 0.0
    %1070 = vmatprep.subr.mxu0 0.0
    %1071 = vmatpush1.msra.mxu0 0.0
    %1072 = vmatprep.subr.mxu0 0.0
    %1073 = vmatpush1.msra.mxu0 0.0
    %1074 = vmatprep.subr.mxu0 0.0
    %1075 = vmatpush1.msra.mxu0 0.0
    %1076 = vmatprep.mubr.f32.mxu0 0.0
    %1077 = vmatmul.mubr.f32.gmra.mrb[0].mxu0 %v535
    %v1078 = vpop.f32.mrb[0].mxu0
    %v1079 = vadd.f32 0.0, %v1078
    %v1080 = vpop.f32.mrb[0].mxu0
    %v1081 = vadd.f32 0.0, %v1080
    %1082 = vdwg.mxu0
    %v1083 = vadd.f32 %v203, %v1008
    %v1084 = vadd.f32 %v204, %v1010
    %v1085 = vadd.f32 %v205, %v1079
    %v1086 = vadd.f32 %v206, %v1081
    %v1087 = vxor.u32 %v1083, 2147483648
    %v1088 = vxor.u32 %v1084, 2147483648
    %v1089 = vxor.u32 %v1085, 2147483648
    %v1090 = vxor.u32 %v1086, 2147483648
    %v1091 = vmul.f32 %v1087, 1.442695
    %v1092 = vpow.pop %v1091
    %v1093 = vmul.f32 %v1088, 1.442695
    %v1094 = vpow.pop %v1093
    %v1095 = vmul.f32 %v1089, 1.442695
    %v1096 = vpow.pop %v1095
    %v1097 = vmul.f32 %v1090, 1.442695
    %v1098 = vpow.pop %v1097
    %v1099 = vadd.f32 %v1092, 1.0
    %v1100 = vadd.f32 %v1094, 1.0
    %v1101 = vadd.f32 %v1096, 1.0
    %v1102 = vadd.f32 %v1098, 1.0
    %v1103 = vrcp.pop %v1099
    %v1104 = vmul.f32 1.0, %v1103
    %v1105 = vrcp.pop %v1100
    %v1106 = vmul.f32 1.0, %v1105
    %v1107 = vrcp.pop %v1101
    %v1108 = vmul.f32 1.0, %v1107
    %v1109 = vrcp.pop %v1102
    %v1110 = vmul.f32 1.0, %v1109
    %v1111 = vmul.f32 %v1108, 2.0
    %v1112 = vsub.f32 %v1111, 1.0
    %v1113 = vmul.f32 %v1106, %v533
    %v1114 = vmul.f32 %v1104, %v1112
    %v1115 = vadd.f32 %v1113, %v1114
    %v1116 = vtanh.pop %v1115
    %v1117 = vmul.f32 %v1110, %v1116
    %1118 = vmatprep.subr.mxu0 %v537
    %1119 = vmatpush1.msra.mxu0 %v536
    %1120 = vmatprep.subr.mxu0 %v541
    %1121 = vmatpush1.msra.mxu0 %v540
    %1122 = vmatprep.subr.mxu0 %v545
    %1123 = vmatpush1.msra.mxu0 %v544
    %1124 = vmatprep.subr.mxu0 %v549
    %1125 = vmatpush1.msra.mxu0 %v548
    %1126 = vmatprep.subr.mxu0 %v553
    %1127 = vmatpush1.msra.mxu0 %v552
    %1128 = vmatprep.subr.mxu0 %v557
    %1129 = vmatpush1.msra.mxu0 %v556
    %1130 = vmatprep.subr.mxu0 %v561
    %1131 = vmatpush1.msra.mxu0 %v560
    %1132 = vmatprep.subr.mxu0 %v565
    %1133 = vmatpush1.msra.mxu0 %v564
    %1134 = vmatprep.subr.mxu0 %v569
    %1135 = vmatpush1.msra.mxu0 %v568
    %1136 = vmatprep.subr.mxu0 %v573
    %1137 = vmatpush1.msra.mxu0 %v572
    %1138 = vmatprep.subr.mxu0 %v577
    %1139 = vmatpush1.msra.mxu0 %v576
    %1140 = vmatprep.subr.mxu0 %v581
    %1141 = vmatpush1.msra.mxu0 %v580
    %1142 = vmatprep.subr.mxu0 %v585
    %1143 = vmatpush1.msra.mxu0 %v584
    %1144 = vmatprep.subr.mxu0 %v589
    %1145 = vmatpush1.msra.mxu0 %v588
    %1146 = vmatprep.subr.mxu0 %v593
    %1147 = vmatpush1.msra.mxu0 %v592
    %1148 = vmatprep.subr.mxu0 %v597
    %1149 = vmatpush1.msra.mxu0 %v596
    %1150 = vmatprep.subr.mxu0 0.0
    %1151 = vmatpush1.msra.mxu0 0.0
    %1152 = vmatprep.subr.mxu0 0.0
    %1153 = vmatpush1.msra.mxu0 0.0
    %1154 = vmatprep.subr.mxu0 0.0
    %1155 = vmatpush1.msra.mxu0 0.0
    %1156 = vmatprep.subr.mxu0 0.0
    %1157 = vmatpush1.msra.mxu0 0.0
    %1158 = vmatprep.subr.mxu0 0.0
    %1159 = vmatpush1.msra.mxu0 0.0
    %1160 = vmatprep.subr.mxu0 0.0
    %1161 = vmatpush1.msra.mxu0 0.0
    %1162 = vmatprep.subr.mxu0 0.0
    %1163 = vmatpush1.msra.mxu0 0.0
    %1164 = vmatprep.subr.mxu0 0.0
    %1165 = vmatpush1.msra.mxu0 0.0
    %1166 = vmatprep.subr.mxu0 0.0
    %1167 = vmatpush1.msra.mxu0 0.0
    %1168 = vmatprep.subr.mxu0 0.0
    %1169 = vmatpush1.msra.mxu0 0.0
    %1170 = vmatprep.subr.mxu0 0.0
    %1171 = vmatpush1.msra.mxu0 0.0
    %1172 = vmatprep.subr.mxu0 0.0
    %1173 = vmatpush1.msra.mxu0 0.0
    %1174 = vmatprep.subr.mxu0 0.0
    %1175 = vmatpush1.msra.mxu0 0.0
    %1176 = vmatprep.subr.mxu0 0.0
    %1177 = vmatpush1.msra.mxu0 0.0
    %1178 = vmatprep.subr.mxu0 0.0
    %1179 = vmatpush1.msra.mxu0 0.0
    %1180 = vmatprep.subr.mxu0 0.0
    %1181 = vmatpush1.msra.mxu0 0.0
    %1182 = vmatprep.mubr.f32.mxu0 0.0
    %1183 = vmatmul.mubr.f32.gmra.mrb[0].mxu0 %v1117
    %v1184 = vpop.f32.mrb[0].mxu0
    %v1185 = vadd.f32 0.0, %v1184
    %v1186 = vpop.f32.mrb[0].mxu0
    %v1187 = vadd.f32 0.0, %v1186
    %1188 = vdwg.mxu0
    %1189 = vmatprep.subr.mxu0 %v539
    %1190 = vmatpush1.msra.mxu0 %v538
    %1191 = vmatprep.subr.mxu0 %v543
    %1192 = vmatpush1.msra.mxu0 %v542
    %1193 = vmatprep.subr.mxu0 %v547
    %1194 = vmatpush1.msra.mxu0 %v546
    %1195 = vmatprep.subr.mxu0 %v551
    %1196 = vmatpush1.msra.mxu0 %v550
    %1197 = vmatprep.subr.mxu0 %v555
    %1198 = vmatpush1.msra.mxu0 %v554
    %1199 = vmatprep.subr.mxu0 %v559
    %1200 = vmatpush1.msra.mxu0 %v558
    %1201 = vmatprep.subr.mxu0 %v563
    %1202 = vmatpush1.msra.mxu0 %v562
    %1203 = vmatprep.subr.mxu0 %v567
    %1204 = vmatpush1.msra.mxu0 %v566
    %1205 = vmatprep.subr.mxu0 %v571
    %1206 = vmatpush1.msra.mxu0 %v570
    %1207 = vmatprep.subr.mxu0 %v575
    %1208 = vmatpush1.msra.mxu0 %v574
    %1209 = vmatprep.subr.mxu0 %v579
    %1210 = vmatpush1.msra.mxu0 %v578
    %1211 = vmatprep.subr.mxu0 %v583
    %1212 = vmatpush1.msra.mxu0 %v582
    %1213 = vmatprep.subr.mxu0 %v587
    %1214 = vmatpush1.msra.mxu0 %v586
    %1215 = vmatprep.subr.mxu0 %v591
    %1216 = vmatpush1.msra.mxu0 %v590
    %1217 = vmatprep.subr.mxu0 %v595
    %1218 = vmatpush1.msra.mxu0 %v594
    %1219 = vmatprep.subr.mxu0 %v599
    %1220 = vmatpush1.msra.mxu0 %v598
    %1221 = vmatprep.subr.mxu0 0.0
    %1222 = vmatpush1.msra.mxu0 0.0
    %1223 = vmatprep.subr.mxu0 0.0
    %1224 = vmatpush1.msra.mxu0 0.0
    %1225 = vmatprep.subr.mxu0 0.0
    %1226 = vmatpush1.msra.mxu0 0.0
    %1227 = vmatprep.subr.mxu0 0.0
    %1228 = vmatpush1.msra.mxu0 0.0
    %1229 = vmatprep.subr.mxu0 0.0
    %1230 = vmatpush1.msra.mxu0 0.0
    %1231 = vmatprep.subr.mxu0 0.0
    %1232 = vmatpush1.msra.mxu0 0.0
    %1233 = vmatprep.subr.mxu0 0.0
    %1234 = vmatpush1.msra.mxu0 0.0
    %1235 = vmatprep.subr.mxu0 0.0
    %1236 = vmatpush1.msra.mxu0 0.0
    %1237 = vmatprep.subr.mxu0 0.0
    %1238 = vmatpush1.msra.mxu0 0.0
    %1239 = vmatprep.subr.mxu0 0.0
    %1240 = vmatpush1.msra.mxu0 0.0
    %1241 = vmatprep.subr.mxu0 0.0
    %1242 = vmatpush1.msra.mxu0 0.0
    %1243 = vmatprep.subr.mxu0 0.0
    %1244 = vmatpush1.msra.mxu0 0.0
    %1245 = vmatprep.subr.mxu0 0.0
    %1246 = vmatpush1.msra.mxu0 0.0
    %1247 = vmatprep.subr.mxu0 0.0
    %1248 = vmatpush1.msra.mxu0 0.0
    %1249 = vmatprep.subr.mxu0 0.0
    %1250 = vmatpush1.msra.mxu0 0.0
    %1251 = vmatprep.subr.mxu0 0.0
    %1252 = vmatpush1.msra.mxu0 0.0
    %1253 = vmatprep.mubr.f32.mxu0 0.0
    %1254 = vmatmul.mubr.f32.gmra.mrb[0].mxu0 %v1117
    %v1255 = vpop.f32.mrb[0].mxu0
    %v1256 = vadd.f32 0.0, %v1255
    %v1257 = vpop.f32.mrb[0].mxu0
    %v1258 = vadd.f32 0.0, %v1257
    %1259 = vdwg.mxu0
    %1260 = vmatprep.subr.mxu0 %v232
    %1261 = vmatpush1.msra.mxu0 %v231
    %1262 = vmatprep.subr.mxu0 %v236
    %1263 = vmatpush1.msra.mxu0 %v235
    %1264 = vmatprep.subr.mxu0 %v240
    %1265 = vmatpush1.msra.mxu0 %v239
    %1266 = vmatprep.subr.mxu0 %v244
    %1267 = vmatpush1.msra.mxu0 %v243
    %1268 = vmatprep.subr.mxu0 %v248
    %1269 = vmatpush1.msra.mxu0 %v247
    %1270 = vmatprep.subr.mxu0 %v252
    %1271 = vmatpush1.msra.mxu0 %v251
    %1272 = vmatprep.subr.mxu0 %v256
    %1273 = vmatpush1.msra.mxu0 %v255
    %1274 = vmatprep.subr.mxu0 %v260
    %1275 = vmatpush1.msra.mxu0 %v259
    %1276 = vmatprep.subr.mxu0 %v264
    %1277 = vmatpush1.msra.mxu0 %v263
    %1278 = vmatprep.subr.mxu0 %v268
    %1279 = vmatpush1.msra.mxu0 %v267
    %1280 = vmatprep.subr.mxu0 %v272
    %1281 = vmatpush1.msra.mxu0 %v271
    %1282 = vmatprep.subr.mxu0 %v276
    %1283 = vmatpush1.msra.mxu0 %v275
    %1284 = vmatprep.subr.mxu0 %v280
    %1285 = vmatpush1.msra.mxu0 %v279
    %1286 = vmatprep.subr.mxu0 %v284
    %1287 = vmatpush1.msra.mxu0 %v283
    %1288 = vmatprep.subr.mxu0 %v288
    %1289 = vmatpush1.msra.mxu0 %v287
    %1290 = vmatprep.subr.mxu0 %v292
    %1291 = vmatpush1.msra.mxu0 %v291
    %1292 = vmatprep.subr.mxu0 0.0
    %1293 = vmatpush1.msra.mxu0 0.0
    %1294 = vmatprep.subr.mxu0 0.0
    %1295 = vmatpush1.msra.mxu0 0.0
    %1296 = vmatprep.subr.mxu0 0.0
    %1297 = vmatpush1.msra.mxu0 0.0
    %1298 = vmatprep.subr.mxu0 0.0
    %1299 = vmatpush1.msra.mxu0 0.0
    %1300 = vmatprep.subr.mxu0 0.0
    %1301 = vmatpush1.msra.mxu0 0.0
    %1302 = vmatprep.subr.mxu0 0.0
    %1303 = vmatpush1.msra.mxu0 0.0
    %1304 = vmatprep.subr.mxu0 0.0
    %1305 = vmatpush1.msra.mxu0 0.0
    %1306 = vmatprep.subr.mxu0 0.0
    %1307 = vmatpush1.msra.mxu0 0.0
    %1308 = vmatprep.subr.mxu0 0.0
    %1309 = vmatpush1.msra.mxu0 0.0
    %1310 = vmatprep.subr.mxu0 0.0
    %1311 = vmatpush1.msra.mxu0 0.0
    %1312 = vmatprep.subr.mxu0 0.0
    %1313 = vmatpush1.msra.mxu0 0.0
    %1314 = vmatprep.subr.mxu0 0.0
    %1315 = vmatpush1.msra.mxu0 0.0
    %1316 = vmatprep.subr.mxu0 0.0
    %1317 = vmatpush1.msra.mxu0 0.0
    %1318 = vmatprep.subr.mxu0 0.0
    %1319 = vmatpush1.msra.mxu0 0.0
    %1320 = vmatprep.subr.mxu0 0.0
    %1321 = vmatpush1.msra.mxu0 0.0
    %1322 = vmatprep.subr.mxu0 0.0
    %1323 = vmatpush1.msra.mxu0 0.0
    %1324 = vmatprep.mubr.f32.mxu0 0.0
    %1325 = vmatmul.mubr.f32.gmra.mrb[0].mxu0 %v940
    %v1326 = vpop.f32.mrb[0].mxu0
    %v1327 = vadd.f32 %v1185, %v1326
    %v1328 = vpop.f32.mrb[0].mxu0
    %v1329 = vadd.f32 %v1187, %v1328
    %1330 = vdwg.mxu0
    %1331 = vmatprep.subr.mxu0 %v234
    %1332 = vmatpush1.msra.mxu0 %v233
    %1333 = vmatprep.subr.mxu0 %v238
    %1334 = vmatpush1.msra.mxu0 %v237
    %1335 = vmatprep.subr.mxu0 %v242
    %1336 = vmatpush1.msra.mxu0 %v241
    %1337 = vmatprep.subr.mxu0 %v246
    %1338 = vmatpush1.msra.mxu0 %v245
    %1339 = vmatprep.subr.mxu0 %v250
    %1340 = vmatpush1.msra.mxu0 %v249
    %1341 = vmatprep.subr.mxu0 %v254
    %1342 = vmatpush1.msra.mxu0 %v253
    %1343 = vmatprep.subr.mxu0 %v258
    %1344 = vmatpush1.msra.mxu0 %v257
    %1345 = vmatprep.subr.mxu0 %v262
    %1346 = vmatpush1.msra.mxu0 %v261
    %1347 = vmatprep.subr.mxu0 %v266
    %1348 = vmatpush1.msra.mxu0 %v265
    %1349 = vmatprep.subr.mxu0 %v270
    %1350 = vmatpush1.msra.mxu0 %v269
    %1351 = vmatprep.subr.mxu0 %v274
    %1352 = vmatpush1.msra.mxu0 %v273
    %1353 = vmatprep.subr.mxu0 %v278
    %1354 = vmatpush1.msra.mxu0 %v277
    %1355 = vmatprep.subr.mxu0 %v282
    %1356 = vmatpush1.msra.mxu0 %v281
    %1357 = vmatprep.subr.mxu0 %v286
    %1358 = vmatpush1.msra.mxu0 %v285
    %1359 = vmatprep.subr.mxu0 %v290
    %1360 = vmatpush1.msra.mxu0 %v289
    %1361 = vmatprep.subr.mxu0 %v294
    %1362 = vmatpush1.msra.mxu0 %v293
    %1363 = vmatprep.subr.mxu0 0.0
    %1364 = vmatpush1.msra.mxu0 0.0
    %1365 = vmatprep.subr.mxu0 0.0
    %1366 = vmatpush1.msra.mxu0 0.0
    %1367 = vmatprep.subr.mxu0 0.0
    %1368 = vmatpush1.msra.mxu0 0.0
    %1369 = vmatprep.subr.mxu0 0.0
    %1370 = vmatpush1.msra.mxu0 0.0
    %1371 = vmatprep.subr.mxu0 0.0
    %1372 = vmatpush1.msra.mxu0 0.0
    %1373 = vmatprep.subr.mxu0 0.0
    %1374 = vmatpush1.msra.mxu0 0.0
    %1375 = vmatprep.subr.mxu0 0.0
    %1376 = vmatpush1.msra.mxu0 0.0
    %1377 = vmatprep.subr.mxu0 0.0
    %1378 = vmatpush1.msra.mxu0 0.0
    %1379 = vmatprep.subr.mxu0 0.0
    %1380 = vmatpush1.msra.mxu0 0.0
    %1381 = vmatprep.subr.mxu0 0.0
    %1382 = vmatpush1.msra.mxu0 0.0
    %1383 = vmatprep.subr.mxu0 0.0
    %1384 = vmatpush1.msra.mxu0 0.0
    %1385 = vmatprep.subr.mxu0 0.0
    %1386 = vmatpush1.msra.mxu0 0.0
    %1387 = vmatprep.subr.mxu0 0.0
    %1388 = vmatpush1.msra.mxu0 0.0
    %1389 = vmatprep.subr.mxu0 0.0
    %1390 = vmatpush1.msra.mxu0 0.0
    %1391 = vmatprep.subr.mxu0 0.0
    %1392 = vmatpush1.msra.mxu0 0.0
    %1393 = vmatprep.subr.mxu0 0.0
    %1394 = vmatpush1.msra.mxu0 0.0
    %1395 = vmatprep.mubr.f32.mxu0 0.0
    %1396 = vmatmul.mubr.f32.gmra.mrb[0].mxu0 %v940
    %v1397 = vpop.f32.mrb[0].mxu0
    %v1398 = vadd.f32 %v1256, %v1397
    %v1399 = vpop.f32.mrb[0].mxu0
    %v1400 = vadd.f32 %v1258, %v1399
    %1401 = vdwg.mxu0
    %v1402 = vadd.f32 %v1327, %v889
    %v1403 = vadd.f32 %v1329, %v893
    %v1404 = vadd.f32 %v1398, %v897
    %v1405 = vadd.f32 %v1400, %v901
    %v1406 = vxor.u32 %v1402, 2147483648
    %v1407 = vxor.u32 %v1403, 2147483648
    %v1408 = vxor.u32 %v1404, 2147483648
    %v1409 = vxor.u32 %v1405, 2147483648
    %v1410 = vmul.f32 %v1406, 1.442695
    %v1411 = vpow.pop %v1410
    %v1412 = vmul.f32 %v1407, 1.442695
    %v1413 = vpow.pop %v1412
    %v1414 = vmul.f32 %v1408, 1.442695
    %v1415 = vpow.pop %v1414
    %v1416 = vmul.f32 %v1409, 1.442695
    %v1417 = vpow.pop %v1416
    %v1418 = vadd.f32 %v1411, 1.0
    %v1419 = vadd.f32 %v1413, 1.0
    %v1420 = vadd.f32 %v1415, 1.0
    %v1421 = vadd.f32 %v1417, 1.0
    %v1422 = vrcp.pop %v1418
    %v1423 = vmul.f32 1.0, %v1422
    %v1424 = vrcp.pop %v1419
    %v1425 = vmul.f32 1.0, %v1424
    %v1426 = vrcp.pop %v1420
    %v1427 = vmul.f32 1.0, %v1426
    %v1428 = vrcp.pop %v1421
    %v1429 = vmul.f32 1.0, %v1428
    %v1430 = vmul.f32 %v1427, 2.0
    %v1431 = vsub.f32 %v1430, 1.0
    %v1432 = vmul.f32 %v1425, %v938
    %v1433 = vmul.f32 %v1423, %v1431
    %v1434 = vadd.f32 %v1432, %v1433
    %v1435 = vtanh.pop %v1434
    %v1436 = vmul.f32 %v1429, %v1435
    %1437 = vmatprep.subr.mxu0 %v296
    %1438 = vmatpush1.msra.mxu0 %v295
    %1439 = vmatprep.subr.mxu0 %v300
    %1440 = vmatpush1.msra.mxu0 %v299
    %1441 = vmatprep.subr.mxu0 %v304
    %1442 = vmatpush1.msra.mxu0 %v303
    %1443 = vmatprep.subr.mxu0 %v308
    %1444 = vmatpush1.msra.mxu0 %v307
    %1445 = vmatprep.subr.mxu0 %v312
    %1446 = vmatpush1.msra.mxu0 %v311
    %1447 = vmatprep.subr.mxu0 %v316
    %1448 = vmatpush1.msra.mxu0 %v315
    %1449 = vmatprep.subr.mxu0 %v320
    %1450 = vmatpush1.msra.mxu0 %v319
    %1451 = vmatprep.subr.mxu0 %v324
    %1452 = vmatpush1.msra.mxu0 %v323
    %1453 = vmatprep.subr.mxu0 %v328
    %1454 = vmatpush1.msra.mxu0 %v327
    %1455 = vmatprep.subr.mxu0 %v332
    %1456 = vmatpush1.msra.mxu0 %v331
    %1457 = vmatprep.subr.mxu0 %v336
    %1458 = vmatpush1.msra.mxu0 %v335
    %1459 = vmatprep.subr.mxu0 %v340
    %1460 = vmatpush1.msra.mxu0 %v339
    %1461 = vmatprep.subr.mxu0 %v344
    %1462 = vmatpush1.msra.mxu0 %v343
    %1463 = vmatprep.subr.mxu0 %v348
    %1464 = vmatpush1.msra.mxu0 %v347
    %1465 = vmatprep.subr.mxu0 %v352
    %1466 = vmatpush1.msra.mxu0 %v351
    %1467 = vmatprep.subr.mxu0 %v356
    %1468 = vmatpush1.msra.mxu0 %v355
    %1469 = vmatprep.subr.mxu0 0.0
    %1470 = vmatpush1.msra.mxu0 0.0
    %1471 = vmatprep.subr.mxu0 0.0
    %1472 = vmatpush1.msra.mxu0 0.0
    %1473 = vmatprep.subr.mxu0 0.0
    %1474 = vmatpush1.msra.mxu0 0.0
    %1475 = vmatprep.subr.mxu0 0.0
    %1476 = vmatpush1.msra.mxu0 0.0
    %1477 = vmatprep.subr.mxu0 0.0
    %1478 = vmatpush1.msra.mxu0 0.0
    %1479 = vmatprep.subr.mxu0 0.0
    %1480 = vmatpush1.msra.mxu0 0.0
    %1481 = vmatprep.subr.mxu0 0.0
    %1482 = vmatpush1.msra.mxu0 0.0
    %1483 = vmatprep.subr.mxu0 0.0
    %1484 = vmatpush1.msra.mxu0 0.0
    %1485 = vmatprep.subr.mxu0 0.0
    %1486 = vmatpush1.msra.mxu0 0.0
    %1487 = vmatprep.subr.mxu0 0.0
    %1488 = vmatpush1.msra.mxu0 0.0
    %1489 = vmatprep.subr.mxu0 0.0
    %1490 = vmatpush1.msra.mxu0 0.0
    %1491 = vmatprep.subr.mxu0 0.0
    %1492 = vmatpush1.msra.mxu0 0.0
    %1493 = vmatprep.subr.mxu0 0.0
    %1494 = vmatpush1.msra.mxu0 0.0
    %1495 = vmatprep.subr.mxu0 0.0
    %1496 = vmatpush1.msra.mxu0 0.0
    %1497 = vmatprep.subr.mxu0 0.0
    %1498 = vmatpush1.msra.mxu0 0.0
    %1499 = vmatprep.subr.mxu0 0.0
    %1500 = vmatpush1.msra.mxu0 0.0
    %1501 = vmatprep.mubr.f32.mxu0 0.0
    %1502 = vmatmul.mubr.f32.gmra.mrb[0].mxu0 %v1117
    %v1503 = vpop.f32.mrb[0].mxu0
    %v1504 = vadd.f32 0.0, %v1503
    %v1505 = vpop.f32.mrb[0].mxu0
    %v1506 = vadd.f32 0.0, %v1505
    %1507 = vdwg.mxu0
    %1508 = vmatprep.subr.mxu0 %v298
    %1509 = vmatpush1.msra.mxu0 %v297
    %1510 = vmatprep.subr.mxu0 %v302
    %1511 = vmatpush1.msra.mxu0 %v301
    %1512 = vmatprep.subr.mxu0 %v306
    %1513 = vmatpush1.msra.mxu0 %v305
    %1514 = vmatprep.subr.mxu0 %v310
    %1515 = vmatpush1.msra.mxu0 %v309
    %1516 = vmatprep.subr.mxu0 %v314
    %1517 = vmatpush1.msra.mxu0 %v313
    %1518 = vmatprep.subr.mxu0 %v318
    %1519 = vmatpush1.msra.mxu0 %v317
    %1520 = vmatprep.subr.mxu0 %v322
    %1521 = vmatpush1.msra.mxu0 %v321
    %1522 = vmatprep.subr.mxu0 %v326
    %1523 = vmatpush1.msra.mxu0 %v325
    %1524 = vmatprep.subr.mxu0 %v330
    %1525 = vmatpush1.msra.mxu0 %v329
    %1526 = vmatprep.subr.mxu0 %v334
    %1527 = vmatpush1.msra.mxu0 %v333
    %1528 = vmatprep.subr.mxu0 %v338
    %1529 = vmatpush1.msra.mxu0 %v337
    %1530 = vmatprep.subr.mxu0 %v342
    %1531 = vmatpush1.msra.mxu0 %v341
    %1532 = vmatprep.subr.mxu0 %v346
    %1533 = vmatpush1.msra.mxu0 %v345
    %1534 = vmatprep.subr.mxu0 %v350
    %1535 = vmatpush1.msra.mxu0 %v349
    %1536 = vmatprep.subr.mxu0 %v354
    %1537 = vmatpush1.msra.mxu0 %v353
    %1538 = vmatprep.subr.mxu0 %v358
    %1539 = vmatpush1.msra.mxu0 %v357
    %1540 = vmatprep.subr.mxu0 0.0
    %1541 = vmatpush1.msra.mxu0 0.0
    %1542 = vmatprep.subr.mxu0 0.0
    %1543 = vmatpush1.msra.mxu0 0.0
    %1544 = vmatprep.subr.mxu0 0.0
    %1545 = vmatpush1.msra.mxu0 0.0
    %1546 = vmatprep.subr.mxu0 0.0
    %1547 = vmatpush1.msra.mxu0 0.0
    %1548 = vmatprep.subr.mxu0 0.0
    %1549 = vmatpush1.msra.mxu0 0.0
    %1550 = vmatprep.subr.mxu0 0.0
    %1551 = vmatpush1.msra.mxu0 0.0
    %1552 = vmatprep.subr.mxu0 0.0
    %1553 = vmatpush1.msra.mxu0 0.0
    %1554 = vmatprep.subr.mxu0 0.0
    %1555 = vmatpush1.msra.mxu0 0.0
    %1556 = vmatprep.subr.mxu0 0.0
    %1557 = vmatpush1.msra.mxu0 0.0
    %1558 = vmatprep.subr.mxu0 0.0
    %1559 = vmatpush1.msra.mxu0 0.0
    %1560 = vmatprep.subr.mxu0 0.0
    %1561 = vmatpush1.msra.mxu0 0.0
    %1562 = vmatprep.subr.mxu0 0.0
    %1563 = vmatpush1.msra.mxu0 0.0
    %1564 = vmatprep.subr.mxu0 0.0
    %1565 = vmatpush1.msra.mxu0 0.0
    %1566 = vmatprep.subr.mxu0 0.0
    %1567 = vmatpush1.msra.mxu0 0.0
    %1568 = vmatprep.subr.mxu0 0.0
    %1569 = vmatpush1.msra.mxu0 0.0
    %1570 = vmatprep.subr.mxu0 0.0
    %1571 = vmatpush1.msra.mxu0 0.0
    %1572 = vmatprep.mubr.f32.mxu0 0.0
    %1573 = vmatmul.mubr.f32.gmra.mrb[0].mxu0 %v1117
    %v1574 = vpop.f32.mrb[0].mxu0
    %v1575 = vadd.f32 0.0, %v1574
    %v1576 = vpop.f32.mrb[0].mxu0
    %v1577 = vadd.f32 0.0, %v1576
    %1578 = vdwg.mxu0
    %v1579 = vadd.f32 %v207, %v1504
    %v1580 = vadd.f32 %v208, %v1506
    %v1581 = vadd.f32 %v209, %v1575
    %v1582 = vadd.f32 %v210, %v1577
    %v1583 = vxor.u32 %v1579, 2147483648
    %v1584 = vxor.u32 %v1580, 2147483648
    %v1585 = vxor.u32 %v1581, 2147483648
    %v1586 = vxor.u32 %v1582, 2147483648
    %v1587 = vmul.f32 %v1583, 1.442695
    %v1588 = vpow.pop %v1587
    %v1589 = vmul.f32 %v1584, 1.442695
    %v1590 = vpow.pop %v1589
    %v1591 = vmul.f32 %v1585, 1.442695
    %v1592 = vpow.pop %v1591
    %v1593 = vmul.f32 %v1586, 1.442695
    %v1594 = vpow.pop %v1593
    %v1595 = vadd.f32 %v1588, 1.0
    %v1596 = vadd.f32 %v1590, 1.0
    %v1597 = vadd.f32 %v1592, 1.0
    %v1598 = vadd.f32 %v1594, 1.0
    %v1599 = vrcp.pop %v1595
    %v1600 = vmul.f32 1.0, %v1599
    %v1601 = vrcp.pop %v1596
    %v1602 = vmul.f32 1.0, %v1601
    %v1603 = vrcp.pop %v1597
    %v1604 = vmul.f32 1.0, %v1603
    %v1605 = vrcp.pop %v1598
    %v1606 = vmul.f32 1.0, %v1605
    %v1607 = vmul.f32 %v1604, 2.0
    %v1608 = vsub.f32 %v1607, 1.0
    %v1609 = vmul.f32 %v1602, %v1115
    %v1610 = vmul.f32 %v1600, %v1608
    %v1611 = vadd.f32 %v1609, %v1610
    %v1612 = vtanh.pop %v1611
    %v1613 = vmul.f32 %v1606, %v1612
    %1614 = vmatprep.subr.mxu0 %v537
    %1615 = vmatpush1.msra.mxu0 %v536
    %1616 = vmatprep.subr.mxu0 %v541
    %1617 = vmatpush1.msra.mxu0 %v540
    %1618 = vmatprep.subr.mxu0 %v545
    %1619 = vmatpush1.msra.mxu0 %v544
    %1620 = vmatprep.subr.mxu0 %v549
    %1621 = vmatpush1.msra.mxu0 %v548
    %1622 = vmatprep.subr.mxu0 %v553
    %1623 = vmatpush1.msra.mxu0 %v552
    %1624 = vmatprep.subr.mxu0 %v557
    %1625 = vmatpush1.msra.mxu0 %v556
    %1626 = vmatprep.subr.mxu0 %v561
    %1627 = vmatpush1.msra.mxu0 %v560
    %1628 = vmatprep.subr.mxu0 %v565
    %1629 = vmatpush1.msra.mxu0 %v564
    %1630 = vmatprep.subr.mxu0 %v569
    %1631 = vmatpush1.msra.mxu0 %v568
    %1632 = vmatprep.subr.mxu0 %v573
    %1633 = vmatpush1.msra.mxu0 %v572
    %1634 = vmatprep.subr.mxu0 %v577
    %1635 = vmatpush1.msra.mxu0 %v576
    %1636 = vmatprep.subr.mxu0 %v581
    %1637 = vmatpush1.msra.mxu0 %v580
    %1638 = vmatprep.subr.mxu0 %v585
    %1639 = vmatpush1.msra.mxu0 %v584
    %1640 = vmatprep.subr.mxu0 %v589
    %1641 = vmatpush1.msra.mxu0 %v588
    %1642 = vmatprep.subr.mxu0 %v593
    %1643 = vmatpush1.msra.mxu0 %v592
    %1644 = vmatprep.subr.mxu0 %v597
    %1645 = vmatpush1.msra.mxu0 %v596
    %1646 = vmatprep.subr.mxu0 0.0
    %1647 = vmatpush1.msra.mxu0 0.0
    %1648 = vmatprep.subr.mxu0 0.0
    %1649 = vmatpush1.msra.mxu0 0.0
    %1650 = vmatprep.subr.mxu0 0.0
    %1651 = vmatpush1.msra.mxu0 0.0
    %1652 = vmatprep.subr.mxu0 0.0
    %1653 = vmatpush1.msra.mxu0 0.0
    %1654 = vmatprep.subr.mxu0 0.0
    %1655 = vmatpush1.msra.mxu0 0.0
    %1656 = vmatprep.subr.mxu0 0.0
    %1657 = vmatpush1.msra.mxu0 0.0
    %1658 = vmatprep.subr.mxu0 0.0
    %1659 = vmatpush1.msra.mxu0 0.0
    %1660 = vmatprep.subr.mxu0 0.0
    %1661 = vmatpush1.msra.mxu0 0.0
    %1662 = vmatprep.subr.mxu0 0.0
    %1663 = vmatpush1.msra.mxu0 0.0
    %1664 = vmatprep.subr.mxu0 0.0
    %1665 = vmatpush1.msra.mxu0 0.0
    %1666 = vmatprep.subr.mxu0 0.0
    %1667 = vmatpush1.msra.mxu0 0.0
    %1668 = vmatprep.subr.mxu0 0.0
    %1669 = vmatpush1.msra.mxu0 0.0
    %1670 = vmatprep.subr.mxu0 0.0
    %1671 = vmatpush1.msra.mxu0 0.0
    %1672 = vmatprep.subr.mxu0 0.0
    %1673 = vmatpush1.msra.mxu0 0.0
    %1674 = vmatprep.subr.mxu0 0.0
    %1675 = vmatpush1.msra.mxu0 0.0
    %1676 = vmatprep.subr.mxu0 0.0
    %1677 = vmatpush1.msra.mxu0 0.0
    %1678 = vmatprep.mubr.f32.mxu0 0.0
    %1679 = vmatmul.mubr.f32.gmra.mrb[0].mxu0 %v1613
    %v1680 = vpop.f32.mrb[0].mxu0
    %v1681 = vadd.f32 0.0, %v1680
    %v1682 = vpop.f32.mrb[0].mxu0
    %v1683 = vadd.f32 0.0, %v1682
    %1684 = vdwg.mxu0
    %1685 = vmatprep.subr.mxu0 %v539
    %1686 = vmatpush1.msra.mxu0 %v538
    %1687 = vmatprep.subr.mxu0 %v543
    %1688 = vmatpush1.msra.mxu0 %v542
    %1689 = vmatprep.subr.mxu0 %v547
    %1690 = vmatpush1.msra.mxu0 %v546
    %1691 = vmatprep.subr.mxu0 %v551
    %1692 = vmatpush1.msra.mxu0 %v550
    %1693 = vmatprep.subr.mxu0 %v555
    %1694 = vmatpush1.msra.mxu0 %v554
    %1695 = vmatprep.subr.mxu0 %v559
    %1696 = vmatpush1.msra.mxu0 %v558
    %1697 = vmatprep.subr.mxu0 %v563
    %1698 = vmatpush1.msra.mxu0 %v562
    %1699 = vmatprep.subr.mxu0 %v567
    %1700 = vmatpush1.msra.mxu0 %v566
    %1701 = vmatprep.subr.mxu0 %v571
    %1702 = vmatpush1.msra.mxu0 %v570
    %1703 = vmatprep.subr.mxu0 %v575
    %1704 = vmatpush1.msra.mxu0 %v574
    %1705 = vmatprep.subr.mxu0 %v579
    %1706 = vmatpush1.msra.mxu0 %v578
    %1707 = vmatprep.subr.mxu0 %v583
    %1708 = vmatpush1.msra.mxu0 %v582
    %1709 = vmatprep.subr.mxu0 %v587
    %1710 = vmatpush1.msra.mxu0 %v586
    %1711 = vmatprep.subr.mxu0 %v591
    %1712 = vmatpush1.msra.mxu0 %v590
    %1713 = vmatprep.subr.mxu0 %v595
    %1714 = vmatpush1.msra.mxu0 %v594
    %1715 = vmatprep.subr.mxu0 %v599
    %1716 = vmatpush1.msra.mxu0 %v598
    %1717 = vmatprep.subr.mxu0 0.0
    %1718 = vmatpush1.msra.mxu0 0.0
    %1719 = vmatprep.subr.mxu0 0.0
    %1720 = vmatpush1.msra.mxu0 0.0
    %1721 = vmatprep.subr.mxu0 0.0
    %1722 = vmatpush1.msra.mxu0 0.0
    %1723 = vmatprep.subr.mxu0 0.0
    %1724 = vmatpush1.msra.mxu0 0.0
    %1725 = vmatprep.subr.mxu0 0.0
    %1726 = vmatpush1.msra.mxu0 0.0
    %1727 = vmatprep.subr.mxu0 0.0
    %1728 = vmatpush1.msra.mxu0 0.0
    %1729 = vmatprep.subr.mxu0 0.0
    %1730 = vmatpush1.msra.mxu0 0.0
    %1731 = vmatprep.subr.mxu0 0.0
    %1732 = vmatpush1.msra.mxu0 0.0
    %1733 = vmatprep.subr.mxu0 0.0
    %1734 = vmatpush1.msra.mxu0 0.0
    %1735 = vmatprep.subr.mxu0 0.0
    %1736 = vmatpush1.msra.mxu0 0.0
    %1737 = vmatprep.subr.mxu0 0.0
    %1738 = vmatpush1.msra.mxu0 0.0
    %1739 = vmatprep.subr.mxu0 0.0
    %1740 = vmatpush1.msra.mxu0 0.0
    %1741 = vmatprep.subr.mxu0 0.0
    %1742 = vmatpush1.msra.mxu0 0.0
    %1743 = vmatprep.subr.mxu0 0.0
    %1744 = vmatpush1.msra.mxu0 0.0
    %1745 = vmatprep.subr.mxu0 0.0
    %1746 = vmatpush1.msra.mxu0 0.0
    %1747 = vmatprep.subr.mxu0 0.0
    %1748 = vmatpush1.msra.mxu0 0.0
    %1749 = vmatprep.mubr.f32.mxu0 0.0
    %1750 = vmatmul.mubr.f32.gmra.mrb[0].mxu0 %v1613
    %v1751 = vpop.f32.mrb[0].mxu0
    %v1752 = vadd.f32 0.0, %v1751
    %v1753 = vpop.f32.mrb[0].mxu0
    %v1754 = vadd.f32 0.0, %v1753
    %1755 = vdwg.mxu0
    %1756 = vmatprep.subr.mxu0 %v232
    %1757 = vmatpush1.msra.mxu0 %v231
    %1758 = vmatprep.subr.mxu0 %v236
    %1759 = vmatpush1.msra.mxu0 %v235
    %1760 = vmatprep.subr.mxu0 %v240
    %1761 = vmatpush1.msra.mxu0 %v239
    %1762 = vmatprep.subr.mxu0 %v244
    %1763 = vmatpush1.msra.mxu0 %v243
    %1764 = vmatprep.subr.mxu0 %v248
    %1765 = vmatpush1.msra.mxu0 %v247
    %1766 = vmatprep.subr.mxu0 %v252
    %1767 = vmatpush1.msra.mxu0 %v251
    %1768 = vmatprep.subr.mxu0 %v256
    %1769 = vmatpush1.msra.mxu0 %v255
    %1770 = vmatprep.subr.mxu0 %v260
    %1771 = vmatpush1.msra.mxu0 %v259
    %1772 = vmatprep.subr.mxu0 %v264
    %1773 = vmatpush1.msra.mxu0 %v263
    %1774 = vmatprep.subr.mxu0 %v268
    %1775 = vmatpush1.msra.mxu0 %v267
    %1776 = vmatprep.subr.mxu0 %v272
    %1777 = vmatpush1.msra.mxu0 %v271
    %1778 = vmatprep.subr.mxu0 %v276
    %1779 = vmatpush1.msra.mxu0 %v275
    %1780 = vmatprep.subr.mxu0 %v280
    %1781 = vmatpush1.msra.mxu0 %v279
    %1782 = vmatprep.subr.mxu0 %v284
    %1783 = vmatpush1.msra.mxu0 %v283
    %1784 = vmatprep.subr.mxu0 %v288
    %1785 = vmatpush1.msra.mxu0 %v287
    %1786 = vmatprep.subr.mxu0 %v292
    %1787 = vmatpush1.msra.mxu0 %v291
    %1788 = vmatprep.subr.mxu0 0.0
    %1789 = vmatpush1.msra.mxu0 0.0
    %1790 = vmatprep.subr.mxu0 0.0
    %1791 = vmatpush1.msra.mxu0 0.0
    %1792 = vmatprep.subr.mxu0 0.0
    %1793 = vmatpush1.msra.mxu0 0.0
    %1794 = vmatprep.subr.mxu0 0.0
    %1795 = vmatpush1.msra.mxu0 0.0
    %1796 = vmatprep.subr.mxu0 0.0
    %1797 = vmatpush1.msra.mxu0 0.0
    %1798 = vmatprep.subr.mxu0 0.0
    %1799 = vmatpush1.msra.mxu0 0.0
    %1800 = vmatprep.subr.mxu0 0.0
    %1801 = vmatpush1.msra.mxu0 0.0
    %1802 = vmatprep.subr.mxu0 0.0
    %1803 = vmatpush1.msra.mxu0 0.0
    %1804 = vmatprep.subr.mxu0 0.0
    %1805 = vmatpush1.msra.mxu0 0.0
    %1806 = vmatprep.subr.mxu0 0.0
    %1807 = vmatpush1.msra.mxu0 0.0
    %1808 = vmatprep.subr.mxu0 0.0
    %1809 = vmatpush1.msra.mxu0 0.0
    %1810 = vmatprep.subr.mxu0 0.0
    %1811 = vmatpush1.msra.mxu0 0.0
    %1812 = vmatprep.subr.mxu0 0.0
    %1813 = vmatpush1.msra.mxu0 0.0
    %1814 = vmatprep.subr.mxu0 0.0
    %1815 = vmatpush1.msra.mxu0 0.0
    %1816 = vmatprep.subr.mxu0 0.0
    %1817 = vmatpush1.msra.mxu0 0.0
    %1818 = vmatprep.subr.mxu0 0.0
    %1819 = vmatpush1.msra.mxu0 0.0
    %1820 = vmatprep.mubr.f32.mxu0 0.0
    %1821 = vmatmul.mubr.f32.gmra.mrb[0].mxu0 %v1436
    %v1822 = vpop.f32.mrb[0].mxu0
    %v1823 = vadd.f32 %v1681, %v1822
    %v1824 = vpop.f32.mrb[0].mxu0
    %v1825 = vadd.f32 %v1683, %v1824
    %1826 = vdwg.mxu0
    %1827 = vmatprep.subr.mxu0 %v234
    %1828 = vmatpush1.msra.mxu0 %v233
    %1829 = vmatprep.subr.mxu0 %v238
    %1830 = vmatpush1.msra.mxu0 %v237
    %1831 = vmatprep.subr.mxu0 %v242
    %1832 = vmatpush1.msra.mxu0 %v241
    %1833 = vmatprep.subr.mxu0 %v246
    %1834 = vmatpush1.msra.mxu0 %v245
    %1835 = vmatprep.subr.mxu0 %v250
    %1836 = vmatpush1.msra.mxu0 %v249
    %1837 = vmatprep.subr.mxu0 %v254
    %1838 = vmatpush1.msra.mxu0 %v253
    %1839 = vmatprep.subr.mxu0 %v258
    %1840 = vmatpush1.msra.mxu0 %v257
    %1841 = vmatprep.subr.mxu0 %v262
    %1842 = vmatpush1.msra.mxu0 %v261
    %1843 = vmatprep.subr.mxu0 %v266
    %1844 = vmatpush1.msra.mxu0 %v265
    %1845 = vmatprep.subr.mxu0 %v270
    %1846 = vmatpush1.msra.mxu0 %v269
    %1847 = vmatprep.subr.mxu0 %v274
    %1848 = vmatpush1.msra.mxu0 %v273
    %1849 = vmatprep.subr.mxu0 %v278
    %1850 = vmatpush1.msra.mxu0 %v277
    %1851 = vmatprep.subr.mxu0 %v282
    %1852 = vmatpush1.msra.mxu0 %v281
    %1853 = vmatprep.subr.mxu0 %v286
    %1854 = vmatpush1.msra.mxu0 %v285
    %1855 = vmatprep.subr.mxu0 %v290
    %1856 = vmatpush1.msra.mxu0 %v289
    %1857 = vmatprep.subr.mxu0 %v294
    %1858 = vmatpush1.msra.mxu0 %v293
    %1859 = vmatprep.subr.mxu0 0.0
    %1860 = vmatpush1.msra.mxu0 0.0
    %1861 = vmatprep.subr.mxu0 0.0
    %1862 = vmatpush1.msra.mxu0 0.0
    %1863 = vmatprep.subr.mxu0 0.0
    %1864 = vmatpush1.msra.mxu0 0.0
    %1865 = vmatprep.subr.mxu0 0.0
    %1866 = vmatpush1.msra.mxu0 0.0
    %1867 = vmatprep.subr.mxu0 0.0
    %1868 = vmatpush1.msra.mxu0 0.0
    %1869 = vmatprep.subr.mxu0 0.0
    %1870 = vmatpush1.msra.mxu0 0.0
    %1871 = vmatprep.subr.mxu0 0.0
    %1872 = vmatpush1.msra.mxu0 0.0
    %1873 = vmatprep.subr.mxu0 0.0
    %1874 = vmatpush1.msra.mxu0 0.0
    %1875 = vmatprep.subr.mxu0 0.0
    %1876 = vmatpush1.msra.mxu0 0.0
    %1877 = vmatprep.subr.mxu0 0.0
    %1878 = vmatpush1.msra.mxu0 0.0
    %1879 = vmatprep.subr.mxu0 0.0
    %1880 = vmatpush1.msra.mxu0 0.0
    %1881 = vmatprep.subr.mxu0 0.0
    %1882 = vmatpush1.msra.mxu0 0.0
    %1883 = vmatprep.subr.mxu0 0.0
    %1884 = vmatpush1.msra.mxu0 0.0
    %1885 = vmatprep.subr.mxu0 0.0
    %1886 = vmatpush1.msra.mxu0 0.0
    %1887 = vmatprep.subr.mxu0 0.0
    %1888 = vmatpush1.msra.mxu0 0.0
    %1889 = vmatprep.subr.mxu0 0.0
    %1890 = vmatpush1.msra.mxu0 0.0
    %1891 = vmatprep.mubr.f32.mxu0 0.0
    %1892 = vmatmul.mubr.f32.gmra.mrb[0].mxu0 %v1436
    %v1893 = vpop.f32.mrb[0].mxu0
    %v1894 = vadd.f32 %v1752, %v1893
    %v1895 = vpop.f32.mrb[0].mxu0
    %v1896 = vadd.f32 %v1754, %v1895
    %1897 = vdwg.mxu0
    %v1898 = vadd.f32 %v1823, %v889
    %v1899 = vadd.f32 %v1825, %v893
    %v1900 = vadd.f32 %v1894, %v897
    %v1901 = vadd.f32 %v1896, %v901
    %v1902 = vxor.u32 %v1898, 2147483648
    %v1903 = vxor.u32 %v1899, 2147483648
    %v1904 = vxor.u32 %v1900, 2147483648
    %v1905 = vxor.u32 %v1901, 2147483648
    %v1906 = vmul.f32 %v1902, 1.442695
    %v1907 = vpow.pop %v1906
    %v1908 = vmul.f32 %v1903, 1.442695
    %v1909 = vpow.pop %v1908
    %v1910 = vmul.f32 %v1904, 1.442695
    %v1911 = vpow.pop %v1910
    %v1912 = vmul.f32 %v1905, 1.442695
    %v1913 = vpow.pop %v1912
    %v1914 = vadd.f32 %v1907, 1.0
    %v1915 = vadd.f32 %v1909, 1.0
    %v1916 = vadd.f32 %v1911, 1.0
    %v1917 = vadd.f32 %v1913, 1.0
    %v1918 = vrcp.pop %v1914
    %v1919 = vmul.f32 1.0, %v1918
    %v1920 = vrcp.pop %v1915
    %v1921 = vmul.f32 1.0, %v1920
    %v1922 = vrcp.pop %v1916
    %v1923 = vmul.f32 1.0, %v1922
    %v1924 = vrcp.pop %v1917
    %v1925 = vmul.f32 1.0, %v1924
    %v1926 = vmul.f32 %v1923, 2.0
    %v1927 = vsub.f32 %v1926, 1.0
    %v1928 = vmul.f32 %v1921, %v1434
    %v1929 = vmul.f32 %v1919, %v1927
    %v1930 = vadd.f32 %v1928, %v1929
    %v1931 = vtanh.pop %v1930
    %v1932 = vmul.f32 %v1925, %v1931
    %1933 = vmatprep.subr.mxu0 %v296
    %1934 = vmatpush1.msra.mxu0 %v295
    %1935 = vmatprep.subr.mxu0 %v300
    %1936 = vmatpush1.msra.mxu0 %v299
    %1937 = vmatprep.subr.mxu0 %v304
    %1938 = vmatpush1.msra.mxu0 %v303
    %1939 = vmatprep.subr.mxu0 %v308
    %1940 = vmatpush1.msra.mxu0 %v307
    %1941 = vmatprep.subr.mxu0 %v312
    %1942 = vmatpush1.msra.mxu0 %v311
    %1943 = vmatprep.subr.mxu0 %v316
    %1944 = vmatpush1.msra.mxu0 %v315
    %1945 = vmatprep.subr.mxu0 %v320
    %1946 = vmatpush1.msra.mxu0 %v319
    %1947 = vmatprep.subr.mxu0 %v324
    %1948 = vmatpush1.msra.mxu0 %v323
    %1949 = vmatprep.subr.mxu0 %v328
    %1950 = vmatpush1.msra.mxu0 %v327
    %1951 = vmatprep.subr.mxu0 %v332
    %1952 = vmatpush1.msra.mxu0 %v331
    %1953 = vmatprep.subr.mxu0 %v336
    %1954 = vmatpush1.msra.mxu0 %v335
    %1955 = vmatprep.subr.mxu0 %v340
    %1956 = vmatpush1.msra.mxu0 %v339
    %1957 = vmatprep.subr.mxu0 %v344
    %1958 = vmatpush1.msra.mxu0 %v343
    %1959 = vmatprep.subr.mxu0 %v348
    %1960 = vmatpush1.msra.mxu0 %v347
    %1961 = vmatprep.subr.mxu0 %v352
    %1962 = vmatpush1.msra.mxu0 %v351
    %1963 = vmatprep.subr.mxu0 %v356
    %1964 = vmatpush1.msra.mxu0 %v355
    %1965 = vmatprep.subr.mxu0 0.0
    %1966 = vmatpush1.msra.mxu0 0.0
    %1967 = vmatprep.subr.mxu0 0.0
    %1968 = vmatpush1.msra.mxu0 0.0
    %1969 = vmatprep.subr.mxu0 0.0
    %1970 = vmatpush1.msra.mxu0 0.0
    %1971 = vmatprep.subr.mxu0 0.0
    %1972 = vmatpush1.msra.mxu0 0.0
    %1973 = vmatprep.subr.mxu0 0.0
    %1974 = vmatpush1.msra.mxu0 0.0
    %1975 = vmatprep.subr.mxu0 0.0
    %1976 = vmatpush1.msra.mxu0 0.0
    %1977 = vmatprep.subr.mxu0 0.0
    %1978 = vmatpush1.msra.mxu0 0.0
    %1979 = vmatprep.subr.mxu0 0.0
    %1980 = vmatpush1.msra.mxu0 0.0
    %1981 = vmatprep.subr.mxu0 0.0
    %1982 = vmatpush1.msra.mxu0 0.0
    %1983 = vmatprep.subr.mxu0 0.0
    %1984 = vmatpush1.msra.mxu0 0.0
    %1985 = vmatprep.subr.mxu0 0.0
    %1986 = vmatpush1.msra.mxu0 0.0
    %1987 = vmatprep.subr.mxu0 0.0
    %1988 = vmatpush1.msra.mxu0 0.0
    %1989 = vmatprep.subr.mxu0 0.0
    %1990 = vmatpush1.msra.mxu0 0.0
    %1991 = vmatprep.subr.mxu0 0.0
    %1992 = vmatpush1.msra.mxu0 0.0
    %1993 = vmatprep.subr.mxu0 0.0
    %1994 = vmatpush1.msra.mxu0 0.0
    %1995 = vmatprep.subr.mxu0 0.0
    %1996 = vmatpush1.msra.mxu0 0.0
    %1997 = vmatprep.mubr.f32.mxu0 0.0
    %1998 = vmatmul.mubr.f32.gmra.mrb[0].mxu0 %v1613
    %v1999 = vpop.f32.mrb[0].mxu0
    %v2000 = vadd.f32 0.0, %v1999
    %v2001 = vpop.f32.mrb[0].mxu0
    %v2002 = vadd.f32 0.0, %v2001
    %2003 = vdwg.mxu0
    %2004 = vmatprep.subr.mxu0 %v298
    %2005 = vmatpush1.msra.mxu0 %v297
    %2006 = vmatprep.subr.mxu0 %v302
    %2007 = vmatpush1.msra.mxu0 %v301
    %2008 = vmatprep.subr.mxu0 %v306
    %2009 = vmatpush1.msra.mxu0 %v305
    %2010 = vmatprep.subr.mxu0 %v310
    %2011 = vmatpush1.msra.mxu0 %v309
    %2012 = vmatprep.subr.mxu0 %v314
    %2013 = vmatpush1.msra.mxu0 %v313
    %2014 = vmatprep.subr.mxu0 %v318
    %2015 = vmatpush1.msra.mxu0 %v317
    %2016 = vmatprep.subr.mxu0 %v322
    %2017 = vmatpush1.msra.mxu0 %v321
    %2018 = vmatprep.subr.mxu0 %v326
    %2019 = vmatpush1.msra.mxu0 %v325
    %2020 = vmatprep.subr.mxu0 %v330
    %2021 = vmatpush1.msra.mxu0 %v329
    %2022 = vmatprep.subr.mxu0 %v334
    %2023 = vmatpush1.msra.mxu0 %v333
    %2024 = vmatprep.subr.mxu0 %v338
    %2025 = vmatpush1.msra.mxu0 %v337
    %2026 = vmatprep.subr.mxu0 %v342
    %2027 = vmatpush1.msra.mxu0 %v341
    %2028 = vmatprep.subr.mxu0 %v346
    %2029 = vmatpush1.msra.mxu0 %v345
    %2030 = vmatprep.subr.mxu0 %v350
    %2031 = vmatpush1.msra.mxu0 %v349
    %2032 = vmatprep.subr.mxu0 %v354
    %2033 = vmatpush1.msra.mxu0 %v353
    %2034 = vmatprep.subr.mxu0 %v358
    %2035 = vmatpush1.msra.mxu0 %v357
    %2036 = vmatprep.subr.mxu0 0.0
    %2037 = vmatpush1.msra.mxu0 0.0
    %2038 = vmatprep.subr.mxu0 0.0
    %2039 = vmatpush1.msra.mxu0 0.0
    %2040 = vmatprep.subr.mxu0 0.0
    %2041 = vmatpush1.msra.mxu0 0.0
    %2042 = vmatprep.subr.mxu0 0.0
    %2043 = vmatpush1.msra.mxu0 0.0
    %2044 = vmatprep.subr.mxu0 0.0
    %2045 = vmatpush1.msra.mxu0 0.0
    %2046 = vmatprep.subr.mxu0 0.0
    %2047 = vmatpush1.msra.mxu0 0.0
    %2048 = vmatprep.subr.mxu0 0.0
    %2049 = vmatpush1.msra.mxu0 0.0
    %2050 = vmatprep.subr.mxu0 0.0
    %2051 = vmatpush1.msra.mxu0 0.0
    %2052 = vmatprep.subr.mxu0 0.0
    %2053 = vmatpush1.msra.mxu0 0.0
    %2054 = vmatprep.subr.mxu0 0.0
    %2055 = vmatpush1.msra.mxu0 0.0
    %2056 = vmatprep.subr.mxu0 0.0
    %2057 = vmatpush1.msra.mxu0 0.0
    %2058 = vmatprep.subr.mxu0 0.0
    %2059 = vmatpush1.msra.mxu0 0.0
    %2060 = vmatprep.subr.mxu0 0.0
    %2061 = vmatpush1.msra.mxu0 0.0
    %2062 = vmatprep.subr.mxu0 0.0
    %2063 = vmatpush1.msra.mxu0 0.0
    %2064 = vmatprep.subr.mxu0 0.0
    %2065 = vmatpush1.msra.mxu0 0.0
    %2066 = vmatprep.subr.mxu0 0.0
    %2067 = vmatpush1.msra.mxu0 0.0
    %2068 = vmatprep.mubr.f32.mxu0 0.0
    %2069 = vmatmul.mubr.f32.gmra.mrb[0].mxu0 %v1613
    %v2070 = vpop.f32.mrb[0].mxu0
    %v2071 = vadd.f32 0.0, %v2070
    %v2072 = vpop.f32.mrb[0].mxu0
    %v2073 = vadd.f32 0.0, %v2072
    %2074 = vdwg.mxu0
    %v2075 = vadd.f32 %v211, %v2000
    %v2076 = vadd.f32 %v212, %v2002
    %v2077 = vadd.f32 %v213, %v2071
    %v2078 = vadd.f32 %v214, %v2073
    %v2079 = vxor.u32 %v2075, 2147483648
    %v2080 = vxor.u32 %v2076, 2147483648
    %v2081 = vxor.u32 %v2077, 2147483648
    %v2082 = vxor.u32 %v2078, 2147483648
    %v2083 = vmul.f32 %v2079, 1.442695
    %v2084 = vpow.pop %v2083
    %v2085 = vmul.f32 %v2080, 1.442695
    %v2086 = vpow.pop %v2085
    %v2087 = vmul.f32 %v2081, 1.442695
    %v2088 = vpow.pop %v2087
    %v2089 = vmul.f32 %v2082, 1.442695
    %v2090 = vpow.pop %v2089
    %v2091 = vadd.f32 %v2084, 1.0
    %v2092 = vadd.f32 %v2086, 1.0
    %v2093 = vadd.f32 %v2088, 1.0
    %v2094 = vadd.f32 %v2090, 1.0
    %v2095 = vrcp.pop %v2091
    %v2096 = vmul.f32 1.0, %v2095
    %v2097 = vrcp.pop %v2092
    %v2098 = vmul.f32 1.0, %v2097
    %v2099 = vrcp.pop %v2093
    %v2100 = vmul.f32 1.0, %v2099
    %v2101 = vrcp.pop %v2094
    %v2102 = vmul.f32 1.0, %v2101
    %v2103 = vmul.f32 %v2100, 2.0
    %v2104 = vsub.f32 %v2103, 1.0
    %v2105 = vmul.f32 %v2098, %v1611
    %v2106 = vmul.f32 %v2096, %v2104
    %v2107 = vadd.f32 %v2105, %v2106
    %v2108 = vtanh.pop %v2107
    %v2109 = vmul.f32 %v2102, %v2108
    %2110 = vmatprep.subr.mxu0 %v537
    %2111 = vmatpush1.msra.mxu0 %v536
    %2112 = vmatprep.subr.mxu0 %v541
    %2113 = vmatpush1.msra.mxu0 %v540
    %2114 = vmatprep.subr.mxu0 %v545
    %2115 = vmatpush1.msra.mxu0 %v544
    %2116 = vmatprep.subr.mxu0 %v549
    %2117 = vmatpush1.msra.mxu0 %v548
    %2118 = vmatprep.subr.mxu0 %v553
    %2119 = vmatpush1.msra.mxu0 %v552
    %2120 = vmatprep.subr.mxu0 %v557
    %2121 = vmatpush1.msra.mxu0 %v556
    %2122 = vmatprep.subr.mxu0 %v561
    %2123 = vmatpush1.msra.mxu0 %v560
    %2124 = vmatprep.subr.mxu0 %v565
    %2125 = vmatpush1.msra.mxu0 %v564
    %2126 = vmatprep.subr.mxu0 %v569
    %2127 = vmatpush1.msra.mxu0 %v568
    %2128 = vmatprep.subr.mxu0 %v573
    %2129 = vmatpush1.msra.mxu0 %v572
    %2130 = vmatprep.subr.mxu0 %v577
    %2131 = vmatpush1.msra.mxu0 %v576
    %2132 = vmatprep.subr.mxu0 %v581
    %2133 = vmatpush1.msra.mxu0 %v580
    %2134 = vmatprep.subr.mxu0 %v585
    %2135 = vmatpush1.msra.mxu0 %v584
    %2136 = vmatprep.subr.mxu0 %v589
    %2137 = vmatpush1.msra.mxu0 %v588
    %2138 = vmatprep.subr.mxu0 %v593
    %2139 = vmatpush1.msra.mxu0 %v592
    %2140 = vmatprep.subr.mxu0 %v597
    %2141 = vmatpush1.msra.mxu0 %v596
    %2142 = vmatprep.subr.mxu0 0.0
    %2143 = vmatpush1.msra.mxu0 0.0
    %2144 = vmatprep.subr.mxu0 0.0
    %2145 = vmatpush1.msra.mxu0 0.0
    %2146 = vmatprep.subr.mxu0 0.0
    %2147 = vmatpush1.msra.mxu0 0.0
    %2148 = vmatprep.subr.mxu0 0.0
    %2149 = vmatpush1.msra.mxu0 0.0
    %2150 = vmatprep.subr.mxu0 0.0
    %2151 = vmatpush1.msra.mxu0 0.0
    %2152 = vmatprep.subr.mxu0 0.0
    %2153 = vmatpush1.msra.mxu0 0.0
    %2154 = vmatprep.subr.mxu0 0.0
    %2155 = vmatpush1.msra.mxu0 0.0
    %2156 = vmatprep.subr.mxu0 0.0
    %2157 = vmatpush1.msra.mxu0 0.0
    %2158 = vmatprep.subr.mxu0 0.0
    %2159 = vmatpush1.msra.mxu0 0.0
    %2160 = vmatprep.subr.mxu0 0.0
    %2161 = vmatpush1.msra.mxu0 0.0
    %2162 = vmatprep.subr.mxu0 0.0
    %2163 = vmatpush1.msra.mxu0 0.0
    %2164 = vmatprep.subr.mxu0 0.0
    %2165 = vmatpush1.msra.mxu0 0.0
    %2166 = vmatprep.subr.mxu0 0.0
    %2167 = vmatpush1.msra.mxu0 0.0
    %2168 = vmatprep.subr.mxu0 0.0
    %2169 = vmatpush1.msra.mxu0 0.0
    %2170 = vmatprep.subr.mxu0 0.0
    %2171 = vmatpush1.msra.mxu0 0.0
    %2172 = vmatprep.subr.mxu0 0.0
    %2173 = vmatpush1.msra.mxu0 0.0
    %2174 = vmatprep.mubr.f32.mxu0 0.0
    %2175 = vmatmul.mubr.f32.gmra.mrb[0].mxu0 %v2109
    %v2176 = vpop.f32.mrb[0].mxu0
    %v2177 = vadd.f32 0.0, %v2176
    %v2178 = vpop.f32.mrb[0].mxu0
    %v2179 = vadd.f32 0.0, %v2178
    %2180 = vdwg.mxu0
    %2181 = vmatprep.subr.mxu0 %v539
    %2182 = vmatpush1.msra.mxu0 %v538
    %2183 = vmatprep.subr.mxu0 %v543
    %2184 = vmatpush1.msra.mxu0 %v542
    %2185 = vmatprep.subr.mxu0 %v547
    %2186 = vmatpush1.msra.mxu0 %v546
    %2187 = vmatprep.subr.mxu0 %v551
    %2188 = vmatpush1.msra.mxu0 %v550
    %2189 = vmatprep.subr.mxu0 %v555
    %2190 = vmatpush1.msra.mxu0 %v554
    %2191 = vmatprep.subr.mxu0 %v559
    %2192 = vmatpush1.msra.mxu0 %v558
    %2193 = vmatprep.subr.mxu0 %v563
    %2194 = vmatpush1.msra.mxu0 %v562
    %2195 = vmatprep.subr.mxu0 %v567
    %2196 = vmatpush1.msra.mxu0 %v566
    %2197 = vmatprep.subr.mxu0 %v571
    %2198 = vmatpush1.msra.mxu0 %v570
    %2199 = vmatprep.subr.mxu0 %v575
    %2200 = vmatpush1.msra.mxu0 %v574
    %2201 = vmatprep.subr.mxu0 %v579
    %2202 = vmatpush1.msra.mxu0 %v578
    %2203 = vmatprep.subr.mxu0 %v583
    %2204 = vmatpush1.msra.mxu0 %v582
    %2205 = vmatprep.subr.mxu0 %v587
    %2206 = vmatpush1.msra.mxu0 %v586
    %2207 = vmatprep.subr.mxu0 %v591
    %2208 = vmatpush1.msra.mxu0 %v590
    %2209 = vmatprep.subr.mxu0 %v595
    %2210 = vmatpush1.msra.mxu0 %v594
    %2211 = vmatprep.subr.mxu0 %v599
    %2212 = vmatpush1.msra.mxu0 %v598
    %2213 = vmatprep.subr.mxu0 0.0
    %2214 = vmatpush1.msra.mxu0 0.0
    %2215 = vmatprep.subr.mxu0 0.0
    %2216 = vmatpush1.msra.mxu0 0.0
    %2217 = vmatprep.subr.mxu0 0.0
    %2218 = vmatpush1.msra.mxu0 0.0
    %2219 = vmatprep.subr.mxu0 0.0
    %2220 = vmatpush1.msra.mxu0 0.0
    %2221 = vmatprep.subr.mxu0 0.0
    %2222 = vmatpush1.msra.mxu0 0.0
    %2223 = vmatprep.subr.mxu0 0.0
    %2224 = vmatpush1.msra.mxu0 0.0
    %2225 = vmatprep.subr.mxu0 0.0
    %2226 = vmatpush1.msra.mxu0 0.0
    %2227 = vmatprep.subr.mxu0 0.0
    %2228 = vmatpush1.msra.mxu0 0.0
    %2229 = vmatprep.subr.mxu0 0.0
    %2230 = vmatpush1.msra.mxu0 0.0
    %2231 = vmatprep.subr.mxu0 0.0
    %2232 = vmatpush1.msra.mxu0 0.0
    %2233 = vmatprep.subr.mxu0 0.0
    %2234 = vmatpush1.msra.mxu0 0.0
    %2235 = vmatprep.subr.mxu0 0.0
    %2236 = vmatpush1.msra.mxu0 0.0
    %2237 = vmatprep.subr.mxu0 0.0
    %2238 = vmatpush1.msra.mxu0 0.0
    %2239 = vmatprep.subr.mxu0 0.0
    %2240 = vmatpush1.msra.mxu0 0.0
    %2241 = vmatprep.subr.mxu0 0.0
    %2242 = vmatpush1.msra.mxu0 0.0
    %2243 = vmatprep.subr.mxu0 0.0
    %2244 = vmatpush1.msra.mxu0 0.0
    %2245 = vmatprep.mubr.f32.mxu0 0.0
    %2246 = vmatmul.mubr.f32.gmra.mrb[0].mxu0 %v2109
    %v2247 = vpop.f32.mrb[0].mxu0
    %v2248 = vadd.f32 0.0, %v2247
    %v2249 = vpop.f32.mrb[0].mxu0
    %v2250 = vadd.f32 0.0, %v2249
    %2251 = vdwg.mxu0
    %2252 = vmatprep.subr.mxu0 %v232
    %2253 = vmatpush1.msra.mxu0 %v231
    %2254 = vmatprep.subr.mxu0 %v236
    %2255 = vmatpush1.msra.mxu0 %v235
    %2256 = vmatprep.subr.mxu0 %v240
    %2257 = vmatpush1.msra.mxu0 %v239
    %2258 = vmatprep.subr.mxu0 %v244
    %2259 = vmatpush1.msra.mxu0 %v243
    %2260 = vmatprep.subr.mxu0 %v248
    %2261 = vmatpush1.msra.mxu0 %v247
    %2262 = vmatprep.subr.mxu0 %v252
    %2263 = vmatpush1.msra.mxu0 %v251
    %2264 = vmatprep.subr.mxu0 %v256
    %2265 = vmatpush1.msra.mxu0 %v255
    %2266 = vmatprep.subr.mxu0 %v260
    %2267 = vmatpush1.msra.mxu0 %v259
    %2268 = vmatprep.subr.mxu0 %v264
    %2269 = vmatpush1.msra.mxu0 %v263
    %2270 = vmatprep.subr.mxu0 %v268
    %2271 = vmatpush1.msra.mxu0 %v267
    %2272 = vmatprep.subr.mxu0 %v272
    %2273 = vmatpush1.msra.mxu0 %v271
    %2274 = vmatprep.subr.mxu0 %v276
    %2275 = vmatpush1.msra.mxu0 %v275
    %2276 = vmatprep.subr.mxu0 %v280
    %2277 = vmatpush1.msra.mxu0 %v279
    %2278 = vmatprep.subr.mxu0 %v284
    %2279 = vmatpush1.msra.mxu0 %v283
    %2280 = vmatprep.subr.mxu0 %v288
    %2281 = vmatpush1.msra.mxu0 %v287
    %2282 = vmatprep.subr.mxu0 %v292
    %2283 = vmatpush1.msra.mxu0 %v291
    %2284 = vmatprep.subr.mxu0 0.0
    %2285 = vmatpush1.msra.mxu0 0.0
    %2286 = vmatprep.subr.mxu0 0.0
    %2287 = vmatpush1.msra.mxu0 0.0
    %2288 = vmatprep.subr.mxu0 0.0
    %2289 = vmatpush1.msra.mxu0 0.0
    %2290 = vmatprep.subr.mxu0 0.0
    %2291 = vmatpush1.msra.mxu0 0.0
    %2292 = vmatprep.subr.mxu0 0.0
    %2293 = vmatpush1.msra.mxu0 0.0
    %2294 = vmatprep.subr.mxu0 0.0
    %2295 = vmatpush1.msra.mxu0 0.0
    %2296 = vmatprep.subr.mxu0 0.0
    %2297 = vmatpush1.msra.mxu0 0.0
    %2298 = vmatprep.subr.mxu0 0.0
    %2299 = vmatpush1.msra.mxu0 0.0
    %2300 = vmatprep.subr.mxu0 0.0
    %2301 = vmatpush1.msra.mxu0 0.0
    %2302 = vmatprep.subr.mxu0 0.0
    %2303 = vmatpush1.msra.mxu0 0.0
    %2304 = vmatprep.subr.mxu0 0.0
    %2305 = vmatpush1.msra.mxu0 0.0
    %2306 = vmatprep.subr.mxu0 0.0
    %2307 = vmatpush1.msra.mxu0 0.0
    %2308 = vmatprep.subr.mxu0 0.0
    %2309 = vmatpush1.msra.mxu0 0.0
    %2310 = vmatprep.subr.mxu0 0.0
    %2311 = vmatpush1.msra.mxu0 0.0
    %2312 = vmatprep.subr.mxu0 0.0
    %2313 = vmatpush1.msra.mxu0 0.0
    %2314 = vmatprep.subr.mxu0 0.0
    %2315 = vmatpush1.msra.mxu0 0.0
    %2316 = vmatprep.mubr.f32.mxu0 0.0
    %2317 = vmatmul.mubr.f32.gmra.mrb[0].mxu0 %v1932
    %v2318 = vpop.f32.mrb[0].mxu0
    %v2319 = vadd.f32 %v2177, %v2318
    %v2320 = vpop.f32.mrb[0].mxu0
    %v2321 = vadd.f32 %v2179, %v2320
    %2322 = vdwg.mxu0
    %2323 = vmatprep.subr.mxu0 %v234
    %2324 = vmatpush1.msra.mxu0 %v233
    %2325 = vmatprep.subr.mxu0 %v238
    %2326 = vmatpush1.msra.mxu0 %v237
    %2327 = vmatprep.subr.mxu0 %v242
    %2328 = vmatpush1.msra.mxu0 %v241
    %2329 = vmatprep.subr.mxu0 %v246
    %2330 = vmatpush1.msra.mxu0 %v245
    %2331 = vmatprep.subr.mxu0 %v250
    %2332 = vmatpush1.msra.mxu0 %v249
    %2333 = vmatprep.subr.mxu0 %v254
    %2334 = vmatpush1.msra.mxu0 %v253
    %2335 = vmatprep.subr.mxu0 %v258
    %2336 = vmatpush1.msra.mxu0 %v257
    %2337 = vmatprep.subr.mxu0 %v262
    %2338 = vmatpush1.msra.mxu0 %v261
    %2339 = vmatprep.subr.mxu0 %v266
    %2340 = vmatpush1.msra.mxu0 %v265
    %2341 = vmatprep.subr.mxu0 %v270
    %2342 = vmatpush1.msra.mxu0 %v269
    %2343 = vmatprep.subr.mxu0 %v274
    %2344 = vmatpush1.msra.mxu0 %v273
    %2345 = vmatprep.subr.mxu0 %v278
    %2346 = vmatpush1.msra.mxu0 %v277
    %2347 = vmatprep.subr.mxu0 %v282
    %2348 = vmatpush1.msra.mxu0 %v281
    %2349 = vmatprep.subr.mxu0 %v286
    %2350 = vmatpush1.msra.mxu0 %v285
    %2351 = vmatprep.subr.mxu0 %v290
    %2352 = vmatpush1.msra.mxu0 %v289
    %2353 = vmatprep.subr.mxu0 %v294
    %2354 = vmatpush1.msra.mxu0 %v293
    %2355 = vmatprep.subr.mxu0 0.0
    %2356 = vmatpush1.msra.mxu0 0.0
    %2357 = vmatprep.subr.mxu0 0.0
    %2358 = vmatpush1.msra.mxu0 0.0
    %2359 = vmatprep.subr.mxu0 0.0
    %2360 = vmatpush1.msra.mxu0 0.0
    %2361 = vmatprep.subr.mxu0 0.0
    %2362 = vmatpush1.msra.mxu0 0.0
    %2363 = vmatprep.subr.mxu0 0.0
    %2364 = vmatpush1.msra.mxu0 0.0
    %2365 = vmatprep.subr.mxu0 0.0
    %2366 = vmatpush1.msra.mxu0 0.0
    %2367 = vmatprep.subr.mxu0 0.0
    %2368 = vmatpush1.msra.mxu0 0.0
    %2369 = vmatprep.subr.mxu0 0.0
    %2370 = vmatpush1.msra.mxu0 0.0
    %2371 = vmatprep.subr.mxu0 0.0
    %2372 = vmatpush1.msra.mxu0 0.0
    %2373 = vmatprep.subr.mxu0 0.0
    %2374 = vmatpush1.msra.mxu0 0.0
    %2375 = vmatprep.subr.mxu0 0.0
    %2376 = vmatpush1.msra.mxu0 0.0
    %2377 = vmatprep.subr.mxu0 0.0
    %2378 = vmatpush1.msra.mxu0 0.0
    %2379 = vmatprep.subr.mxu0 0.0
    %2380 = vmatpush1.msra.mxu0 0.0
    %2381 = vmatprep.subr.mxu0 0.0
    %2382 = vmatpush1.msra.mxu0 0.0
    %2383 = vmatprep.subr.mxu0 0.0
    %2384 = vmatpush1.msra.mxu0 0.0
    %2385 = vmatprep.subr.mxu0 0.0
    %2386 = vmatpush1.msra.mxu0 0.0
    %2387 = vmatprep.mubr.f32.mxu0 0.0
    %2388 = vmatmul.mubr.f32.gmra.mrb[0].mxu0 %v1932
    %v2389 = vpop.f32.mrb[0].mxu0
    %v2390 = vadd.f32 %v2248, %v2389
    %v2391 = vpop.f32.mrb[0].mxu0
    %v2392 = vadd.f32 %v2250, %v2391
    %2393 = vdwg.mxu0
    %v2394 = vadd.f32 %v2319, %v889
    %v2395 = vadd.f32 %v2321, %v893
    %v2396 = vadd.f32 %v2390, %v897
    %v2397 = vadd.f32 %v2392, %v901
    %v2398 = vxor.u32 %v2394, 2147483648
    %v2399 = vxor.u32 %v2395, 2147483648
    %v2400 = vxor.u32 %v2396, 2147483648
    %v2401 = vxor.u32 %v2397, 2147483648
    %v2402 = vmul.f32 %v2398, 1.442695
    %v2403 = vpow.pop %v2402
    %v2404 = vmul.f32 %v2399, 1.442695
    %v2405 = vpow.pop %v2404
    %v2406 = vmul.f32 %v2400, 1.442695
    %v2407 = vpow.pop %v2406
    %v2408 = vmul.f32 %v2401, 1.442695
    %v2409 = vpow.pop %v2408
    %v2410 = vadd.f32 %v2403, 1.0
    %v2411 = vadd.f32 %v2405, 1.0
    %v2412 = vadd.f32 %v2407, 1.0
    %v2413 = vadd.f32 %v2409, 1.0
    %v2414 = vrcp.pop %v2410
    %v2415 = vmul.f32 1.0, %v2414
    %v2416 = vrcp.pop %v2411
    %v2417 = vmul.f32 1.0, %v2416
    %v2418 = vrcp.pop %v2412
    %v2419 = vmul.f32 1.0, %v2418
    %v2420 = vrcp.pop %v2413
    %v2421 = vmul.f32 1.0, %v2420
    %v2422 = vmul.f32 %v2419, 2.0
    %v2423 = vsub.f32 %v2422, 1.0
    %v2424 = vmul.f32 %v2417, %v1930
    %v2425 = vmul.f32 %v2415, %v2423
    %v2426 = vadd.f32 %v2424, %v2425
    %v2427 = vtanh.pop %v2426
    %v2428 = vmul.f32 %v2421, %v2427
    %2429 = vmatprep.subr.mxu0 %v296
    %2430 = vmatpush1.msra.mxu0 %v295
    %2431 = vmatprep.subr.mxu0 %v300
    %2432 = vmatpush1.msra.mxu0 %v299
    %2433 = vmatprep.subr.mxu0 %v304
    %2434 = vmatpush1.msra.mxu0 %v303
    %2435 = vmatprep.subr.mxu0 %v308
    %2436 = vmatpush1.msra.mxu0 %v307
    %2437 = vmatprep.subr.mxu0 %v312
    %2438 = vmatpush1.msra.mxu0 %v311
    %2439 = vmatprep.subr.mxu0 %v316
    %2440 = vmatpush1.msra.mxu0 %v315
    %2441 = vmatprep.subr.mxu0 %v320
    %2442 = vmatpush1.msra.mxu0 %v319
    %2443 = vmatprep.subr.mxu0 %v324
    %2444 = vmatpush1.msra.mxu0 %v323
    %2445 = vmatprep.subr.mxu0 %v328
    %2446 = vmatpush1.msra.mxu0 %v327
    %2447 = vmatprep.subr.mxu0 %v332
    %2448 = vmatpush1.msra.mxu0 %v331
    %2449 = vmatprep.subr.mxu0 %v336
    %2450 = vmatpush1.msra.mxu0 %v335
    %2451 = vmatprep.subr.mxu0 %v340
    %2452 = vmatpush1.msra.mxu0 %v339
    %2453 = vmatprep.subr.mxu0 %v344
    %2454 = vmatpush1.msra.mxu0 %v343
    %2455 = vmatprep.subr.mxu0 %v348
    %2456 = vmatpush1.msra.mxu0 %v347
    %2457 = vmatprep.subr.mxu0 %v352
    %2458 = vmatpush1.msra.mxu0 %v351
    %2459 = vmatprep.subr.mxu0 %v356
    %2460 = vmatpush1.msra.mxu0 %v355
    %2461 = vmatprep.subr.mxu0 0.0
    %2462 = vmatpush1.msra.mxu0 0.0
    %2463 = vmatprep.subr.mxu0 0.0
    %2464 = vmatpush1.msra.mxu0 0.0
    %2465 = vmatprep.subr.mxu0 0.0
    %2466 = vmatpush1.msra.mxu0 0.0
    %2467 = vmatprep.subr.mxu0 0.0
    %2468 = vmatpush1.msra.mxu0 0.0
    %2469 = vmatprep.subr.mxu0 0.0
    %2470 = vmatpush1.msra.mxu0 0.0
    %2471 = vmatprep.subr.mxu0 0.0
    %2472 = vmatpush1.msra.mxu0 0.0
    %2473 = vmatprep.subr.mxu0 0.0
    %2474 = vmatpush1.msra.mxu0 0.0
    %2475 = vmatprep.subr.mxu0 0.0
    %2476 = vmatpush1.msra.mxu0 0.0
    %2477 = vmatprep.subr.mxu0 0.0
    %2478 = vmatpush1.msra.mxu0 0.0
    %2479 = vmatprep.subr.mxu0 0.0
    %2480 = vmatpush1.msra.mxu0 0.0
    %2481 = vmatprep.subr.mxu0 0.0
    %2482 = vmatpush1.msra.mxu0 0.0
    %2483 = vmatprep.subr.mxu0 0.0
    %2484 = vmatpush1.msra.mxu0 0.0
    %2485 = vmatprep.subr.mxu0 0.0
    %2486 = vmatpush1.msra.mxu0 0.0
    %2487 = vmatprep.subr.mxu0 0.0
    %2488 = vmatpush1.msra.mxu0 0.0
    %2489 = vmatprep.subr.mxu0 0.0
    %2490 = vmatpush1.msra.mxu0 0.0
    %2491 = vmatprep.subr.mxu0 0.0
    %2492 = vmatpush1.msra.mxu0 0.0
    %2493 = vmatprep.mubr.f32.mxu0 0.0
    %2494 = vmatmul.mubr.f32.gmra.mrb[0].mxu0 %v2109
    %v2495 = vpop.f32.mrb[0].mxu0
    %v2496 = vadd.f32 0.0, %v2495
    %v2497 = vpop.f32.mrb[0].mxu0
    %v2498 = vadd.f32 0.0, %v2497
    %2499 = vdwg.mxu0
    %2500 = vmatprep.subr.mxu0 %v298
    %2501 = vmatpush1.msra.mxu0 %v297
    %2502 = vmatprep.subr.mxu0 %v302
    %2503 = vmatpush1.msra.mxu0 %v301
    %2504 = vmatprep.subr.mxu0 %v306
    %2505 = vmatpush1.msra.mxu0 %v305
    %2506 = vmatprep.subr.mxu0 %v310
    %2507 = vmatpush1.msra.mxu0 %v309
    %2508 = vmatprep.subr.mxu0 %v314
    %2509 = vmatpush1.msra.mxu0 %v313
    %2510 = vmatprep.subr.mxu0 %v318
    %2511 = vmatpush1.msra.mxu0 %v317
    %2512 = vmatprep.subr.mxu0 %v322
    %2513 = vmatpush1.msra.mxu0 %v321
    %2514 = vmatprep.subr.mxu0 %v326
    %2515 = vmatpush1.msra.mxu0 %v325
    %2516 = vmatprep.subr.mxu0 %v330
    %2517 = vmatpush1.msra.mxu0 %v329
    %2518 = vmatprep.subr.mxu0 %v334
    %2519 = vmatpush1.msra.mxu0 %v333
    %2520 = vmatprep.subr.mxu0 %v338
    %2521 = vmatpush1.msra.mxu0 %v337
    %2522 = vmatprep.subr.mxu0 %v342
    %2523 = vmatpush1.msra.mxu0 %v341
    %2524 = vmatprep.subr.mxu0 %v346
    %2525 = vmatpush1.msra.mxu0 %v345
    %2526 = vmatprep.subr.mxu0 %v350
    %2527 = vmatpush1.msra.mxu0 %v349
    %2528 = vmatprep.subr.mxu0 %v354
    %2529 = vmatpush1.msra.mxu0 %v353
    %2530 = vmatprep.subr.mxu0 %v358
    %2531 = vmatpush1.msra.mxu0 %v357
    %2532 = vmatprep.subr.mxu0 0.0
    %2533 = vmatpush1.msra.mxu0 0.0
    %2534 = vmatprep.subr.mxu0 0.0
    %2535 = vmatpush1.msra.mxu0 0.0
    %2536 = vmatprep.subr.mxu0 0.0
    %2537 = vmatpush1.msra.mxu0 0.0
    %2538 = vmatprep.subr.mxu0 0.0
    %2539 = vmatpush1.msra.mxu0 0.0
    %2540 = vmatprep.subr.mxu0 0.0
    %2541 = vmatpush1.msra.mxu0 0.0
    %2542 = vmatprep.subr.mxu0 0.0
    %2543 = vmatpush1.msra.mxu0 0.0
    %2544 = vmatprep.subr.mxu0 0.0
    %2545 = vmatpush1.msra.mxu0 0.0
    %2546 = vmatprep.subr.mxu0 0.0
    %2547 = vmatpush1.msra.mxu0 0.0
    %2548 = vmatprep.subr.mxu0 0.0
    %2549 = vmatpush1.msra.mxu0 0.0
    %2550 = vmatprep.subr.mxu0 0.0
    %2551 = vmatpush1.msra.mxu0 0.0
    %2552 = vmatprep.subr.mxu0 0.0
    %2553 = vmatpush1.msra.mxu0 0.0
    %2554 = vmatprep.subr.mxu0 0.0
    %2555 = vmatpush1.msra.mxu0 0.0
    %2556 = vmatprep.subr.mxu0 0.0
    %2557 = vmatpush1.msra.mxu0 0.0
    %2558 = vmatprep.subr.mxu0 0.0
    %2559 = vmatpush1.msra.mxu0 0.0
    %2560 = vmatprep.subr.mxu0 0.0
    %2561 = vmatpush1.msra.mxu0 0.0
    %2562 = vmatprep.subr.mxu0 0.0
    %2563 = vmatpush1.msra.mxu0 0.0
    %2564 = vmatprep.mubr.f32.mxu0 0.0
    %2565 = vmatmul.mubr.f32.gmra.mrb[0].mxu0 %v2109
    %v2566 = vpop.f32.mrb[0].mxu0
    %v2567 = vadd.f32 0.0, %v2566
    %v2568 = vpop.f32.mrb[0].mxu0
    %v2569 = vadd.f32 0.0, %v2568
    %2570 = vdwg.mxu0
    %v2571 = vadd.f32 %v215, %v2496
    %v2572 = vadd.f32 %v216, %v2498
    %v2573 = vadd.f32 %v217, %v2567
    %v2574 = vadd.f32 %v218, %v2569
    %v2575 = vxor.u32 %v2571, 2147483648
    %v2576 = vxor.u32 %v2572, 2147483648
    %v2577 = vxor.u32 %v2573, 2147483648
    %v2578 = vxor.u32 %v2574, 2147483648
    %v2579 = vmul.f32 %v2575, 1.442695
    %v2580 = vpow.pop %v2579
    %v2581 = vmul.f32 %v2576, 1.442695
    %v2582 = vpow.pop %v2581
    %v2583 = vmul.f32 %v2577, 1.442695
    %v2584 = vpow.pop %v2583
    %v2585 = vmul.f32 %v2578, 1.442695
    %v2586 = vpow.pop %v2585
    %v2587 = vadd.f32 %v2580, 1.0
    %v2588 = vadd.f32 %v2582, 1.0
    %v2589 = vadd.f32 %v2584, 1.0
    %v2590 = vadd.f32 %v2586, 1.0
    %v2591 = vrcp.pop %v2587
    %v2592 = vmul.f32 1.0, %v2591
    %v2593 = vrcp.pop %v2588
    %v2594 = vmul.f32 1.0, %v2593
    %v2595 = vrcp.pop %v2589
    %v2596 = vmul.f32 1.0, %v2595
    %v2597 = vrcp.pop %v2590
    %v2598 = vmul.f32 1.0, %v2597
    %v2599 = vmul.f32 %v2596, 2.0
    %v2600 = vsub.f32 %v2599, 1.0
    %v2601 = vmul.f32 %v2594, %v2107
    %v2602 = vmul.f32 %v2592, %v2600
    %v2603 = vadd.f32 %v2601, %v2602
    %v2604 = vtanh.pop %v2603
    %v2605 = vmul.f32 %v2598, %v2604
    %2606 = vmatprep.subr.mxu0 %v537
    %2607 = vmatpush1.msra.mxu0 %v536
    %2608 = vmatprep.subr.mxu0 %v541
    %2609 = vmatpush1.msra.mxu0 %v540
    %2610 = vmatprep.subr.mxu0 %v545
    %2611 = vmatpush1.msra.mxu0 %v544
    %2612 = vmatprep.subr.mxu0 %v549
    %2613 = vmatpush1.msra.mxu0 %v548
    %2614 = vmatprep.subr.mxu0 %v553
    %2615 = vmatpush1.msra.mxu0 %v552
    %2616 = vmatprep.subr.mxu0 %v557
    %2617 = vmatpush1.msra.mxu0 %v556
    %2618 = vmatprep.subr.mxu0 %v561
    %2619 = vmatpush1.msra.mxu0 %v560
    %2620 = vmatprep.subr.mxu0 %v565
    %2621 = vmatpush1.msra.mxu0 %v564
    %2622 = vmatprep.subr.mxu0 %v569
    %2623 = vmatpush1.msra.mxu0 %v568
    %2624 = vmatprep.subr.mxu0 %v573
    %2625 = vmatpush1.msra.mxu0 %v572
    %2626 = vmatprep.subr.mxu0 %v577
    %2627 = vmatpush1.msra.mxu0 %v576
    %2628 = vmatprep.subr.mxu0 %v581
    %2629 = vmatpush1.msra.mxu0 %v580
    %2630 = vmatprep.subr.mxu0 %v585
    %2631 = vmatpush1.msra.mxu0 %v584
    %2632 = vmatprep.subr.mxu0 %v589
    %2633 = vmatpush1.msra.mxu0 %v588
    %2634 = vmatprep.subr.mxu0 %v593
    %2635 = vmatpush1.msra.mxu0 %v592
    %2636 = vmatprep.subr.mxu0 %v597
    %2637 = vmatpush1.msra.mxu0 %v596
    %2638 = vmatprep.subr.mxu0 0.0
    %2639 = vmatpush1.msra.mxu0 0.0
    %2640 = vmatprep.subr.mxu0 0.0
    %2641 = vmatpush1.msra.mxu0 0.0
    %2642 = vmatprep.subr.mxu0 0.0
    %2643 = vmatpush1.msra.mxu0 0.0
    %2644 = vmatprep.subr.mxu0 0.0
    %2645 = vmatpush1.msra.mxu0 0.0
    %2646 = vmatprep.subr.mxu0 0.0
    %2647 = vmatpush1.msra.mxu0 0.0
    %2648 = vmatprep.subr.mxu0 0.0
    %2649 = vmatpush1.msra.mxu0 0.0
    %2650 = vmatprep.subr.mxu0 0.0
    %2651 = vmatpush1.msra.mxu0 0.0
    %2652 = vmatprep.subr.mxu0 0.0
    %2653 = vmatpush1.msra.mxu0 0.0
    %2654 = vmatprep.subr.mxu0 0.0
    %2655 = vmatpush1.msra.mxu0 0.0
    %2656 = vmatprep.subr.mxu0 0.0
    %2657 = vmatpush1.msra.mxu0 0.0
    %2658 = vmatprep.subr.mxu0 0.0
    %2659 = vmatpush1.msra.mxu0 0.0
    %2660 = vmatprep.subr.mxu0 0.0
    %2661 = vmatpush1.msra.mxu0 0.0
    %2662 = vmatprep.subr.mxu0 0.0
    %2663 = vmatpush1.msra.mxu0 0.0
    %2664 = vmatprep.subr.mxu0 0.0
    %2665 = vmatpush1.msra.mxu0 0.0
    %2666 = vmatprep.subr.mxu0 0.0
    %2667 = vmatpush1.msra.mxu0 0.0
    %2668 = vmatprep.subr.mxu0 0.0
    %2669 = vmatpush1.msra.mxu0 0.0
    %2670 = vmatprep.mubr.f32.mxu0 0.0
    %2671 = vmatmul.mubr.f32.gmra.mrb[0].mxu0 %v2605
    %v2672 = vpop.f32.mrb[0].mxu0
    %v2673 = vadd.f32 0.0, %v2672
    %v2674 = vpop.f32.mrb[0].mxu0
    %v2675 = vadd.f32 0.0, %v2674
    %2676 = vdwg.mxu0
    %2677 = vmatprep.subr.mxu0 %v539
    %2678 = vmatpush1.msra.mxu0 %v538
    %2679 = vmatprep.subr.mxu0 %v543
    %2680 = vmatpush1.msra.mxu0 %v542
    %2681 = vmatprep.subr.mxu0 %v547
    %2682 = vmatpush1.msra.mxu0 %v546
    %2683 = vmatprep.subr.mxu0 %v551
    %2684 = vmatpush1.msra.mxu0 %v550
    %2685 = vmatprep.subr.mxu0 %v555
    %2686 = vmatpush1.msra.mxu0 %v554
    %2687 = vmatprep.subr.mxu0 %v559
    %2688 = vmatpush1.msra.mxu0 %v558
    %2689 = vmatprep.subr.mxu0 %v563
    %2690 = vmatpush1.msra.mxu0 %v562
    %2691 = vmatprep.subr.mxu0 %v567
    %2692 = vmatpush1.msra.mxu0 %v566
    %2693 = vmatprep.subr.mxu0 %v571
    %2694 = vmatpush1.msra.mxu0 %v570
    %2695 = vmatprep.subr.mxu0 %v575
    %2696 = vmatpush1.msra.mxu0 %v574
    %2697 = vmatprep.subr.mxu0 %v579
    %2698 = vmatpush1.msra.mxu0 %v578
    %2699 = vmatprep.subr.mxu0 %v583
    %2700 = vmatpush1.msra.mxu0 %v582
    %2701 = vmatprep.subr.mxu0 %v587
    %2702 = vmatpush1.msra.mxu0 %v586
    %2703 = vmatprep.subr.mxu0 %v591
    %2704 = vmatpush1.msra.mxu0 %v590
    %2705 = vmatprep.subr.mxu0 %v595
    %2706 = vmatpush1.msra.mxu0 %v594
    %2707 = vmatprep.subr.mxu0 %v599
    %2708 = vmatpush1.msra.mxu0 %v598
    %2709 = vmatprep.subr.mxu0 0.0
    %2710 = vmatpush1.msra.mxu0 0.0
    %2711 = vmatprep.subr.mxu0 0.0
    %2712 = vmatpush1.msra.mxu0 0.0
    %2713 = vmatprep.subr.mxu0 0.0
    %2714 = vmatpush1.msra.mxu0 0.0
    %2715 = vmatprep.subr.mxu0 0.0
    %2716 = vmatpush1.msra.mxu0 0.0
    %2717 = vmatprep.subr.mxu0 0.0
    %2718 = vmatpush1.msra.mxu0 0.0
    %2719 = vmatprep.subr.mxu0 0.0
    %2720 = vmatpush1.msra.mxu0 0.0
    %2721 = vmatprep.subr.mxu0 0.0
    %2722 = vmatpush1.msra.mxu0 0.0
    %2723 = vmatprep.subr.mxu0 0.0
    %2724 = vmatpush1.msra.mxu0 0.0
    %2725 = vmatprep.subr.mxu0 0.0
    %2726 = vmatpush1.msra.mxu0 0.0
    %2727 = vmatprep.subr.mxu0 0.0
    %2728 = vmatpush1.msra.mxu0 0.0
    %2729 = vmatprep.subr.mxu0 0.0
    %2730 = vmatpush1.msra.mxu0 0.0
    %2731 = vmatprep.subr.mxu0 0.0
    %2732 = vmatpush1.msra.mxu0 0.0
    %2733 = vmatprep.subr.mxu0 0.0
    %2734 = vmatpush1.msra.mxu0 0.0
    %2735 = vmatprep.subr.mxu0 0.0
    %2736 = vmatpush1.msra.mxu0 0.0
    %2737 = vmatprep.subr.mxu0 0.0
    %2738 = vmatpush1.msra.mxu0 0.0
    %2739 = vmatprep.subr.mxu0 0.0
    %2740 = vmatpush1.msra.mxu0 0.0
    %2741 = vmatprep.mubr.f32.mxu0 0.0
    %2742 = vmatmul.mubr.f32.gmra.mrb[0].mxu0 %v2605
    %v2743 = vpop.f32.mrb[0].mxu0
    %v2744 = vadd.f32 0.0, %v2743
    %v2745 = vpop.f32.mrb[0].mxu0
    %v2746 = vadd.f32 0.0, %v2745
    %2747 = vdwg.mxu0
    %2748 = vmatprep.subr.mxu0 %v232
    %2749 = vmatpush1.msra.mxu0 %v231
    %2750 = vmatprep.subr.mxu0 %v236
    %2751 = vmatpush1.msra.mxu0 %v235
    %2752 = vmatprep.subr.mxu0 %v240
    %2753 = vmatpush1.msra.mxu0 %v239
    %2754 = vmatprep.subr.mxu0 %v244
    %2755 = vmatpush1.msra.mxu0 %v243
    %2756 = vmatprep.subr.mxu0 %v248
    %2757 = vmatpush1.msra.mxu0 %v247
    %2758 = vmatprep.subr.mxu0 %v252
    %2759 = vmatpush1.msra.mxu0 %v251
    %2760 = vmatprep.subr.mxu0 %v256
    %2761 = vmatpush1.msra.mxu0 %v255
    %2762 = vmatprep.subr.mxu0 %v260
    %2763 = vmatpush1.msra.mxu0 %v259
    %2764 = vmatprep.subr.mxu0 %v264
    %2765 = vmatpush1.msra.mxu0 %v263
    %2766 = vmatprep.subr.mxu0 %v268
    %2767 = vmatpush1.msra.mxu0 %v267
    %2768 = vmatprep.subr.mxu0 %v272
    %2769 = vmatpush1.msra.mxu0 %v271
    %2770 = vmatprep.subr.mxu0 %v276
    %2771 = vmatpush1.msra.mxu0 %v275
    %2772 = vmatprep.subr.mxu0 %v280
    %2773 = vmatpush1.msra.mxu0 %v279
    %2774 = vmatprep.subr.mxu0 %v284
    %2775 = vmatpush1.msra.mxu0 %v283
    %2776 = vmatprep.subr.mxu0 %v288
    %2777 = vmatpush1.msra.mxu0 %v287
    %2778 = vmatprep.subr.mxu0 %v292
    %2779 = vmatpush1.msra.mxu0 %v291
    %2780 = vmatprep.subr.mxu0 0.0
    %2781 = vmatpush1.msra.mxu0 0.0
    %2782 = vmatprep.subr.mxu0 0.0
    %2783 = vmatpush1.msra.mxu0 0.0
    %2784 = vmatprep.subr.mxu0 0.0
    %2785 = vmatpush1.msra.mxu0 0.0
    %2786 = vmatprep.subr.mxu0 0.0
    %2787 = vmatpush1.msra.mxu0 0.0
    %2788 = vmatprep.subr.mxu0 0.0
    %2789 = vmatpush1.msra.mxu0 0.0
    %2790 = vmatprep.subr.mxu0 0.0
    %2791 = vmatpush1.msra.mxu0 0.0
    %2792 = vmatprep.subr.mxu0 0.0
    %2793 = vmatpush1.msra.mxu0 0.0
    %2794 = vmatprep.subr.mxu0 0.0
    %2795 = vmatpush1.msra.mxu0 0.0
    %2796 = vmatprep.subr.mxu0 0.0
    %2797 = vmatpush1.msra.mxu0 0.0
    %2798 = vmatprep.subr.mxu0 0.0
    %2799 = vmatpush1.msra.mxu0 0.0
    %2800 = vmatprep.subr.mxu0 0.0
    %2801 = vmatpush1.msra.mxu0 0.0
    %2802 = vmatprep.subr.mxu0 0.0
    %2803 = vmatpush1.msra.mxu0 0.0
    %2804 = vmatprep.subr.mxu0 0.0
    %2805 = vmatpush1.msra.mxu0 0.0
    %2806 = vmatprep.subr.mxu0 0.0
    %2807 = vmatpush1.msra.mxu0 0.0
    %2808 = vmatprep.subr.mxu0 0.0
    %2809 = vmatpush1.msra.mxu0 0.0
    %2810 = vmatprep.subr.mxu0 0.0
    %2811 = vmatpush1.msra.mxu0 0.0
    %2812 = vmatprep.mubr.f32.mxu0 0.0
    %2813 = vmatmul.mubr.f32.gmra.mrb[0].mxu0 %v2428
    %v2814 = vpop.f32.mrb[0].mxu0
    %v2815 = vadd.f32 %v2673, %v2814
    %v2816 = vpop.f32.mrb[0].mxu0
    %v2817 = vadd.f32 %v2675, %v2816
    %2818 = vdwg.mxu0
    %2819 = vmatprep.subr.mxu0 %v234
    %2820 = vmatpush1.msra.mxu0 %v233
    %2821 = vmatprep.subr.mxu0 %v238
    %2822 = vmatpush1.msra.mxu0 %v237
    %2823 = vmatprep.subr.mxu0 %v242
    %2824 = vmatpush1.msra.mxu0 %v241
    %2825 = vmatprep.subr.mxu0 %v246
    %2826 = vmatpush1.msra.mxu0 %v245
    %2827 = vmatprep.subr.mxu0 %v250
    %2828 = vmatpush1.msra.mxu0 %v249
    %2829 = vmatprep.subr.mxu0 %v254
    %2830 = vmatpush1.msra.mxu0 %v253
    %2831 = vmatprep.subr.mxu0 %v258
    %2832 = vmatpush1.msra.mxu0 %v257
    %2833 = vmatprep.subr.mxu0 %v262
    %2834 = vmatpush1.msra.mxu0 %v261
    %2835 = vmatprep.subr.mxu0 %v266
    %2836 = vmatpush1.msra.mxu0 %v265
    %2837 = vmatprep.subr.mxu0 %v270
    %2838 = vmatpush1.msra.mxu0 %v269
    %2839 = vmatprep.subr.mxu0 %v274
    %2840 = vmatpush1.msra.mxu0 %v273
    %2841 = vmatprep.subr.mxu0 %v278
    %2842 = vmatpush1.msra.mxu0 %v277
    %2843 = vmatprep.subr.mxu0 %v282
    %2844 = vmatpush1.msra.mxu0 %v281
    %2845 = vmatprep.subr.mxu0 %v286
    %2846 = vmatpush1.msra.mxu0 %v285
    %2847 = vmatprep.subr.mxu0 %v290
    %2848 = vmatpush1.msra.mxu0 %v289
    %2849 = vmatprep.subr.mxu0 %v294
    %2850 = vmatpush1.msra.mxu0 %v293
    %2851 = vmatprep.subr.mxu0 0.0
    %2852 = vmatpush1.msra.mxu0 0.0
    %2853 = vmatprep.subr.mxu0 0.0
    %2854 = vmatpush1.msra.mxu0 0.0
    %2855 = vmatprep.subr.mxu0 0.0
    %2856 = vmatpush1.msra.mxu0 0.0
    %2857 = vmatprep.subr.mxu0 0.0
    %2858 = vmatpush1.msra.mxu0 0.0
    %2859 = vmatprep.subr.mxu0 0.0
    %2860 = vmatpush1.msra.mxu0 0.0
    %2861 = vmatprep.subr.mxu0 0.0
    %2862 = vmatpush1.msra.mxu0 0.0
    %2863 = vmatprep.subr.mxu0 0.0
    %2864 = vmatpush1.msra.mxu0 0.0
    %2865 = vmatprep.subr.mxu0 0.0
    %2866 = vmatpush1.msra.mxu0 0.0
    %2867 = vmatprep.subr.mxu0 0.0
    %2868 = vmatpush1.msra.mxu0 0.0
    %2869 = vmatprep.subr.mxu0 0.0
    %2870 = vmatpush1.msra.mxu0 0.0
    %2871 = vmatprep.subr.mxu0 0.0
    %2872 = vmatpush1.msra.mxu0 0.0
    %2873 = vmatprep.subr.mxu0 0.0
    %2874 = vmatpush1.msra.mxu0 0.0
    %2875 = vmatprep.subr.mxu0 0.0
    %2876 = vmatpush1.msra.mxu0 0.0
    %2877 = vmatprep.subr.mxu0 0.0
    %2878 = vmatpush1.msra.mxu0 0.0
    %2879 = vmatprep.subr.mxu0 0.0
    %2880 = vmatpush1.msra.mxu0 0.0
    %2881 = vmatprep.subr.mxu0 0.0
    %2882 = vmatpush1.msra.mxu0 0.0
    %2883 = vmatprep.mubr.f32.mxu0 0.0
    %2884 = vmatmul.mubr.f32.gmra.mrb[0].mxu0 %v2428
    %v2885 = vpop.f32.mrb[0].mxu0
    %v2886 = vadd.f32 %v2744, %v2885
    %v2887 = vpop.f32.mrb[0].mxu0
    %v2888 = vadd.f32 %v2746, %v2887
    %2889 = vdwg.mxu0
    %v2890 = vadd.f32 %v2815, %v889
    %v2891 = vadd.f32 %v2817, %v893
    %v2892 = vadd.f32 %v2886, %v897
    %v2893 = vadd.f32 %v2888, %v901
    %v2894 = vxor.u32 %v2890, 2147483648
    %v2895 = vxor.u32 %v2891, 2147483648
    %v2896 = vxor.u32 %v2892, 2147483648
    %v2897 = vxor.u32 %v2893, 2147483648
    %v2898 = vmul.f32 %v2894, 1.442695
    %v2899 = vpow.pop %v2898
    %v2900 = vmul.f32 %v2895, 1.442695
    %v2901 = vpow.pop %v2900
    %v2902 = vmul.f32 %v2896, 1.442695
    %v2903 = vpow.pop %v2902
    %v2904 = vmul.f32 %v2897, 1.442695
    %v2905 = vpow.pop %v2904
    %v2906 = vadd.f32 %v2899, 1.0
    %v2907 = vadd.f32 %v2901, 1.0
    %v2908 = vadd.f32 %v2903, 1.0
    %v2909 = vadd.f32 %v2905, 1.0
    %v2910 = vrcp.pop %v2906
    %v2911 = vmul.f32 1.0, %v2910
    %v2912 = vrcp.pop %v2907
    %v2913 = vmul.f32 1.0, %v2912
    %v2914 = vrcp.pop %v2908
    %v2915 = vmul.f32 1.0, %v2914
    %v2916 = vrcp.pop %v2909
    %v2917 = vmul.f32 1.0, %v2916
    %v2918 = vmul.f32 %v2915, 2.0
    %v2919 = vsub.f32 %v2918, 1.0
    %v2920 = vmul.f32 %v2913, %v2426
    %v2921 = vmul.f32 %v2911, %v2919
    %v2922 = vadd.f32 %v2920, %v2921
    %v2923 = vtanh.pop %v2922
    %v2924 = vmul.f32 %v2917, %v2923
    %2925 = vmatprep.subr.mxu0 %v296
    %2926 = vmatpush1.msra.mxu0 %v295
    %2927 = vmatprep.subr.mxu0 %v300
    %2928 = vmatpush1.msra.mxu0 %v299
    %2929 = vmatprep.subr.mxu0 %v304
    %2930 = vmatpush1.msra.mxu0 %v303
    %2931 = vmatprep.subr.mxu0 %v308
    %2932 = vmatpush1.msra.mxu0 %v307
    %2933 = vmatprep.subr.mxu0 %v312
    %2934 = vmatpush1.msra.mxu0 %v311
    %2935 = vmatprep.subr.mxu0 %v316
    %2936 = vmatpush1.msra.mxu0 %v315
    %2937 = vmatprep.subr.mxu0 %v320
    %2938 = vmatpush1.msra.mxu0 %v319
    %2939 = vmatprep.subr.mxu0 %v324
    %2940 = vmatpush1.msra.mxu0 %v323
    %2941 = vmatprep.subr.mxu0 %v328
    %2942 = vmatpush1.msra.mxu0 %v327
    %2943 = vmatprep.subr.mxu0 %v332
    %2944 = vmatpush1.msra.mxu0 %v331
    %2945 = vmatprep.subr.mxu0 %v336
    %2946 = vmatpush1.msra.mxu0 %v335
    %2947 = vmatprep.subr.mxu0 %v340
    %2948 = vmatpush1.msra.mxu0 %v339
    %2949 = vmatprep.subr.mxu0 %v344
    %2950 = vmatpush1.msra.mxu0 %v343
    %2951 = vmatprep.subr.mxu0 %v348
    %2952 = vmatpush1.msra.mxu0 %v347
    %2953 = vmatprep.subr.mxu0 %v352
    %2954 = vmatpush1.msra.mxu0 %v351
    %2955 = vmatprep.subr.mxu0 %v356
    %2956 = vmatpush1.msra.mxu0 %v355
    %2957 = vmatprep.subr.mxu0 0.0
    %2958 = vmatpush1.msra.mxu0 0.0
    %2959 = vmatprep.subr.mxu0 0.0
    %2960 = vmatpush1.msra.mxu0 0.0
    %2961 = vmatprep.subr.mxu0 0.0
    %2962 = vmatpush1.msra.mxu0 0.0
    %2963 = vmatprep.subr.mxu0 0.0
    %2964 = vmatpush1.msra.mxu0 0.0
    %2965 = vmatprep.subr.mxu0 0.0
    %2966 = vmatpush1.msra.mxu0 0.0
    %2967 = vmatprep.subr.mxu0 0.0
    %2968 = vmatpush1.msra.mxu0 0.0
    %2969 = vmatprep.subr.mxu0 0.0
    %2970 = vmatpush1.msra.mxu0 0.0
    %2971 = vmatprep.subr.mxu0 0.0
    %2972 = vmatpush1.msra.mxu0 0.0
    %2973 = vmatprep.subr.mxu0 0.0
    %2974 = vmatpush1.msra.mxu0 0.0
    %2975 = vmatprep.subr.mxu0 0.0
    %2976 = vmatpush1.msra.mxu0 0.0
    %2977 = vmatprep.subr.mxu0 0.0
    %2978 = vmatpush1.msra.mxu0 0.0
    %2979 = vmatprep.subr.mxu0 0.0
    %2980 = vmatpush1.msra.mxu0 0.0
    %2981 = vmatprep.subr.mxu0 0.0
    %2982 = vmatpush1.msra.mxu0 0.0
    %2983 = vmatprep.subr.mxu0 0.0
    %2984 = vmatpush1.msra.mxu0 0.0
    %2985 = vmatprep.subr.mxu0 0.0
    %2986 = vmatpush1.msra.mxu0 0.0
    %2987 = vmatprep.subr.mxu0 0.0
    %2988 = vmatpush1.msra.mxu0 0.0
    %2989 = vmatprep.mubr.f32.mxu0 0.0
    %2990 = vmatmul.mubr.f32.gmra.mrb[0].mxu0 %v2605
    %v2991 = vpop.f32.mrb[0].mxu0
    %v2992 = vadd.f32 0.0, %v2991
    %v2993 = vpop.f32.mrb[0].mxu0
    %v2994 = vadd.f32 0.0, %v2993
    %2995 = vdwg.mxu0
    %2996 = vmatprep.subr.mxu0 %v298
    %2997 = vmatpush1.msra.mxu0 %v297
    %2998 = vmatprep.subr.mxu0 %v302
    %2999 = vmatpush1.msra.mxu0 %v301
    %3000 = vmatprep.subr.mxu0 %v306
    %3001 = vmatpush1.msra.mxu0 %v305
    %3002 = vmatprep.subr.mxu0 %v310
    %3003 = vmatpush1.msra.mxu0 %v309
    %3004 = vmatprep.subr.mxu0 %v314
    %3005 = vmatpush1.msra.mxu0 %v313
    %3006 = vmatprep.subr.mxu0 %v318
    %3007 = vmatpush1.msra.mxu0 %v317
    %3008 = vmatprep.subr.mxu0 %v322
    %3009 = vmatpush1.msra.mxu0 %v321
    %3010 = vmatprep.subr.mxu0 %v326
    %3011 = vmatpush1.msra.mxu0 %v325
    %3012 = vmatprep.subr.mxu0 %v330
    %3013 = vmatpush1.msra.mxu0 %v329
    %3014 = vmatprep.subr.mxu0 %v334
    %3015 = vmatpush1.msra.mxu0 %v333
    %3016 = vmatprep.subr.mxu0 %v338
    %3017 = vmatpush1.msra.mxu0 %v337
    %3018 = vmatprep.subr.mxu0 %v342
    %3019 = vmatpush1.msra.mxu0 %v341
    %3020 = vmatprep.subr.mxu0 %v346
    %3021 = vmatpush1.msra.mxu0 %v345
    %3022 = vmatprep.subr.mxu0 %v350
    %3023 = vmatpush1.msra.mxu0 %v349
    %3024 = vmatprep.subr.mxu0 %v354
    %3025 = vmatpush1.msra.mxu0 %v353
    %3026 = vmatprep.subr.mxu0 %v358
    %3027 = vmatpush1.msra.mxu0 %v357
    %3028 = vmatprep.subr.mxu0 0.0
    %3029 = vmatpush1.msra.mxu0 0.0
    %3030 = vmatprep.subr.mxu0 0.0
    %3031 = vmatpush1.msra.mxu0 0.0
    %3032 = vmatprep.subr.mxu0 0.0
    %3033 = vmatpush1.msra.mxu0 0.0
    %3034 = vmatprep.subr.mxu0 0.0
    %3035 = vmatpush1.msra.mxu0 0.0
    %3036 = vmatprep.subr.mxu0 0.0
    %3037 = vmatpush1.msra.mxu0 0.0
    %3038 = vmatprep.subr.mxu0 0.0
    %3039 = vmatpush1.msra.mxu0 0.0
    %3040 = vmatprep.subr.mxu0 0.0
    %3041 = vmatpush1.msra.mxu0 0.0
    %3042 = vmatprep.subr.mxu0 0.0
    %3043 = vmatpush1.msra.mxu0 0.0
    %3044 = vmatprep.subr.mxu0 0.0
    %3045 = vmatpush1.msra.mxu0 0.0
    %3046 = vmatprep.subr.mxu0 0.0
    %3047 = vmatpush1.msra.mxu0 0.0
    %3048 = vmatprep.subr.mxu0 0.0
    %3049 = vmatpush1.msra.mxu0 0.0
    %3050 = vmatprep.subr.mxu0 0.0
    %3051 = vmatpush1.msra.mxu0 0.0
    %3052 = vmatprep.subr.mxu0 0.0
    %3053 = vmatpush1.msra.mxu0 0.0
    %3054 = vmatprep.subr.mxu0 0.0
    %3055 = vmatpush1.msra.mxu0 0.0
    %3056 = vmatprep.subr.mxu0 0.0
    %3057 = vmatpush1.msra.mxu0 0.0
    %3058 = vmatprep.subr.mxu0 0.0
    %3059 = vmatpush1.msra.mxu0 0.0
    %3060 = vmatprep.mubr.f32.mxu0 0.0
    %3061 = vmatmul.mubr.f32.gmra.mrb[0].mxu0 %v2605
    %v3062 = vpop.f32.mrb[0].mxu0
    %v3063 = vadd.f32 0.0, %v3062
    %v3064 = vpop.f32.mrb[0].mxu0
    %v3065 = vadd.f32 0.0, %v3064
    %3066 = vdwg.mxu0
    %v3067 = vadd.f32 %v219, %v2992
    %v3068 = vadd.f32 %v220, %v2994
    %v3069 = vadd.f32 %v221, %v3063
    %v3070 = vadd.f32 %v222, %v3065
    %v3071 = vxor.u32 %v3067, 2147483648
    %v3072 = vxor.u32 %v3068, 2147483648
    %v3073 = vxor.u32 %v3069, 2147483648
    %v3074 = vxor.u32 %v3070, 2147483648
    %v3075 = vmul.f32 %v3071, 1.442695
    %v3076 = vpow.pop %v3075
    %v3077 = vmul.f32 %v3072, 1.442695
    %v3078 = vpow.pop %v3077
    %v3079 = vmul.f32 %v3073, 1.442695
    %v3080 = vpow.pop %v3079
    %v3081 = vmul.f32 %v3074, 1.442695
    %v3082 = vpow.pop %v3081
    %v3083 = vadd.f32 %v3076, 1.0
    %v3084 = vadd.f32 %v3078, 1.0
    %v3085 = vadd.f32 %v3080, 1.0
    %v3086 = vadd.f32 %v3082, 1.0
    %v3087 = vrcp.pop %v3083
    %v3088 = vmul.f32 1.0, %v3087
    %v3089 = vrcp.pop %v3084
    %v3090 = vmul.f32 1.0, %v3089
    %v3091 = vrcp.pop %v3085
    %v3092 = vmul.f32 1.0, %v3091
    %v3093 = vrcp.pop %v3086
    %v3094 = vmul.f32 1.0, %v3093
    %v3095 = vmul.f32 %v3092, 2.0
    %v3096 = vsub.f32 %v3095, 1.0
    %v3097 = vmul.f32 %v3090, %v2603
    %v3098 = vmul.f32 %v3088, %v3096
    %v3099 = vadd.f32 %v3097, %v3098
    %v3100 = vtanh.pop %v3099
    %v3101 = vmul.f32 %v3094, %v3100
    %3102 = vmatprep.subr.mxu0 %v537
    %3103 = vmatpush1.msra.mxu0 %v536
    %3104 = vmatprep.subr.mxu0 %v541
    %3105 = vmatpush1.msra.mxu0 %v540
    %3106 = vmatprep.subr.mxu0 %v545
    %3107 = vmatpush1.msra.mxu0 %v544
    %3108 = vmatprep.subr.mxu0 %v549
    %3109 = vmatpush1.msra.mxu0 %v548
    %3110 = vmatprep.subr.mxu0 %v553
    %3111 = vmatpush1.msra.mxu0 %v552
    %3112 = vmatprep.subr.mxu0 %v557
    %3113 = vmatpush1.msra.mxu0 %v556
    %3114 = vmatprep.subr.mxu0 %v561
    %3115 = vmatpush1.msra.mxu0 %v560
    %3116 = vmatprep.subr.mxu0 %v565
    %3117 = vmatpush1.msra.mxu0 %v564
    %3118 = vmatprep.subr.mxu0 %v569
    %3119 = vmatpush1.msra.mxu0 %v568
    %3120 = vmatprep.subr.mxu0 %v573
    %3121 = vmatpush1.msra.mxu0 %v572
    %3122 = vmatprep.subr.mxu0 %v577
    %3123 = vmatpush1.msra.mxu0 %v576
    %3124 = vmatprep.subr.mxu0 %v581
    %3125 = vmatpush1.msra.mxu0 %v580
    %3126 = vmatprep.subr.mxu0 %v585
    %3127 = vmatpush1.msra.mxu0 %v584
    %3128 = vmatprep.subr.mxu0 %v589
    %3129 = vmatpush1.msra.mxu0 %v588
    %3130 = vmatprep.subr.mxu0 %v593
    %3131 = vmatpush1.msra.mxu0 %v592
    %3132 = vmatprep.subr.mxu0 %v597
    %3133 = vmatpush1.msra.mxu0 %v596
    %3134 = vmatprep.subr.mxu0 0.0
    %3135 = vmatpush1.msra.mxu0 0.0
    %3136 = vmatprep.subr.mxu0 0.0
    %3137 = vmatpush1.msra.mxu0 0.0
    %3138 = vmatprep.subr.mxu0 0.0
    %3139 = vmatpush1.msra.mxu0 0.0
    %3140 = vmatprep.subr.mxu0 0.0
    %3141 = vmatpush1.msra.mxu0 0.0
    %3142 = vmatprep.subr.mxu0 0.0
    %3143 = vmatpush1.msra.mxu0 0.0
    %3144 = vmatprep.subr.mxu0 0.0
    %3145 = vmatpush1.msra.mxu0 0.0
    %3146 = vmatprep.subr.mxu0 0.0
    %3147 = vmatpush1.msra.mxu0 0.0
    %3148 = vmatprep.subr.mxu0 0.0
    %3149 = vmatpush1.msra.mxu0 0.0
    %3150 = vmatprep.subr.mxu0 0.0
    %3151 = vmatpush1.msra.mxu0 0.0
    %3152 = vmatprep.subr.mxu0 0.0
    %3153 = vmatpush1.msra.mxu0 0.0
    %3154 = vmatprep.subr.mxu0 0.0
    %3155 = vmatpush1.msra.mxu0 0.0
    %3156 = vmatprep.subr.mxu0 0.0
    %3157 = vmatpush1.msra.mxu0 0.0
    %3158 = vmatprep.subr.mxu0 0.0
    %3159 = vmatpush1.msra.mxu0 0.0
    %3160 = vmatprep.subr.mxu0 0.0
    %3161 = vmatpush1.msra.mxu0 0.0
    %3162 = vmatprep.subr.mxu0 0.0
    %3163 = vmatpush1.msra.mxu0 0.0
    %3164 = vmatprep.subr.mxu0 0.0
    %3165 = vmatpush1.msra.mxu0 0.0
    %3166 = vmatprep.mubr.f32.mxu0 0.0
    %3167 = vmatmul.mubr.f32.gmra.mrb[0].mxu0 %v3101
    %v3168 = vpop.f32.mrb[0].mxu0
    %v3169 = vadd.f32 0.0, %v3168
    %v3170 = vpop.f32.mrb[0].mxu0
    %v3171 = vadd.f32 0.0, %v3170
    %3172 = vdwg.mxu0
    %3173 = vmatprep.subr.mxu0 %v539
    %3174 = vmatpush1.msra.mxu0 %v538
    %3175 = vmatprep.subr.mxu0 %v543
    %3176 = vmatpush1.msra.mxu0 %v542
    %3177 = vmatprep.subr.mxu0 %v547
    %3178 = vmatpush1.msra.mxu0 %v546
    %3179 = vmatprep.subr.mxu0 %v551
    %3180 = vmatpush1.msra.mxu0 %v550
    %3181 = vmatprep.subr.mxu0 %v555
    %3182 = vmatpush1.msra.mxu0 %v554
    %3183 = vmatprep.subr.mxu0 %v559
    %3184 = vmatpush1.msra.mxu0 %v558
    %3185 = vmatprep.subr.mxu0 %v563
    %3186 = vmatpush1.msra.mxu0 %v562
    %3187 = vmatprep.subr.mxu0 %v567
    %3188 = vmatpush1.msra.mxu0 %v566
    %3189 = vmatprep.subr.mxu0 %v571
    %3190 = vmatpush1.msra.mxu0 %v570
    %3191 = vmatprep.subr.mxu0 %v575
    %3192 = vmatpush1.msra.mxu0 %v574
    %3193 = vmatprep.subr.mxu0 %v579
    %3194 = vmatpush1.msra.mxu0 %v578
    %3195 = vmatprep.subr.mxu0 %v583
    %3196 = vmatpush1.msra.mxu0 %v582
    %3197 = vmatprep.subr.mxu0 %v587
    %3198 = vmatpush1.msra.mxu0 %v586
    %3199 = vmatprep.subr.mxu0 %v591
    %3200 = vmatpush1.msra.mxu0 %v590
    %3201 = vmatprep.subr.mxu0 %v595
    %3202 = vmatpush1.msra.mxu0 %v594
    %3203 = vmatprep.subr.mxu0 %v599
    %3204 = vmatpush1.msra.mxu0 %v598
    %3205 = vmatprep.subr.mxu0 0.0
    %3206 = vmatpush1.msra.mxu0 0.0
    %3207 = vmatprep.subr.mxu0 0.0
    %3208 = vmatpush1.msra.mxu0 0.0
    %3209 = vmatprep.subr.mxu0 0.0
    %3210 = vmatpush1.msra.mxu0 0.0
    %3211 = vmatprep.subr.mxu0 0.0
    %3212 = vmatpush1.msra.mxu0 0.0
    %3213 = vmatprep.subr.mxu0 0.0
    %3214 = vmatpush1.msra.mxu0 0.0
    %3215 = vmatprep.subr.mxu0 0.0
    %3216 = vmatpush1.msra.mxu0 0.0
    %3217 = vmatprep.subr.mxu0 0.0
    %3218 = vmatpush1.msra.mxu0 0.0
    %3219 = vmatprep.subr.mxu0 0.0
    %3220 = vmatpush1.msra.mxu0 0.0
    %3221 = vmatprep.subr.mxu0 0.0
    %3222 = vmatpush1.msra.mxu0 0.0
    %3223 = vmatprep.subr.mxu0 0.0
    %3224 = vmatpush1.msra.mxu0 0.0
    %3225 = vmatprep.subr.mxu0 0.0
    %3226 = vmatpush1.msra.mxu0 0.0
    %3227 = vmatprep.subr.mxu0 0.0
    %3228 = vmatpush1.msra.mxu0 0.0
    %3229 = vmatprep.subr.mxu0 0.0
    %3230 = vmatpush1.msra.mxu0 0.0
    %3231 = vmatprep.subr.mxu0 0.0
    %3232 = vmatpush1.msra.mxu0 0.0
    %3233 = vmatprep.subr.mxu0 0.0
    %3234 = vmatpush1.msra.mxu0 0.0
    %3235 = vmatprep.subr.mxu0 0.0
    %3236 = vmatpush1.msra.mxu0 0.0
    %3237 = vmatprep.mubr.f32.mxu0 0.0
    %3238 = vmatmul.mubr.f32.gmra.mrb[0].mxu0 %v3101
    %v3239 = vpop.f32.mrb[0].mxu0
    %v3240 = vadd.f32 0.0, %v3239
    %v3241 = vpop.f32.mrb[0].mxu0
    %v3242 = vadd.f32 0.0, %v3241
    %3243 = vdwg.mxu0
    %3244 = vmatprep.subr.mxu0 %v232
    %3245 = vmatpush1.msra.mxu0 %v231
    %3246 = vmatprep.subr.mxu0 %v236
    %3247 = vmatpush1.msra.mxu0 %v235
    %3248 = vmatprep.subr.mxu0 %v240
    %3249 = vmatpush1.msra.mxu0 %v239
    %3250 = vmatprep.subr.mxu0 %v244
    %3251 = vmatpush1.msra.mxu0 %v243
    %3252 = vmatprep.subr.mxu0 %v248
    %3253 = vmatpush1.msra.mxu0 %v247
    %3254 = vmatprep.subr.mxu0 %v252
    %3255 = vmatpush1.msra.mxu0 %v251
    %3256 = vmatprep.subr.mxu0 %v256
    %3257 = vmatpush1.msra.mxu0 %v255
    %3258 = vmatprep.subr.mxu0 %v260
    %3259 = vmatpush1.msra.mxu0 %v259
    %3260 = vmatprep.subr.mxu0 %v264
    %3261 = vmatpush1.msra.mxu0 %v263
    %3262 = vmatprep.subr.mxu0 %v268
    %3263 = vmatpush1.msra.mxu0 %v267
    %3264 = vmatprep.subr.mxu0 %v272
    %3265 = vmatpush1.msra.mxu0 %v271
    %3266 = vmatprep.subr.mxu0 %v276
    %3267 = vmatpush1.msra.mxu0 %v275
    %3268 = vmatprep.subr.mxu0 %v280
    %3269 = vmatpush1.msra.mxu0 %v279
    %3270 = vmatprep.subr.mxu0 %v284
    %3271 = vmatpush1.msra.mxu0 %v283
    %3272 = vmatprep.subr.mxu0 %v288
    %3273 = vmatpush1.msra.mxu0 %v287
    %3274 = vmatprep.subr.mxu0 %v292
    %3275 = vmatpush1.msra.mxu0 %v291
    %3276 = vmatprep.subr.mxu0 0.0
    %3277 = vmatpush1.msra.mxu0 0.0
    %3278 = vmatprep.subr.mxu0 0.0
    %3279 = vmatpush1.msra.mxu0 0.0
    %3280 = vmatprep.subr.mxu0 0.0
    %3281 = vmatpush1.msra.mxu0 0.0
    %3282 = vmatprep.subr.mxu0 0.0
    %3283 = vmatpush1.msra.mxu0 0.0
    %3284 = vmatprep.subr.mxu0 0.0
    %3285 = vmatpush1.msra.mxu0 0.0
    %3286 = vmatprep.subr.mxu0 0.0
    %3287 = vmatpush1.msra.mxu0 0.0
    %3288 = vmatprep.subr.mxu0 0.0
    %3289 = vmatpush1.msra.mxu0 0.0
    %3290 = vmatprep.subr.mxu0 0.0
    %3291 = vmatpush1.msra.mxu0 0.0
    %3292 = vmatprep.subr.mxu0 0.0
    %3293 = vmatpush1.msra.mxu0 0.0
    %3294 = vmatprep.subr.mxu0 0.0
    %3295 = vmatpush1.msra.mxu0 0.0
    %3296 = vmatprep.subr.mxu0 0.0
    %3297 = vmatpush1.msra.mxu0 0.0
    %3298 = vmatprep.subr.mxu0 0.0
    %3299 = vmatpush1.msra.mxu0 0.0
    %3300 = vmatprep.subr.mxu0 0.0
    %3301 = vmatpush1.msra.mxu0 0.0
    %3302 = vmatprep.subr.mxu0 0.0
    %3303 = vmatpush1.msra.mxu0 0.0
    %3304 = vmatprep.subr.mxu0 0.0
    %3305 = vmatpush1.msra.mxu0 0.0
    %3306 = vmatprep.subr.mxu0 0.0
    %3307 = vmatpush1.msra.mxu0 0.0
    %3308 = vmatprep.mubr.f32.mxu0 0.0
    %3309 = vmatmul.mubr.f32.gmra.mrb[0].mxu0 %v2924
    %v3310 = vpop.f32.mrb[0].mxu0
    %v3311 = vadd.f32 %v3169, %v3310
    %v3312 = vpop.f32.mrb[0].mxu0
    %v3313 = vadd.f32 %v3171, %v3312
    %3314 = vdwg.mxu0
    %3315 = vmatprep.subr.mxu0 %v234
    %3316 = vmatpush1.msra.mxu0 %v233
    %3317 = vmatprep.subr.mxu0 %v238
    %3318 = vmatpush1.msra.mxu0 %v237
    %3319 = vmatprep.subr.mxu0 %v242
    %3320 = vmatpush1.msra.mxu0 %v241
    %3321 = vmatprep.subr.mxu0 %v246
    %3322 = vmatpush1.msra.mxu0 %v245
    %3323 = vmatprep.subr.mxu0 %v250
    %3324 = vmatpush1.msra.mxu0 %v249
    %3325 = vmatprep.subr.mxu0 %v254
    %3326 = vmatpush1.msra.mxu0 %v253
    %3327 = vmatprep.subr.mxu0 %v258
    %3328 = vmatpush1.msra.mxu0 %v257
    %3329 = vmatprep.subr.mxu0 %v262
    %3330 = vmatpush1.msra.mxu0 %v261
    %3331 = vmatprep.subr.mxu0 %v266
    %3332 = vmatpush1.msra.mxu0 %v265
    %3333 = vmatprep.subr.mxu0 %v270
    %3334 = vmatpush1.msra.mxu0 %v269
    %3335 = vmatprep.subr.mxu0 %v274
    %3336 = vmatpush1.msra.mxu0 %v273
    %3337 = vmatprep.subr.mxu0 %v278
    %3338 = vmatpush1.msra.mxu0 %v277
    %3339 = vmatprep.subr.mxu0 %v282
    %3340 = vmatpush1.msra.mxu0 %v281
    %3341 = vmatprep.subr.mxu0 %v286
    %3342 = vmatpush1.msra.mxu0 %v285
    %3343 = vmatprep.subr.mxu0 %v290
    %3344 = vmatpush1.msra.mxu0 %v289
    %3345 = vmatprep.subr.mxu0 %v294
    %3346 = vmatpush1.msra.mxu0 %v293
    %3347 = vmatprep.subr.mxu0 0.0
    %3348 = vmatpush1.msra.mxu0 0.0
    %3349 = vmatprep.subr.mxu0 0.0
    %3350 = vmatpush1.msra.mxu0 0.0
    %3351 = vmatprep.subr.mxu0 0.0
    %3352 = vmatpush1.msra.mxu0 0.0
    %3353 = vmatprep.subr.mxu0 0.0
    %3354 = vmatpush1.msra.mxu0 0.0
    %3355 = vmatprep.subr.mxu0 0.0
    %3356 = vmatpush1.msra.mxu0 0.0
    %3357 = vmatprep.subr.mxu0 0.0
    %3358 = vmatpush1.msra.mxu0 0.0
    %3359 = vmatprep.subr.mxu0 0.0
    %3360 = vmatpush1.msra.mxu0 0.0
    %3361 = vmatprep.subr.mxu0 0.0
    %3362 = vmatpush1.msra.mxu0 0.0
    %3363 = vmatprep.subr.mxu0 0.0
    %3364 = vmatpush1.msra.mxu0 0.0
    %3365 = vmatprep.subr.mxu0 0.0
    %3366 = vmatpush1.msra.mxu0 0.0
    %3367 = vmatprep.subr.mxu0 0.0
    %3368 = vmatpush1.msra.mxu0 0.0
    %3369 = vmatprep.subr.mxu0 0.0
    %3370 = vmatpush1.msra.mxu0 0.0
    %3371 = vmatprep.subr.mxu0 0.0
    %3372 = vmatpush1.msra.mxu0 0.0
    %3373 = vmatprep.subr.mxu0 0.0
    %3374 = vmatpush1.msra.mxu0 0.0
    %3375 = vmatprep.subr.mxu0 0.0
    %3376 = vmatpush1.msra.mxu0 0.0
    %3377 = vmatprep.subr.mxu0 0.0
    %3378 = vmatpush1.msra.mxu0 0.0
    %3379 = vmatprep.mubr.f32.mxu0 0.0
    %3380 = vmatmul.mubr.f32.gmra.mrb[0].mxu0 %v2924
    %v3381 = vpop.f32.mrb[0].mxu0
    %v3382 = vadd.f32 %v3240, %v3381
    %v3383 = vpop.f32.mrb[0].mxu0
    %v3384 = vadd.f32 %v3242, %v3383
    %3385 = vdwg.mxu0
    %v3386 = vadd.f32 %v3311, %v889
    %v3387 = vadd.f32 %v3313, %v893
    %v3388 = vadd.f32 %v3382, %v897
    %v3389 = vadd.f32 %v3384, %v901
    %v3390 = vxor.u32 %v3386, 2147483648
    %v3391 = vxor.u32 %v3387, 2147483648
    %v3392 = vxor.u32 %v3388, 2147483648
    %v3393 = vxor.u32 %v3389, 2147483648
    %v3394 = vmul.f32 %v3390, 1.442695
    %v3395 = vpow.pop %v3394
    %v3396 = vmul.f32 %v3391, 1.442695
    %v3397 = vpow.pop %v3396
    %v3398 = vmul.f32 %v3392, 1.442695
    %v3399 = vpow.pop %v3398
    %v3400 = vmul.f32 %v3393, 1.442695
    %v3401 = vpow.pop %v3400
    %v3402 = vadd.f32 %v3395, 1.0
    %v3403 = vadd.f32 %v3397, 1.0
    %v3404 = vadd.f32 %v3399, 1.0
    %v3405 = vadd.f32 %v3401, 1.0
    %v3406 = vrcp.pop %v3402
    %v3407 = vmul.f32 1.0, %v3406
    %v3408 = vrcp.pop %v3403
    %v3409 = vmul.f32 1.0, %v3408
    %v3410 = vrcp.pop %v3404
    %v3411 = vmul.f32 1.0, %v3410
    %v3412 = vrcp.pop %v3405
    %v3413 = vmul.f32 1.0, %v3412
    %v3414 = vmul.f32 %v3411, 2.0
    %v3415 = vsub.f32 %v3414, 1.0
    %v3416 = vmul.f32 %v3409, %v2922
    %v3417 = vmul.f32 %v3407, %v3415
    %v3418 = vadd.f32 %v3416, %v3417
    %v3419 = vtanh.pop %v3418
    %v3420 = vmul.f32 %v3413, %v3419
    %3421 = vmatprep.subr.mxu0 %v296
    %3422 = vmatpush1.msra.mxu0 %v295
    %3423 = vmatprep.subr.mxu0 %v300
    %3424 = vmatpush1.msra.mxu0 %v299
    %3425 = vmatprep.subr.mxu0 %v304
    %3426 = vmatpush1.msra.mxu0 %v303
    %3427 = vmatprep.subr.mxu0 %v308
    %3428 = vmatpush1.msra.mxu0 %v307
    %3429 = vmatprep.subr.mxu0 %v312
    %3430 = vmatpush1.msra.mxu0 %v311
    %3431 = vmatprep.subr.mxu0 %v316
    %3432 = vmatpush1.msra.mxu0 %v315
    %3433 = vmatprep.subr.mxu0 %v320
    %3434 = vmatpush1.msra.mxu0 %v319
    %3435 = vmatprep.subr.mxu0 %v324
    %3436 = vmatpush1.msra.mxu0 %v323
    %3437 = vmatprep.subr.mxu0 %v328
    %3438 = vmatpush1.msra.mxu0 %v327
    %3439 = vmatprep.subr.mxu0 %v332
    %3440 = vmatpush1.msra.mxu0 %v331
    %3441 = vmatprep.subr.mxu0 %v336
    %3442 = vmatpush1.msra.mxu0 %v335
    %3443 = vmatprep.subr.mxu0 %v340
    %3444 = vmatpush1.msra.mxu0 %v339
    %3445 = vmatprep.subr.mxu0 %v344
    %3446 = vmatpush1.msra.mxu0 %v343
    %3447 = vmatprep.subr.mxu0 %v348
    %3448 = vmatpush1.msra.mxu0 %v347
    %3449 = vmatprep.subr.mxu0 %v352
    %3450 = vmatpush1.msra.mxu0 %v351
    %3451 = vmatprep.subr.mxu0 %v356
    %3452 = vmatpush1.msra.mxu0 %v355
    %3453 = vmatprep.subr.mxu0 0.0
    %3454 = vmatpush1.msra.mxu0 0.0
    %3455 = vmatprep.subr.mxu0 0.0
    %3456 = vmatpush1.msra.mxu0 0.0
    %3457 = vmatprep.subr.mxu0 0.0
    %3458 = vmatpush1.msra.mxu0 0.0
    %3459 = vmatprep.subr.mxu0 0.0
    %3460 = vmatpush1.msra.mxu0 0.0
    %3461 = vmatprep.subr.mxu0 0.0
    %3462 = vmatpush1.msra.mxu0 0.0
    %3463 = vmatprep.subr.mxu0 0.0
    %3464 = vmatpush1.msra.mxu0 0.0
    %3465 = vmatprep.subr.mxu0 0.0
    %3466 = vmatpush1.msra.mxu0 0.0
    %3467 = vmatprep.subr.mxu0 0.0
    %3468 = vmatpush1.msra.mxu0 0.0
    %3469 = vmatprep.subr.mxu0 0.0
    %3470 = vmatpush1.msra.mxu0 0.0
    %3471 = vmatprep.subr.mxu0 0.0
    %3472 = vmatpush1.msra.mxu0 0.0
    %3473 = vmatprep.subr.mxu0 0.0
    %3474 = vmatpush1.msra.mxu0 0.0
    %3475 = vmatprep.subr.mxu0 0.0
    %3476 = vmatpush1.msra.mxu0 0.0
    %3477 = vmatprep.subr.mxu0 0.0
    %3478 = vmatpush1.msra.mxu0 0.0
    %3479 = vmatprep.subr.mxu0 0.0
    %3480 = vmatpush1.msra.mxu0 0.0
    %3481 = vmatprep.subr.mxu0 0.0
    %3482 = vmatpush1.msra.mxu0 0.0
    %3483 = vmatprep.subr.mxu0 0.0
    %3484 = vmatpush1.msra.mxu0 0.0
    %3485 = vmatprep.mubr.f32.mxu0 0.0
    %3486 = vmatmul.mubr.f32.gmra.mrb[0].mxu0 %v3101
    %v3487 = vpop.f32.mrb[0].mxu0
    %v3488 = vadd.f32 0.0, %v3487
    %v3489 = vpop.f32.mrb[0].mxu0
    %v3490 = vadd.f32 0.0, %v3489
    %3491 = vdwg.mxu0
    %3492 = vmatprep.subr.mxu0 %v298
    %3493 = vmatpush1.msra.mxu0 %v297
    %3494 = vmatprep.subr.mxu0 %v302
    %3495 = vmatpush1.msra.mxu0 %v301
    %3496 = vmatprep.subr.mxu0 %v306
    %3497 = vmatpush1.msra.mxu0 %v305
    %3498 = vmatprep.subr.mxu0 %v310
    %3499 = vmatpush1.msra.mxu0 %v309
    %3500 = vmatprep.subr.mxu0 %v314
    %3501 = vmatpush1.msra.mxu0 %v313
    %3502 = vmatprep.subr.mxu0 %v318
    %3503 = vmatpush1.msra.mxu0 %v317
    %3504 = vmatprep.subr.mxu0 %v322
    %3505 = vmatpush1.msra.mxu0 %v321
    %3506 = vmatprep.subr.mxu0 %v326
    %3507 = vmatpush1.msra.mxu0 %v325
    %3508 = vmatprep.subr.mxu0 %v330
    %3509 = vmatpush1.msra.mxu0 %v329
    %3510 = vmatprep.subr.mxu0 %v334
    %3511 = vmatpush1.msra.mxu0 %v333
    %3512 = vmatprep.subr.mxu0 %v338
    %3513 = vmatpush1.msra.mxu0 %v337
    %3514 = vmatprep.subr.mxu0 %v342
    %3515 = vmatpush1.msra.mxu0 %v341
    %3516 = vmatprep.subr.mxu0 %v346
    %3517 = vmatpush1.msra.mxu0 %v345
    %3518 = vmatprep.subr.mxu0 %v350
    %3519 = vmatpush1.msra.mxu0 %v349
    %3520 = vmatprep.subr.mxu0 %v354
    %3521 = vmatpush1.msra.mxu0 %v353
    %3522 = vmatprep.subr.mxu0 %v358
    %3523 = vmatpush1.msra.mxu0 %v357
    %3524 = vmatprep.subr.mxu0 0.0
    %3525 = vmatpush1.msra.mxu0 0.0
    %3526 = vmatprep.subr.mxu0 0.0
    %3527 = vmatpush1.msra.mxu0 0.0
    %3528 = vmatprep.subr.mxu0 0.0
    %3529 = vmatpush1.msra.mxu0 0.0
    %3530 = vmatprep.subr.mxu0 0.0
    %3531 = vmatpush1.msra.mxu0 0.0
    %3532 = vmatprep.subr.mxu0 0.0
    %3533 = vmatpush1.msra.mxu0 0.0
    %3534 = vmatprep.subr.mxu0 0.0
    %3535 = vmatpush1.msra.mxu0 0.0
    %3536 = vmatprep.subr.mxu0 0.0
    %3537 = vmatpush1.msra.mxu0 0.0
    %3538 = vmatprep.subr.mxu0 0.0
    %3539 = vmatpush1.msra.mxu0 0.0
    %3540 = vmatprep.subr.mxu0 0.0
    %3541 = vmatpush1.msra.mxu0 0.0
    %3542 = vmatprep.subr.mxu0 0.0
    %3543 = vmatpush1.msra.mxu0 0.0
    %3544 = vmatprep.subr.mxu0 0.0
    %3545 = vmatpush1.msra.mxu0 0.0
    %3546 = vmatprep.subr.mxu0 0.0
    %3547 = vmatpush1.msra.mxu0 0.0
    %3548 = vmatprep.subr.mxu0 0.0
    %3549 = vmatpush1.msra.mxu0 0.0
    %3550 = vmatprep.subr.mxu0 0.0
    %3551 = vmatpush1.msra.mxu0 0.0
    %3552 = vmatprep.subr.mxu0 0.0
    %3553 = vmatpush1.msra.mxu0 0.0
    %3554 = vmatprep.subr.mxu0 0.0
    %3555 = vmatpush1.msra.mxu0 0.0
    %3556 = vmatprep.mubr.f32.mxu0 0.0
    %3557 = vmatmul.mubr.f32.gmra.mrb[0].mxu0 %v3101
    %v3558 = vpop.f32.mrb[0].mxu0
    %v3559 = vadd.f32 0.0, %v3558
    %v3560 = vpop.f32.mrb[0].mxu0
    %v3561 = vadd.f32 0.0, %v3560
    %3562 = vdwg.mxu0
    %v3563 = vadd.f32 %v223, %v3488
    %v3564 = vadd.f32 %v224, %v3490
    %v3565 = vadd.f32 %v225, %v3559
    %v3566 = vadd.f32 %v226, %v3561
    %v3567 = vxor.u32 %v3563, 2147483648
    %v3568 = vxor.u32 %v3564, 2147483648
    %v3569 = vxor.u32 %v3565, 2147483648
    %v3570 = vxor.u32 %v3566, 2147483648
    %v3571 = vmul.f32 %v3567, 1.442695
    %v3572 = vpow.pop %v3571
    %v3573 = vmul.f32 %v3568, 1.442695
    %v3574 = vpow.pop %v3573
    %v3575 = vmul.f32 %v3569, 1.442695
    %v3576 = vpow.pop %v3575
    %v3577 = vmul.f32 %v3570, 1.442695
    %v3578 = vpow.pop %v3577
    %v3579 = vadd.f32 %v3572, 1.0
    %v3580 = vadd.f32 %v3574, 1.0
    %v3581 = vadd.f32 %v3576, 1.0
    %v3582 = vadd.f32 %v3578, 1.0
    %v3583 = vrcp.pop %v3579
    %v3584 = vmul.f32 1.0, %v3583
    %v3585 = vrcp.pop %v3580
    %v3586 = vmul.f32 1.0, %v3585
    %v3587 = vrcp.pop %v3581
    %v3588 = vmul.f32 1.0, %v3587
    %v3589 = vrcp.pop %v3582
    %v3590 = vmul.f32 1.0, %v3589
    %v3591 = vmul.f32 %v3588, 2.0
    %v3592 = vsub.f32 %v3591, 1.0
    %v3593 = vmul.f32 %v3586, %v3099
    %v3594 = vmul.f32 %v3584, %v3592
    %v3595 = vadd.f32 %v3593, %v3594
    %v3596 = vtanh.pop %v3595
    %v3597 = vmul.f32 %v3590, %v3596
    %3598 = vmatprep.subr.mxu0 %v537
    %3599 = vmatpush1.msra.mxu0 %v536
    %3600 = vmatprep.subr.mxu0 %v541
    %3601 = vmatpush1.msra.mxu0 %v540
    %3602 = vmatprep.subr.mxu0 %v545
    %3603 = vmatpush1.msra.mxu0 %v544
    %3604 = vmatprep.subr.mxu0 %v549
    %3605 = vmatpush1.msra.mxu0 %v548
    %3606 = vmatprep.subr.mxu0 %v553
    %3607 = vmatpush1.msra.mxu0 %v552
    %3608 = vmatprep.subr.mxu0 %v557
    %3609 = vmatpush1.msra.mxu0 %v556
    %3610 = vmatprep.subr.mxu0 %v561
    %3611 = vmatpush1.msra.mxu0 %v560
    %3612 = vmatprep.subr.mxu0 %v565
    %3613 = vmatpush1.msra.mxu0 %v564
    %3614 = vmatprep.subr.mxu0 %v569
    %3615 = vmatpush1.msra.mxu0 %v568
    %3616 = vmatprep.subr.mxu0 %v573
    %3617 = vmatpush1.msra.mxu0 %v572
    %3618 = vmatprep.subr.mxu0 %v577
    %3619 = vmatpush1.msra.mxu0 %v576
    %3620 = vmatprep.subr.mxu0 %v581
    %3621 = vmatpush1.msra.mxu0 %v580
    %3622 = vmatprep.subr.mxu0 %v585
    %3623 = vmatpush1.msra.mxu0 %v584
    %3624 = vmatprep.subr.mxu0 %v589
    %3625 = vmatpush1.msra.mxu0 %v588
    %3626 = vmatprep.subr.mxu0 %v593
    %3627 = vmatpush1.msra.mxu0 %v592
    %3628 = vmatprep.subr.mxu0 %v597
    %3629 = vmatpush1.msra.mxu0 %v596
    %3630 = vmatprep.subr.mxu0 0.0
    %3631 = vmatpush1.msra.mxu0 0.0
    %3632 = vmatprep.subr.mxu0 0.0
    %3633 = vmatpush1.msra.mxu0 0.0
    %3634 = vmatprep.subr.mxu0 0.0
    %3635 = vmatpush1.msra.mxu0 0.0
    %3636 = vmatprep.subr.mxu0 0.0
    %3637 = vmatpush1.msra.mxu0 0.0
    %3638 = vmatprep.subr.mxu0 0.0
    %3639 = vmatpush1.msra.mxu0 0.0
    %3640 = vmatprep.subr.mxu0 0.0
    %3641 = vmatpush1.msra.mxu0 0.0
    %3642 = vmatprep.subr.mxu0 0.0
    %3643 = vmatpush1.msra.mxu0 0.0
    %3644 = vmatprep.subr.mxu0 0.0
    %3645 = vmatpush1.msra.mxu0 0.0
    %3646 = vmatprep.subr.mxu0 0.0
    %3647 = vmatpush1.msra.mxu0 0.0
    %3648 = vmatprep.subr.mxu0 0.0
    %3649 = vmatpush1.msra.mxu0 0.0
    %3650 = vmatprep.subr.mxu0 0.0
    %3651 = vmatpush1.msra.mxu0 0.0
    %3652 = vmatprep.subr.mxu0 0.0
    %3653 = vmatpush1.msra.mxu0 0.0
    %3654 = vmatprep.subr.mxu0 0.0
    %3655 = vmatpush1.msra.mxu0 0.0
    %3656 = vmatprep.subr.mxu0 0.0
    %3657 = vmatpush1.msra.mxu0 0.0
    %3658 = vmatprep.subr.mxu0 0.0
    %3659 = vmatpush1.msra.mxu0 0.0
    %3660 = vmatprep.subr.mxu0 0.0
    %3661 = vmatpush1.msra.mxu0 0.0
    %3662 = vmatprep.mubr.f32.mxu0 0.0
    %3663 = vmatmul.mubr.f32.gmra.mrb[0].mxu0 %v3597
    %v3664 = vpop.f32.mrb[0].mxu0
    %v3665 = vadd.f32 0.0, %v3664
    %v3666 = vpop.f32.mrb[0].mxu0
    %v3667 = vadd.f32 0.0, %v3666
    %3668 = vdwg.mxu0
    %3669 = vmatprep.subr.mxu0 %v539
    %3670 = vmatpush1.msra.mxu0 %v538
    %3671 = vmatprep.subr.mxu0 %v543
    %3672 = vmatpush1.msra.mxu0 %v542
    %3673 = vmatprep.subr.mxu0 %v547
    %3674 = vmatpush1.msra.mxu0 %v546
    %3675 = vmatprep.subr.mxu0 %v551
    %3676 = vmatpush1.msra.mxu0 %v550
    %3677 = vmatprep.subr.mxu0 %v555
    %3678 = vmatpush1.msra.mxu0 %v554
    %3679 = vmatprep.subr.mxu0 %v559
    %3680 = vmatpush1.msra.mxu0 %v558
    %3681 = vmatprep.subr.mxu0 %v563
    %3682 = vmatpush1.msra.mxu0 %v562
    %3683 = vmatprep.subr.mxu0 %v567
    %3684 = vmatpush1.msra.mxu0 %v566
    %3685 = vmatprep.subr.mxu0 %v571
    %3686 = vmatpush1.msra.mxu0 %v570
    %3687 = vmatprep.subr.mxu0 %v575
    %3688 = vmatpush1.msra.mxu0 %v574
    %3689 = vmatprep.subr.mxu0 %v579
    %3690 = vmatpush1.msra.mxu0 %v578
    %3691 = vmatprep.subr.mxu0 %v583
    %3692 = vmatpush1.msra.mxu0 %v582
    %3693 = vmatprep.subr.mxu0 %v587
    %3694 = vmatpush1.msra.mxu0 %v586
    %3695 = vmatprep.subr.mxu0 %v591
    %3696 = vmatpush1.msra.mxu0 %v590
    %3697 = vmatprep.subr.mxu0 %v595
    %3698 = vmatpush1.msra.mxu0 %v594
    %3699 = vmatprep.subr.mxu0 %v599
    %3700 = vmatpush1.msra.mxu0 %v598
    %3701 = vmatprep.subr.mxu0 0.0
    %3702 = vmatpush1.msra.mxu0 0.0
    %3703 = vmatprep.subr.mxu0 0.0
    %3704 = vmatpush1.msra.mxu0 0.0
    %3705 = vmatprep.subr.mxu0 0.0
    %3706 = vmatpush1.msra.mxu0 0.0
    %3707 = vmatprep.subr.mxu0 0.0
    %3708 = vmatpush1.msra.mxu0 0.0
    %3709 = vmatprep.subr.mxu0 0.0
    %3710 = vmatpush1.msra.mxu0 0.0
    %3711 = vmatprep.subr.mxu0 0.0
    %3712 = vmatpush1.msra.mxu0 0.0
    %3713 = vmatprep.subr.mxu0 0.0
    %3714 = vmatpush1.msra.mxu0 0.0
    %3715 = vmatprep.subr.mxu0 0.0
    %3716 = vmatpush1.msra.mxu0 0.0
    %3717 = vmatprep.subr.mxu0 0.0
    %3718 = vmatpush1.msra.mxu0 0.0
    %3719 = vmatprep.subr.mxu0 0.0
    %3720 = vmatpush1.msra.mxu0 0.0
    %3721 = vmatprep.subr.mxu0 0.0
    %3722 = vmatpush1.msra.mxu0 0.0
    %3723 = vmatprep.subr.mxu0 0.0
    %3724 = vmatpush1.msra.mxu0 0.0
    %3725 = vmatprep.subr.mxu0 0.0
    %3726 = vmatpush1.msra.mxu0 0.0
    %3727 = vmatprep.subr.mxu0 0.0
    %3728 = vmatpush1.msra.mxu0 0.0
    %3729 = vmatprep.subr.mxu0 0.0
    %3730 = vmatpush1.msra.mxu0 0.0
    %3731 = vmatprep.subr.mxu0 0.0
    %3732 = vmatpush1.msra.mxu0 0.0
    %3733 = vmatprep.mubr.f32.mxu0 0.0
    %3734 = vmatmul.mubr.f32.gmra.mrb[0].mxu0 %v3597
    %v3735 = vpop.f32.mrb[0].mxu0
    %v3736 = vadd.f32 0.0, %v3735
    %v3737 = vpop.f32.mrb[0].mxu0
    %v3738 = vadd.f32 0.0, %v3737
    %3739 = vdwg.mxu0
    %3740 = vmatprep.subr.mxu0 %v232
    %3741 = vmatpush1.msra.mxu0 %v231
    %3742 = vmatprep.subr.mxu0 %v236
    %3743 = vmatpush1.msra.mxu0 %v235
    %3744 = vmatprep.subr.mxu0 %v240
    %3745 = vmatpush1.msra.mxu0 %v239
    %3746 = vmatprep.subr.mxu0 %v244
    %3747 = vmatpush1.msra.mxu0 %v243
    %3748 = vmatprep.subr.mxu0 %v248
    %3749 = vmatpush1.msra.mxu0 %v247
    %3750 = vmatprep.subr.mxu0 %v252
    %3751 = vmatpush1.msra.mxu0 %v251
    %3752 = vmatprep.subr.mxu0 %v256
    %3753 = vmatpush1.msra.mxu0 %v255
    %3754 = vmatprep.subr.mxu0 %v260
    %3755 = vmatpush1.msra.mxu0 %v259
    %3756 = vmatprep.subr.mxu0 %v264
    %3757 = vmatpush1.msra.mxu0 %v263
    %3758 = vmatprep.subr.mxu0 %v268
    %3759 = vmatpush1.msra.mxu0 %v267
    %3760 = vmatprep.subr.mxu0 %v272
    %3761 = vmatpush1.msra.mxu0 %v271
    %3762 = vmatprep.subr.mxu0 %v276
    %3763 = vmatpush1.msra.mxu0 %v275
    %3764 = vmatprep.subr.mxu0 %v280
    %3765 = vmatpush1.msra.mxu0 %v279
    %3766 = vmatprep.subr.mxu0 %v284
    %3767 = vmatpush1.msra.mxu0 %v283
    %3768 = vmatprep.subr.mxu0 %v288
    %3769 = vmatpush1.msra.mxu0 %v287
    %3770 = vmatprep.subr.mxu0 %v292
    %3771 = vmatpush1.msra.mxu0 %v291
    %3772 = vmatprep.subr.mxu0 0.0
    %3773 = vmatpush1.msra.mxu0 0.0
    %3774 = vmatprep.subr.mxu0 0.0
    %3775 = vmatpush1.msra.mxu0 0.0
    %3776 = vmatprep.subr.mxu0 0.0
    %3777 = vmatpush1.msra.mxu0 0.0
    %3778 = vmatprep.subr.mxu0 0.0
    %3779 = vmatpush1.msra.mxu0 0.0
    %3780 = vmatprep.subr.mxu0 0.0
    %3781 = vmatpush1.msra.mxu0 0.0
    %3782 = vmatprep.subr.mxu0 0.0
    %3783 = vmatpush1.msra.mxu0 0.0
    %3784 = vmatprep.subr.mxu0 0.0
    %3785 = vmatpush1.msra.mxu0 0.0
    %3786 = vmatprep.subr.mxu0 0.0
    %3787 = vmatpush1.msra.mxu0 0.0
    %3788 = vmatprep.subr.mxu0 0.0
    %3789 = vmatpush1.msra.mxu0 0.0
    %3790 = vmatprep.subr.mxu0 0.0
    %3791 = vmatpush1.msra.mxu0 0.0
    %3792 = vmatprep.subr.mxu0 0.0
    %3793 = vmatpush1.msra.mxu0 0.0
    %3794 = vmatprep.subr.mxu0 0.0
    %3795 = vmatpush1.msra.mxu0 0.0
    %3796 = vmatprep.subr.mxu0 0.0
    %3797 = vmatpush1.msra.mxu0 0.0
    %3798 = vmatprep.subr.mxu0 0.0
    %3799 = vmatpush1.msra.mxu0 0.0
    %3800 = vmatprep.subr.mxu0 0.0
    %3801 = vmatpush1.msra.mxu0 0.0
    %3802 = vmatprep.subr.mxu0 0.0
    %3803 = vmatpush1.msra.mxu0 0.0
    %3804 = vmatprep.mubr.f32.mxu0 0.0
    %3805 = vmatmul.mubr.f32.gmra.mrb[0].mxu0 %v3420
    %v3806 = vpop.f32.mrb[0].mxu0
    %v3807 = vadd.f32 %v3665, %v3806
    %v3808 = vpop.f32.mrb[0].mxu0
    %v3809 = vadd.f32 %v3667, %v3808
    %3810 = vdwg.mxu0
    %3811 = vmatprep.subr.mxu0 %v234
    %3812 = vmatpush1.msra.mxu0 %v233
    %3813 = vmatprep.subr.mxu0 %v238
    %3814 = vmatpush1.msra.mxu0 %v237
    %3815 = vmatprep.subr.mxu0 %v242
    %3816 = vmatpush1.msra.mxu0 %v241
    %3817 = vmatprep.subr.mxu0 %v246
    %3818 = vmatpush1.msra.mxu0 %v245
    %3819 = vmatprep.subr.mxu0 %v250
    %3820 = vmatpush1.msra.mxu0 %v249
    %3821 = vmatprep.subr.mxu0 %v254
    %3822 = vmatpush1.msra.mxu0 %v253
    %3823 = vmatprep.subr.mxu0 %v258
    %3824 = vmatpush1.msra.mxu0 %v257
    %3825 = vmatprep.subr.mxu0 %v262
    %3826 = vmatpush1.msra.mxu0 %v261
    %3827 = vmatprep.subr.mxu0 %v266
    %3828 = vmatpush1.msra.mxu0 %v265
    %3829 = vmatprep.subr.mxu0 %v270
    %3830 = vmatpush1.msra.mxu0 %v269
    %3831 = vmatprep.subr.mxu0 %v274
    %3832 = vmatpush1.msra.mxu0 %v273
    %3833 = vmatprep.subr.mxu0 %v278
    %3834 = vmatpush1.msra.mxu0 %v277
    %3835 = vmatprep.subr.mxu0 %v282
    %3836 = vmatpush1.msra.mxu0 %v281
    %3837 = vmatprep.subr.mxu0 %v286
    %3838 = vmatpush1.msra.mxu0 %v285
    %3839 = vmatprep.subr.mxu0 %v290
    %3840 = vmatpush1.msra.mxu0 %v289
    %3841 = vmatprep.subr.mxu0 %v294
    %3842 = vmatpush1.msra.mxu0 %v293
    %3843 = vmatprep.subr.mxu0 0.0
    %3844 = vmatpush1.msra.mxu0 0.0
    %3845 = vmatprep.subr.mxu0 0.0
    %3846 = vmatpush1.msra.mxu0 0.0
    %3847 = vmatprep.subr.mxu0 0.0
    %3848 = vmatpush1.msra.mxu0 0.0
    %3849 = vmatprep.subr.mxu0 0.0
    %3850 = vmatpush1.msra.mxu0 0.0
    %3851 = vmatprep.subr.mxu0 0.0
    %3852 = vmatpush1.msra.mxu0 0.0
    %3853 = vmatprep.subr.mxu0 0.0
    %3854 = vmatpush1.msra.mxu0 0.0
    %3855 = vmatprep.subr.mxu0 0.0
    %3856 = vmatpush1.msra.mxu0 0.0
    %3857 = vmatprep.subr.mxu0 0.0
    %3858 = vmatpush1.msra.mxu0 0.0
    %3859 = vmatprep.subr.mxu0 0.0
    %3860 = vmatpush1.msra.mxu0 0.0
    %3861 = vmatprep.subr.mxu0 0.0
    %3862 = vmatpush1.msra.mxu0 0.0
    %3863 = vmatprep.subr.mxu0 0.0
    %3864 = vmatpush1.msra.mxu0 0.0
    %3865 = vmatprep.subr.mxu0 0.0
    %3866 = vmatpush1.msra.mxu0 0.0
    %3867 = vmatprep.subr.mxu0 0.0
    %3868 = vmatpush1.msra.mxu0 0.0
    %3869 = vmatprep.subr.mxu0 0.0
    %3870 = vmatpush1.msra.mxu0 0.0
    %3871 = vmatprep.subr.mxu0 0.0
    %3872 = vmatpush1.msra.mxu0 0.0
    %3873 = vmatprep.subr.mxu0 0.0
    %3874 = vmatpush1.msra.mxu0 0.0
    %3875 = vmatprep.mubr.f32.mxu0 0.0
    %3876 = vmatmul.mubr.f32.gmra.mrb[0].mxu0 %v3420
    %v3877 = vpop.f32.mrb[0].mxu0
    %v3878 = vadd.f32 %v3736, %v3877
    %v3879 = vpop.f32.mrb[0].mxu0
    %v3880 = vadd.f32 %v3738, %v3879
    %3881 = vdwg.mxu0
    %v3882 = vadd.f32 %v3807, %v889
    %v3883 = vadd.f32 %v3809, %v893
    %v3884 = vadd.f32 %v3878, %v897
    %v3885 = vadd.f32 %v3880, %v901
    %v3886 = vxor.u32 %v3882, 2147483648
    %v3887 = vxor.u32 %v3883, 2147483648
    %v3888 = vxor.u32 %v3884, 2147483648
    %v3889 = vxor.u32 %v3885, 2147483648
    %v3890 = vmul.f32 %v3886, 1.442695
    %v3891 = vpow.pop %v3890
    %v3892 = vmul.f32 %v3887, 1.442695
    %v3893 = vpow.pop %v3892
    %v3894 = vmul.f32 %v3888, 1.442695
    %v3895 = vpow.pop %v3894
    %v3896 = vmul.f32 %v3889, 1.442695
    %v3897 = vpow.pop %v3896
    %v3898 = vadd.f32 %v3891, 1.0
    %v3899 = vadd.f32 %v3893, 1.0
    %v3900 = vadd.f32 %v3895, 1.0
    %v3901 = vadd.f32 %v3897, 1.0
    %v3902 = vrcp.pop %v3898
    %v3903 = vmul.f32 1.0, %v3902
    %v3904 = vrcp.pop %v3899
    %v3905 = vmul.f32 1.0, %v3904
    %v3906 = vrcp.pop %v3900
    %v3907 = vmul.f32 1.0, %v3906
    %v3908 = vrcp.pop %v3901
    %v3909 = vmul.f32 1.0, %v3908
    %v3910 = vmul.f32 %v3907, 2.0
    %v3911 = vsub.f32 %v3910, 1.0
    %v3912 = vmul.f32 %v3905, %v3418
    %v3913 = vmul.f32 %v3903, %v3911
    %v3914 = vadd.f32 %v3912, %v3913
    %v3915 = vtanh.pop %v3914
    %v3916 = vmul.f32 %v3909, %v3915
    %3917 = vmatprep.subr.mxu0 %v296
    %3918 = vmatpush1.msra.mxu0 %v295
    %3919 = vmatprep.subr.mxu0 %v300
    %3920 = vmatpush1.msra.mxu0 %v299
    %3921 = vmatprep.subr.mxu0 %v304
    %3922 = vmatpush1.msra.mxu0 %v303
    %3923 = vmatprep.subr.mxu0 %v308
    %3924 = vmatpush1.msra.mxu0 %v307
    %3925 = vmatprep.subr.mxu0 %v312
    %3926 = vmatpush1.msra.mxu0 %v311
    %3927 = vmatprep.subr.mxu0 %v316
    %3928 = vmatpush1.msra.mxu0 %v315
    %3929 = vmatprep.subr.mxu0 %v320
    %3930 = vmatpush1.msra.mxu0 %v319
    %3931 = vmatprep.subr.mxu0 %v324
    %3932 = vmatpush1.msra.mxu0 %v323
    %3933 = vmatprep.subr.mxu0 %v328
    %3934 = vmatpush1.msra.mxu0 %v327
    %3935 = vmatprep.subr.mxu0 %v332
    %3936 = vmatpush1.msra.mxu0 %v331
    %3937 = vmatprep.subr.mxu0 %v336
    %3938 = vmatpush1.msra.mxu0 %v335
    %3939 = vmatprep.subr.mxu0 %v340
    %3940 = vmatpush1.msra.mxu0 %v339
    %3941 = vmatprep.subr.mxu0 %v344
    %3942 = vmatpush1.msra.mxu0 %v343
    %3943 = vmatprep.subr.mxu0 %v348
    %3944 = vmatpush1.msra.mxu0 %v347
    %3945 = vmatprep.subr.mxu0 %v352
    %3946 = vmatpush1.msra.mxu0 %v351
    %3947 = vmatprep.subr.mxu0 %v356
    %3948 = vmatpush1.msra.mxu0 %v355
    %3949 = vmatprep.subr.mxu0 0.0
    %3950 = vmatpush1.msra.mxu0 0.0
    %3951 = vmatprep.subr.mxu0 0.0
    %3952 = vmatpush1.msra.mxu0 0.0
    %3953 = vmatprep.subr.mxu0 0.0
    %3954 = vmatpush1.msra.mxu0 0.0
    %3955 = vmatprep.subr.mxu0 0.0
    %3956 = vmatpush1.msra.mxu0 0.0
    %3957 = vmatprep.subr.mxu0 0.0
    %3958 = vmatpush1.msra.mxu0 0.0
    %3959 = vmatprep.subr.mxu0 0.0
    %3960 = vmatpush1.msra.mxu0 0.0
    %3961 = vmatprep.subr.mxu0 0.0
    %3962 = vmatpush1.msra.mxu0 0.0
    %3963 = vmatprep.subr.mxu0 0.0
    %3964 = vmatpush1.msra.mxu0 0.0
    %3965 = vmatprep.subr.mxu0 0.0
    %3966 = vmatpush1.msra.mxu0 0.0
    %3967 = vmatprep.subr.mxu0 0.0
    %3968 = vmatpush1.msra.mxu0 0.0
    %3969 = vmatprep.subr.mxu0 0.0
    %3970 = vmatpush1.msra.mxu0 0.0
    %3971 = vmatprep.subr.mxu0 0.0
    %3972 = vmatpush1.msra.mxu0 0.0
    %3973 = vmatprep.subr.mxu0 0.0
    %3974 = vmatpush1.msra.mxu0 0.0
    %3975 = vmatprep.subr.mxu0 0.0
    %3976 = vmatpush1.msra.mxu0 0.0
    %3977 = vmatprep.subr.mxu0 0.0
    %3978 = vmatpush1.msra.mxu0 0.0
    %3979 = vmatprep.subr.mxu0 0.0
    %3980 = vmatpush1.msra.mxu0 0.0
    %3981 = vmatprep.mubr.f32.mxu0 0.0
    %3982 = vmatmul.mubr.f32.gmra.mrb[0].mxu0 %v3597
    %v3983 = vpop.f32.mrb[0].mxu0
    %v3984 = vadd.f32 0.0, %v3983
    %v3985 = vpop.f32.mrb[0].mxu0
    %v3986 = vadd.f32 0.0, %v3985
    %3987 = vdwg.mxu0
    %3988 = vmatprep.subr.mxu0 %v298
    %3989 = vmatpush1.msra.mxu0 %v297
    %3990 = vmatprep.subr.mxu0 %v302
    %3991 = vmatpush1.msra.mxu0 %v301
    %3992 = vmatprep.subr.mxu0 %v306
    %3993 = vmatpush1.msra.mxu0 %v305
    %3994 = vmatprep.subr.mxu0 %v310
    %3995 = vmatpush1.msra.mxu0 %v309
    %3996 = vmatprep.subr.mxu0 %v314
    %3997 = vmatpush1.msra.mxu0 %v313
    %3998 = vmatprep.subr.mxu0 %v318
    %3999 = vmatpush1.msra.mxu0 %v317
    %4000 = vmatprep.subr.mxu0 %v322
    %4001 = vmatpush1.msra.mxu0 %v321
    %4002 = vmatprep.subr.mxu0 %v326
    %4003 = vmatpush1.msra.mxu0 %v325
    %4004 = vmatprep.subr.mxu0 %v330
    %4005 = vmatpush1.msra.mxu0 %v329
    %4006 = vmatprep.subr.mxu0 %v334
    %4007 = vmatpush1.msra.mxu0 %v333
    %4008 = vmatprep.subr.mxu0 %v338
    %4009 = vmatpush1.msra.mxu0 %v337
    %4010 = vmatprep.subr.mxu0 %v342
    %4011 = vmatpush1.msra.mxu0 %v341
    %4012 = vmatprep.subr.mxu0 %v346
    %4013 = vmatpush1.msra.mxu0 %v345
    %4014 = vmatprep.subr.mxu0 %v350
    %4015 = vmatpush1.msra.mxu0 %v349
    %4016 = vmatprep.subr.mxu0 %v354
    %4017 = vmatpush1.msra.mxu0 %v353
    %4018 = vmatprep.subr.mxu0 %v358
    %4019 = vmatpush1.msra.mxu0 %v357
    %4020 = vmatprep.subr.mxu0 0.0
    %4021 = vmatpush1.msra.mxu0 0.0
    %4022 = vmatprep.subr.mxu0 0.0
    %4023 = vmatpush1.msra.mxu0 0.0
    %4024 = vmatprep.subr.mxu0 0.0
    %4025 = vmatpush1.msra.mxu0 0.0
    %4026 = vmatprep.subr.mxu0 0.0
    %4027 = vmatpush1.msra.mxu0 0.0
    %4028 = vmatprep.subr.mxu0 0.0
    %4029 = vmatpush1.msra.mxu0 0.0
    %4030 = vmatprep.subr.mxu0 0.0
    %4031 = vmatpush1.msra.mxu0 0.0
    %4032 = vmatprep.subr.mxu0 0.0
    %4033 = vmatpush1.msra.mxu0 0.0
    %4034 = vmatprep.subr.mxu0 0.0
    %4035 = vmatpush1.msra.mxu0 0.0
    %4036 = vmatprep.subr.mxu0 0.0
    %4037 = vmatpush1.msra.mxu0 0.0
    %4038 = vmatprep.subr.mxu0 0.0
    %4039 = vmatpush1.msra.mxu0 0.0
    %4040 = vmatprep.subr.mxu0 0.0
    %4041 = vmatpush1.msra.mxu0 0.0
    %4042 = vmatprep.subr.mxu0 0.0
    %4043 = vmatpush1.msra.mxu0 0.0
    %4044 = vmatprep.subr.mxu0 0.0
    %4045 = vmatpush1.msra.mxu0 0.0
    %4046 = vmatprep.subr.mxu0 0.0
    %4047 = vmatpush1.msra.mxu0 0.0
    %4048 = vmatprep.subr.mxu0 0.0
    %4049 = vmatpush1.msra.mxu0 0.0
    %4050 = vmatprep.subr.mxu0 0.0
    %4051 = vmatpush1.msra.mxu0 0.0
    %4052 = vmatprep.mubr.f32.mxu0 0.0
    %4053 = vmatmul.mubr.f32.gmra.mrb[0].mxu0 %v3597
    %v4054 = vpop.f32.mrb[0].mxu0
    %v4055 = vadd.f32 0.0, %v4054
    %v4056 = vpop.f32.mrb[0].mxu0
    %v4057 = vadd.f32 0.0, %v4056
    %4058 = vdwg.mxu0
    %v4059 = vadd.f32 %v227, %v3984
    %v4060 = vadd.f32 %v228, %v3986
    %v4061 = vadd.f32 %v229, %v4055
    %v4062 = vadd.f32 %v230, %v4057
    %v4063 = vxor.u32 %v4059, 2147483648
    %v4064 = vxor.u32 %v4060, 2147483648
    %v4065 = vxor.u32 %v4061, 2147483648
    %v4066 = vxor.u32 %v4062, 2147483648
    %v4067 = vmul.f32 %v4063, 1.442695
    %v4068 = vpow.pop %v4067
    %v4069 = vmul.f32 %v4064, 1.442695
    %v4070 = vpow.pop %v4069
    %v4071 = vmul.f32 %v4065, 1.442695
    %v4072 = vpow.pop %v4071
    %v4073 = vmul.f32 %v4066, 1.442695
    %v4074 = vpow.pop %v4073
    %v4075 = vadd.f32 %v4068, 1.0
    %v4076 = vadd.f32 %v4070, 1.0
    %v4077 = vadd.f32 %v4072, 1.0
    %v4078 = vadd.f32 %v4074, 1.0
    %v4079 = vrcp.pop %v4075
    %v4080 = vmul.f32 1.0, %v4079
    %v4081 = vrcp.pop %v4076
    %v4082 = vmul.f32 1.0, %v4081
    %v4083 = vrcp.pop %v4077
    %v4084 = vmul.f32 1.0, %v4083
    %v4085 = vrcp.pop %v4078
    %v4086 = vmul.f32 1.0, %v4085
    %v4087 = vmul.f32 %v4084, 2.0
    %v4088 = vsub.f32 %v4087, 1.0
    %v4089 = vmul.f32 %v4082, %v3595
    %v4090 = vmul.f32 %v4080, %v4088
    %v4091 = vadd.f32 %v4089, %v4090
    %v4092 = vtanh.pop %v4091
    %v4093 = vmul.f32 %v4086, %v4092
    %4094 = vmatprep.subr.mxu0 %v537
    %4095 = vmatpush1.msra.mxu0 %v536
    %4096 = vmatprep.subr.mxu0 %v541
    %4097 = vmatpush1.msra.mxu0 %v540
    %4098 = vmatprep.subr.mxu0 %v545
    %4099 = vmatpush1.msra.mxu0 %v544
    %4100 = vmatprep.subr.mxu0 %v549
    %4101 = vmatpush1.msra.mxu0 %v548
    %4102 = vmatprep.subr.mxu0 %v553
    %4103 = vmatpush1.msra.mxu0 %v552
    %4104 = vmatprep.subr.mxu0 %v557
    %4105 = vmatpush1.msra.mxu0 %v556
    %4106 = vmatprep.subr.mxu0 %v561
    %4107 = vmatpush1.msra.mxu0 %v560
    %4108 = vmatprep.subr.mxu0 %v565
    %4109 = vmatpush1.msra.mxu0 %v564
    %4110 = vmatprep.subr.mxu0 %v569
    %4111 = vmatpush1.msra.mxu0 %v568
    %4112 = vmatprep.subr.mxu0 %v573
    %4113 = vmatpush1.msra.mxu0 %v572
    %4114 = vmatprep.subr.mxu0 %v577
    %4115 = vmatpush1.msra.mxu0 %v576
    %4116 = vmatprep.subr.mxu0 %v581
    %4117 = vmatpush1.msra.mxu0 %v580
    %4118 = vmatprep.subr.mxu0 %v585
    %4119 = vmatpush1.msra.mxu0 %v584
    %4120 = vmatprep.subr.mxu0 %v589
    %4121 = vmatpush1.msra.mxu0 %v588
    %4122 = vmatprep.subr.mxu0 %v593
    %4123 = vmatpush1.msra.mxu0 %v592
    %4124 = vmatprep.subr.mxu0 %v597
    %4125 = vmatpush1.msra.mxu0 %v596
    %4126 = vmatprep.subr.mxu0 0.0
    %4127 = vmatpush1.msra.mxu0 0.0
    %4128 = vmatprep.subr.mxu0 0.0
    %4129 = vmatpush1.msra.mxu0 0.0
    %4130 = vmatprep.subr.mxu0 0.0
    %4131 = vmatpush1.msra.mxu0 0.0
    %4132 = vmatprep.subr.mxu0 0.0
    %4133 = vmatpush1.msra.mxu0 0.0
    %4134 = vmatprep.subr.mxu0 0.0
    %4135 = vmatpush1.msra.mxu0 0.0
    %4136 = vmatprep.subr.mxu0 0.0
    %4137 = vmatpush1.msra.mxu0 0.0
    %4138 = vmatprep.subr.mxu0 0.0
    %4139 = vmatpush1.msra.mxu0 0.0
    %4140 = vmatprep.subr.mxu0 0.0
    %4141 = vmatpush1.msra.mxu0 0.0
    %4142 = vmatprep.subr.mxu0 0.0
    %4143 = vmatpush1.msra.mxu0 0.0
    %4144 = vmatprep.subr.mxu0 0.0
    %4145 = vmatpush1.msra.mxu0 0.0
    %4146 = vmatprep.subr.mxu0 0.0
    %4147 = vmatpush1.msra.mxu0 0.0
    %4148 = vmatprep.subr.mxu0 0.0
    %4149 = vmatpush1.msra.mxu0 0.0
    %4150 = vmatprep.subr.mxu0 0.0
    %4151 = vmatpush1.msra.mxu0 0.0
    %4152 = vmatprep.subr.mxu0 0.0
    %4153 = vmatpush1.msra.mxu0 0.0
    %4154 = vmatprep.subr.mxu0 0.0
    %4155 = vmatpush1.msra.mxu0 0.0
    %4156 = vmatprep.subr.mxu0 0.0
    %4157 = vmatpush1.msra.mxu0 0.0
    %4158 = vmatprep.mubr.f32.mxu0 0.0
    %4159 = vmatmul.mubr.f32.gmra.mrb[0].mxu0 %v4093
    %v4160 = vpop.f32.mrb[0].mxu0
    %v4161 = vadd.f32 0.0, %v4160
    %v4162 = vpop.f32.mrb[0].mxu0
    %v4163 = vadd.f32 0.0, %v4162
    %4164 = vdwg.mxu0
    %4165 = vmatprep.subr.mxu0 %v539
    %4166 = vmatpush1.msra.mxu0 %v538
    %4167 = vmatprep.subr.mxu0 %v543
    %4168 = vmatpush1.msra.mxu0 %v542
    %4169 = vmatprep.subr.mxu0 %v547
    %4170 = vmatpush1.msra.mxu0 %v546
    %4171 = vmatprep.subr.mxu0 %v551
    %4172 = vmatpush1.msra.mxu0 %v550
    %4173 = vmatprep.subr.mxu0 %v555
    %4174 = vmatpush1.msra.mxu0 %v554
    %4175 = vmatprep.subr.mxu0 %v559
    %4176 = vmatpush1.msra.mxu0 %v558
    %4177 = vmatprep.subr.mxu0 %v563
    %4178 = vmatpush1.msra.mxu0 %v562
    %4179 = vmatprep.subr.mxu0 %v567
    %4180 = vmatpush1.msra.mxu0 %v566
    %4181 = vmatprep.subr.mxu0 %v571
    %4182 = vmatpush1.msra.mxu0 %v570
    %4183 = vmatprep.subr.mxu0 %v575
    %4184 = vmatpush1.msra.mxu0 %v574
    %4185 = vmatprep.subr.mxu0 %v579
    %4186 = vmatpush1.msra.mxu0 %v578
    %4187 = vmatprep.subr.mxu0 %v583
    %4188 = vmatpush1.msra.mxu0 %v582
    %4189 = vmatprep.subr.mxu0 %v587
    %4190 = vmatpush1.msra.mxu0 %v586
    %4191 = vmatprep.subr.mxu0 %v591
    %4192 = vmatpush1.msra.mxu0 %v590
    %4193 = vmatprep.subr.mxu0 %v595
    %4194 = vmatpush1.msra.mxu0 %v594
    %4195 = vmatprep.subr.mxu0 %v599
    %4196 = vmatpush1.msra.mxu0 %v598
    %4197 = vmatprep.subr.mxu0 0.0
    %4198 = vmatpush1.msra.mxu0 0.0
    %4199 = vmatprep.subr.mxu0 0.0
    %4200 = vmatpush1.msra.mxu0 0.0
    %4201 = vmatprep.subr.mxu0 0.0
    %4202 = vmatpush1.msra.mxu0 0.0
    %4203 = vmatprep.subr.mxu0 0.0
    %4204 = vmatpush1.msra.mxu0 0.0
    %4205 = vmatprep.subr.mxu0 0.0
    %4206 = vmatpush1.msra.mxu0 0.0
    %4207 = vmatprep.subr.mxu0 0.0
    %4208 = vmatpush1.msra.mxu0 0.0
    %4209 = vmatprep.subr.mxu0 0.0
    %4210 = vmatpush1.msra.mxu0 0.0
    %4211 = vmatprep.subr.mxu0 0.0
    %4212 = vmatpush1.msra.mxu0 0.0
    %4213 = vmatprep.subr.mxu0 0.0
    %4214 = vmatpush1.msra.mxu0 0.0
    %4215 = vmatprep.subr.mxu0 0.0
    %4216 = vmatpush1.msra.mxu0 0.0
    %4217 = vmatprep.subr.mxu0 0.0
    %4218 = vmatpush1.msra.mxu0 0.0
    %4219 = vmatprep.subr.mxu0 0.0
    %4220 = vmatpush1.msra.mxu0 0.0
    %4221 = vmatprep.subr.mxu0 0.0
    %4222 = vmatpush1.msra.mxu0 0.0
    %4223 = vmatprep.subr.mxu0 0.0
    %4224 = vmatpush1.msra.mxu0 0.0
    %4225 = vmatprep.subr.mxu0 0.0
    %4226 = vmatpush1.msra.mxu0 0.0
    %4227 = vmatprep.subr.mxu0 0.0
    %4228 = vmatpush1.msra.mxu0 0.0
    %4229 = vmatprep.mubr.f32.mxu0 0.0
    %4230 = vmatmul.mubr.f32.gmra.mrb[0].mxu0 %v4093
    %v4231 = vpop.f32.mrb[0].mxu0
    %v4232 = vadd.f32 0.0, %v4231
    %v4233 = vpop.f32.mrb[0].mxu0
    %v4234 = vadd.f32 0.0, %v4233
    %4235 = vdwg.mxu0
    %4236 = vmatprep.subr.mxu0 %v232
    %4237 = vmatpush1.msra.mxu0 %v231
    %4238 = vmatprep.subr.mxu0 %v236
    %4239 = vmatpush1.msra.mxu0 %v235
    %4240 = vmatprep.subr.mxu0 %v240
    %4241 = vmatpush1.msra.mxu0 %v239
    %4242 = vmatprep.subr.mxu0 %v244
    %4243 = vmatpush1.msra.mxu0 %v243
    %4244 = vmatprep.subr.mxu0 %v248
    %4245 = vmatpush1.msra.mxu0 %v247
    %4246 = vmatprep.subr.mxu0 %v252
    %4247 = vmatpush1.msra.mxu0 %v251
    %4248 = vmatprep.subr.mxu0 %v256
    %4249 = vmatpush1.msra.mxu0 %v255
    %4250 = vmatprep.subr.mxu0 %v260
    %4251 = vmatpush1.msra.mxu0 %v259
    %4252 = vmatprep.subr.mxu0 %v264
    %4253 = vmatpush1.msra.mxu0 %v263
    %4254 = vmatprep.subr.mxu0 %v268
    %4255 = vmatpush1.msra.mxu0 %v267
    %4256 = vmatprep.subr.mxu0 %v272
    %4257 = vmatpush1.msra.mxu0 %v271
    %4258 = vmatprep.subr.mxu0 %v276
    %4259 = vmatpush1.msra.mxu0 %v275
    %4260 = vmatprep.subr.mxu0 %v280
    %4261 = vmatpush1.msra.mxu0 %v279
    %4262 = vmatprep.subr.mxu0 %v284
    %4263 = vmatpush1.msra.mxu0 %v283
    %4264 = vmatprep.subr.mxu0 %v288
    %4265 = vmatpush1.msra.mxu0 %v287
    %4266 = vmatprep.subr.mxu0 %v292
    %4267 = vmatpush1.msra.mxu0 %v291
    %4268 = vmatprep.subr.mxu0 0.0
    %4269 = vmatpush1.msra.mxu0 0.0
    %4270 = vmatprep.subr.mxu0 0.0
    %4271 = vmatpush1.msra.mxu0 0.0
    %4272 = vmatprep.subr.mxu0 0.0
    %4273 = vmatpush1.msra.mxu0 0.0
    %4274 = vmatprep.subr.mxu0 0.0
    %4275 = vmatpush1.msra.mxu0 0.0
    %4276 = vmatprep.subr.mxu0 0.0
    %4277 = vmatpush1.msra.mxu0 0.0
    %4278 = vmatprep.subr.mxu0 0.0
    %4279 = vmatpush1.msra.mxu0 0.0
    %4280 = vmatprep.subr.mxu0 0.0
    %4281 = vmatpush1.msra.mxu0 0.0
    %4282 = vmatprep.subr.mxu0 0.0
    %4283 = vmatpush1.msra.mxu0 0.0
    %4284 = vmatprep.subr.mxu0 0.0
    %4285 = vmatpush1.msra.mxu0 0.0
    %4286 = vmatprep.subr.mxu0 0.0
    %4287 = vmatpush1.msra.mxu0 0.0
    %4288 = vmatprep.subr.mxu0 0.0
    %4289 = vmatpush1.msra.mxu0 0.0
    %4290 = vmatprep.subr.mxu0 0.0
    %4291 = vmatpush1.msra.mxu0 0.0
    %4292 = vmatprep.subr.mxu0 0.0
    %4293 = vmatpush1.msra.mxu0 0.0
    %4294 = vmatprep.subr.mxu0 0.0
    %4295 = vmatpush1.msra.mxu0 0.0
    %4296 = vmatprep.subr.mxu0 0.0
    %4297 = vmatpush1.msra.mxu0 0.0
    %4298 = vmatprep.subr.mxu0 0.0
    %4299 = vmatpush1.msra.mxu0 0.0
    %4300 = vmatprep.mubr.f32.mxu0 0.0
    %4301 = vmatmul.mubr.f32.gmra.mrb[0].mxu0 %v3916
    %v4302 = vpop.f32.mrb[0].mxu0
    %v4303 = vadd.f32 %v4161, %v4302
    %v4304 = vpop.f32.mrb[0].mxu0
    %v4305 = vadd.f32 %v4163, %v4304
    %4306 = vdwg.mxu0
    %4307 = vmatprep.subr.mxu0 %v234
    %4308 = vmatpush1.msra.mxu0 %v233
    %4309 = vmatprep.subr.mxu0 %v238
    %4310 = vmatpush1.msra.mxu0 %v237
    %4311 = vmatprep.subr.mxu0 %v242
    %4312 = vmatpush1.msra.mxu0 %v241
    %4313 = vmatprep.subr.mxu0 %v246
    %4314 = vmatpush1.msra.mxu0 %v245
    %4315 = vmatprep.subr.mxu0 %v250
    %4316 = vmatpush1.msra.mxu0 %v249
    %4317 = vmatprep.subr.mxu0 %v254
    %4318 = vmatpush1.msra.mxu0 %v253
    %4319 = vmatprep.subr.mxu0 %v258
    %4320 = vmatpush1.msra.mxu0 %v257
    %4321 = vmatprep.subr.mxu0 %v262
    %4322 = vmatpush1.msra.mxu0 %v261
    %4323 = vmatprep.subr.mxu0 %v266
    %4324 = vmatpush1.msra.mxu0 %v265
    %4325 = vmatprep.subr.mxu0 %v270
    %4326 = vmatpush1.msra.mxu0 %v269
    %4327 = vmatprep.subr.mxu0 %v274
    %4328 = vmatpush1.msra.mxu0 %v273
    %4329 = vmatprep.subr.mxu0 %v278
    %4330 = vmatpush1.msra.mxu0 %v277
    %4331 = vmatprep.subr.mxu0 %v282
    %4332 = vmatpush1.msra.mxu0 %v281
    %4333 = vmatprep.subr.mxu0 %v286
    %4334 = vmatpush1.msra.mxu0 %v285
    %4335 = vmatprep.subr.mxu0 %v290
    %4336 = vmatpush1.msra.mxu0 %v289
    %4337 = vmatprep.subr.mxu0 %v294
    %4338 = vmatpush1.msra.mxu0 %v293
    %4339 = vmatprep.subr.mxu0 0.0
    %4340 = vmatpush1.msra.mxu0 0.0
    %4341 = vmatprep.subr.mxu0 0.0
    %4342 = vmatpush1.msra.mxu0 0.0
    %4343 = vmatprep.subr.mxu0 0.0
    %4344 = vmatpush1.msra.mxu0 0.0
    %4345 = vmatprep.subr.mxu0 0.0
    %4346 = vmatpush1.msra.mxu0 0.0
    %4347 = vmatprep.subr.mxu0 0.0
    %4348 = vmatpush1.msra.mxu0 0.0
    %4349 = vmatprep.subr.mxu0 0.0
    %4350 = vmatpush1.msra.mxu0 0.0
    %4351 = vmatprep.subr.mxu0 0.0
    %4352 = vmatpush1.msra.mxu0 0.0
    %4353 = vmatprep.subr.mxu0 0.0
    %4354 = vmatpush1.msra.mxu0 0.0
    %4355 = vmatprep.subr.mxu0 0.0
    %4356 = vmatpush1.msra.mxu0 0.0
    %4357 = vmatprep.subr.mxu0 0.0
    %4358 = vmatpush1.msra.mxu0 0.0
    %4359 = vmatprep.subr.mxu0 0.0
    %4360 = vmatpush1.msra.mxu0 0.0
    %4361 = vmatprep.subr.mxu0 0.0
    %4362 = vmatpush1.msra.mxu0 0.0
    %4363 = vmatprep.subr.mxu0 0.0
    %4364 = vmatpush1.msra.mxu0 0.0
    %4365 = vmatprep.subr.mxu0 0.0
    %4366 = vmatpush1.msra.mxu0 0.0
    %4367 = vmatprep.subr.mxu0 0.0
    %4368 = vmatpush1.msra.mxu0 0.0
    %4369 = vmatprep.subr.mxu0 0.0
    %4370 = vmatpush1.msra.mxu0 0.0
    %4371 = vmatprep.mubr.f32.mxu0 0.0
    %4372 = vmatmul.mubr.f32.gmra.mrb[0].mxu0 %v3916
    %v4373 = vpop.f32.mrb[0].mxu0
    %v4374 = vadd.f32 %v4232, %v4373
    %v4375 = vpop.f32.mrb[0].mxu0
    %v4376 = vadd.f32 %v4234, %v4375
    %4377 = vdwg.mxu0
    %v4378 = vadd.f32 %v4303, %v889
    %v4379 = vadd.f32 %v4305, %v893
    %v4380 = vadd.f32 %v4374, %v897
    %v4381 = vadd.f32 %v4376, %v901
    %v4382 = vxor.u32 %v4378, 2147483648
    %v4383 = vxor.u32 %v4379, 2147483648
    %v4384 = vxor.u32 %v4380, 2147483648
    %v4385 = vxor.u32 %v4381, 2147483648
    %v4386 = vmul.f32 %v4382, 1.442695
    %v4387 = vpow.pop %v4386
    %v4388 = vmul.f32 %v4383, 1.442695
    %v4389 = vpow.pop %v4388
    %v4390 = vmul.f32 %v4384, 1.442695
    %v4391 = vpow.pop %v4390
    %v4392 = vmul.f32 %v4385, 1.442695
    %v4393 = vpow.pop %v4392
    %v4394 = vadd.f32 %v4387, 1.0
    %v4395 = vadd.f32 %v4389, 1.0
    %v4396 = vadd.f32 %v4391, 1.0
    %v4397 = vadd.f32 %v4393, 1.0
    %v4398 = vrcp.pop %v4394
    %v4399 = vmul.f32 1.0, %v4398
    %v4400 = vrcp.pop %v4395
    %v4401 = vmul.f32 1.0, %v4400
    %v4402 = vrcp.pop %v4396
    %v4403 = vmul.f32 1.0, %v4402
    %v4404 = vrcp.pop %v4397
    %v4405 = vmul.f32 1.0, %v4404
    %v4406 = vmul.f32 %v4403, 2.0
    %v4407 = vsub.f32 %v4406, 1.0
    %v4408 = vmul.f32 %v4401, %v3914
    %v4409 = vmul.f32 %v4399, %v4407
    %v4410 = vadd.f32 %v4408, %v4409
    %v4411 = vtanh.pop %v4410
    %v4412 = vmul.f32 %v4405, %v4411
    %v4413 = vld [vmem:[%s7] sm:$0x1]
    %v4415 = vlaneseq
    %v4416 = vshrl.u32 %v4415, 7
    %v4417 = vsub.s32 0, %v4416
    %v4418 = vrot.slane %v4413, %v4417
    %v4420 = vmul.f32 %v940, %v4418
    %v4421 = vmul.f32 %v1436, %v4418
    %v4422 = vmul.f32 %v1932, %v4418
    %v4423 = vmul.f32 %v2428, %v4418
    %v4424 = vmul.f32 %v2924, %v4418
    %v4425 = vmul.f32 %v3420, %v4418
    %v4426 = vmul.f32 %v3916, %v4418
    %v4427 = vmul.f32 %v4412, %v4418
    %vm4428 = vcmask 1041408
    %v4429 = vsel %vm4428, %v4420, 0.0
    %4430 = vadd.xlane.f32.xlu0 %v4429
    %v4431 = vpop.xlane.xlu0 %4430
    %v4432 = vsel %vm4428, %v4421, 0.0
    %4433 = vadd.xlane.f32.xlu0 %v4432
    %v4434 = vpop.xlane.xlu0 %4433
    %v4435 = vsel %vm4428, %v4422, 0.0
    %4436 = vadd.xlane.f32.xlu0 %v4435
    %v4437 = vpop.xlane.xlu0 %4436
    %v4438 = vsel %vm4428, %v4423, 0.0
    %4439 = vadd.xlane.f32.xlu0 %v4438
    %v4440 = vpop.xlane.xlu0 %4439
    %v4441 = vsel %vm4428, %v4424, 0.0
    %4442 = vadd.xlane.f32.xlu0 %v4441
    %v4443 = vpop.xlane.xlu0 %4442
    %v4444 = vsel %vm4428, %v4425, 0.0
    %4445 = vadd.xlane.f32.xlu0 %v4444
    %v4446 = vpop.xlane.xlu0 %4445
    %v4447 = vsel %vm4428, %v4426, 0.0
    %4448 = vadd.xlane.f32.xlu0 %v4447
    %v4449 = vpop.xlane.xlu0 %4448
    %v4450 = vsel %vm4428, %v4427, 0.0
    %4451 = vadd.xlane.f32.xlu0 %v4450
    %v4452 = vpop.xlane.xlu0 %4451
    %v4453 = vld [vmem:[#allocation2] sm:$0x1]
    %v4455 = vlaneseq
    %v4456 = vshrl.u32 %v4455, 7
    %v4457 = vsub.s32 0, %v4456
    %v4458 = vrot.slane %v4453, %v4457
    %4459 = vset.pattern.permute.xlu0 0
    %4460 = vperm.xlu0 %4459, %v4458
    %v4461 = vpop.permute.xlu0 %4460
    %v4463 = vadd.f32 %v4431, %v4461
    %v4464 = vadd.f32 %v4434, %v4461
    %v4465 = vadd.f32 %v4437, %v4461
    %v4466 = vadd.f32 %v4440, %v4461
    %v4467 = vadd.f32 %v4443, %v4461
    %v4468 = vadd.f32 %v4446, %v4461
    %v4469 = vadd.f32 %v4449, %v4461
    %v4470 = vadd.f32 %v4452, %v4461
    %v4471 = vmax.f32 %v4463, 0.0
    %v4472 = vmax.f32 %v4464, 0.0
    %v4473 = vmax.f32 %v4465, 0.0
    %v4474 = vmax.f32 %v4466, 0.0
    %v4475 = vmax.f32 %v4467, 0.0
    %v4476 = vmax.f32 %v4468, 0.0
    %v4477 = vmax.f32 %v4469, 0.0
    %v4478 = vmax.f32 %v4470, 0.0
    %v4487 = vlaneseq
    %v4488 = vand.u32 %v4487, 127
    %v4489 = vlaneseq
    %v4490 = vshrl.u32 %v4489, 7
    %v4491 = vsub.s32 %v4488, %v4490
    %v4492 = vrot.slane %v4471, %v4491
    %v4493 = vlaneseq
    %v4494 = vshrl.u32 %v4493, 7
    %v4495 = vsub.s32 %v4488, %v4494
    %v4496 = vrot.slane %v4472, %v4495
    %v4497 = vlaneseq
    %v4498 = vshrl.u32 %v4497, 7
    %v4499 = vsub.s32 %v4488, %v4498
    %v4500 = vrot.slane %v4473, %v4499
    %v4501 = vlaneseq
    %v4502 = vshrl.u32 %v4501, 7
    %v4503 = vsub.s32 %v4488, %v4502
    %v4504 = vrot.slane %v4474, %v4503
    %v4505 = vlaneseq
    %v4506 = vshrl.u32 %v4505, 7
    %v4507 = vsub.s32 %v4488, %v4506
    %v4508 = vrot.slane %v4475, %v4507
    %v4509 = vlaneseq
    %v4510 = vshrl.u32 %v4509, 7
    %v4511 = vsub.s32 %v4488, %v4510
    %v4512 = vrot.slane %v4476, %v4511
    %v4513 = vlaneseq
    %v4514 = vshrl.u32 %v4513, 7
    %v4515 = vsub.s32 %v4488, %v4514
    %v4516 = vrot.slane %v4477, %v4515
    %v4517 = vlaneseq
    %v4518 = vshrl.u32 %v4517, 7
    %v4519 = vsub.s32 %v4488, %v4518
    %v4520 = vrot.slane %v4478, %v4519
    %vm4521 = vcmask 1041409
    %v4522 = vsel %vm4521, %v4496, %v4492
    %vm4523 = vcmask 1042434
    %v4524 = vsel %vm4523, %v4500, %v4522
    %vm4525 = vcmask 1043459
    %v4526 = vsel %vm4525, %v4504, %v4524
    %vm4527 = vcmask 1044484
    %v4528 = vsel %vm4527, %v4508, %v4526
    %vm4529 = vcmask 1045509
    %v4530 = vsel %vm4529, %v4512, %v4528
    %vm4531 = vcmask 1046534
    %v4532 = vsel %vm4531, %v4516, %v4530
    %vm4533 = vcmask 1047559
    %v4534 = vsel %vm4533, %v4520, %v4532
    %vm4536 = vcmask 15360
    %4537 = vst.msk [vmem:[%s9] sm:$0xff] %vm4536, %v4534
    // Predicated region
    $region50: #{tpu_custom_call.1} parent=1 // pred_check
      _
    $region51: #{tpu_custom_call.1} parent=1 // pred_check_branch
      %4539 = sbr.rel (0) target = $region53
    $region52: #{tpu_custom_call.1} parent=1 // pred_region
      _
    $region53: #{tpu_custom_call.1} parent=1 // pred_fallthru
      _
    // Predicated region
    $region54: #{tpu_custom_call.1} parent=1 // pred_check
      _
    $region55: #{tpu_custom_call.1} parent=1 // pred_check_branch
      %4541 = sbr.rel (0) target = $region57
    $region56: #{tpu_custom_call.1} parent=1 // pred_region
      _
    $region57: #{tpu_custom_call.1} parent=1 // pred_fallthru
      _
    %4542 = vsyncpa [#allocation4], 1
    %4543 = vsyncpa [#allocation6], 1

</llo_original>
